<compile_context>
chip_gen: v7x
topology: tpu7x:2x2x1
jax: 0.10.0
libtpu: 0.0.40
codegen_flags: <defaults>
</compile_context>

<pallas_src>
import functools
import math

import jax
import jax.numpy as jnp
from jax import lax
from jax.experimental import pallas as pl
from jax.experimental.pallas import tpu as pltpu

# ----- config (mirrors `args` used by the PyTorch module) -------------------
DRUG = 8              # args.drug
GENE = 8              # args.gene
LATDIM = 32           # args.latdim
NUM_HEAD = 4          # args.num_head
TRANSGNN_LAYER = 2    # args.transgnn_layer
FFN_DIM = 4 * LATDIM  # feed-forward hidden dim of the encoder layer
LN_EPS = 1e-5


# ---------------------------------------------------------------------------
# Packed-parameter slab layout (lane-dense, 256 lanes wide for this config).
# Shared by the host-side packer and the in-kernel static unpacking.
# ---------------------------------------------------------------------------
def _slab_layout(drug, gene, d, ffn):
    s2 = drug + gene
    c_b1 = ((3 * d + 127) // 128) * 128
    lane = ((max(7 * d, c_b1 + ffn, 8 * d, 2 * ffn) + 127) // 128) * 128
    r0 = 0
    r1 = s2
    r2 = 2 * s2
    r3 = r2 + d
    r4 = r3 + d
    rows = ((r4 + ffn + 7) // 8) * 8
    layout = {
        # per-node (16-row) slabs: drug values in rows [0:drug], gene in rest
        "x0":   (r0, r0 + s2, 0 * d, 1 * d),
        "bo":   (r0, r0 + s2, 1 * d, 2 * d),
        "b2":   (r0, r0 + s2, 2 * d, 3 * d),
        "g1":   (r0, r0 + s2, 3 * d, 4 * d),
        "be1":  (r0, r0 + s2, 4 * d, 5 * d),
        "g2":   (r0, r0 + s2, 5 * d, 6 * d),
        "be2":  (r0, r0 + s2, 6 * d, 7 * d),
        "bqkv": (r1, r1 + s2, 0, 3 * d),
        "b1":   (r1, r1 + s2, c_b1, c_b1 + ffn),
        # side-by-side packed weights: [drug W | gene W]
        "wqkv": (r2, r2 + d, 0, 6 * d),          # (d, 6d)
        "wo":   (r2, r2 + d, 6 * d, 8 * d),      # (d, 2d)
        "w1":   (r3, r3 + d, 0, 2 * ffn),        # (d, 2*ffn)
        "w2":   (r4, r4 + ffn, 0, 2 * d),        # (ffn, 2d)
    }
    return layout, rows, lane


# ---------------------------------------------------------------------------
# Fused kernel: full TransGNN forward
#   for each layer: tmp = adj @ cur ; enc = encoder(tmp per group) + tmp
#   output = x0 + sum_layers(enc)
# TODO(synk): the original custom `TransformerEncoderLayer(d_model, num_heads,
# dropout)` definition was not provided; a standard post-LN encoder layer with
# FFN dim = 4*d_model and ReLU is implemented (dropout is identity in eval).
# ---------------------------------------------------------------------------
def _transgnn_fused_kernel(slab_ref, adj_ref, o_ref, od_ref, og_ref, *,
                           layout, drug, gene, d, ffn, num_heads, num_layers):
    s2 = drug + gene
    dh = d // num_heads
    scale = 1.0 / math.sqrt(dh)
    f32 = jnp.float32

    def get(name):
        r0, r1, c0, c1 = layout[name]
        return slab_ref[r0:r1, c0:c1]          # static slice -> direct VMEM load

    # ---- prologue: unpack everything from the single packed slab ----------
    x0 = get("x0")                              # (s2, d)
    bo_r, b2_r = get("bo"), get("b2")           # (s2, d) per-row biases
    g1_r, be1_r = get("g1"), get("be1")         # (s2, d) per-row LN params
    g2_r, be2_r = get("g2"), get("be2")
    bqkv_r, b1_r = get("bqkv"), get("b1")       # (s2, 3d), (s2, ffn)
    wqkv_cat = get("wqkv")                      # (d, 6d)   [drug | gene]
    wo_cat = get("wo")                          # (d, 2d)
    w1_cat = get("w1")                          # (d, 2*ffn)
    w2_cat = get("w2")                          # (ffn, 2d)
    adj = adj_ref[...]                          # (s2, s2)

    # row-group predicate and cross-group attention mask (built once)
    row = lax.broadcasted_iota(jnp.int32, (s2, 1), 0)
    is_drug = row < drug
    ri = lax.broadcasted_iota(jnp.int32, (s2, s2), 0)
    ci = lax.broadcasted_iota(jnp.int32, (s2, s2), 1)
    same_group = (ri < drug) == (ci < drug)
    neg_bias = jnp.where(same_group, 0.0, -1e30).astype(f32)
    attn_bias = jnp.concatenate([neg_bias] * num_heads, axis=0)   # (H*s2, s2)

    def sel(both, width):
        # per-row group selection: drug rows take cols [:width], gene rows the rest
        return jnp.where(is_drug, both[:, :width], both[:, width:])

    def layer_norm(z, gamma, beta):
        mu = jnp.mean(z, axis=-1, keepdims=True)
        zc = z - mu
        var = jnp.mean(zc * zc, axis=-1, keepdims=True)
        return zc * lax.rsqrt(var + LN_EPS) * gamma + beta

    def encoder(z):
        """Post-LN transformer encoder layer; drug/gene weights row-selected."""
        # QKV for both groups with ONE matmul (K=d, N=6d), then row-select.
        qkv = sel(jnp.dot(z, wqkv_cat, preferred_element_type=f32), 3 * d) + bqkv_r
        q, k, v = qkv[:, 0:d], qkv[:, d:2 * d], qkv[:, 2 * d:3 * d]

        # All-head scores stacked along sublanes -> ONE batched softmax chain.
        scores = jnp.concatenate(
            [jnp.einsum("qc,kc->qk",
                        q[:, h * dh:(h + 1) * dh], k[:, h * dh:(h + 1) * dh],
                        preferred_element_type=f32)
             for h in range(num_heads)], axis=0) * scale + attn_bias
        m = jnp.max(scores, axis=-1, keepdims=True)
        p = jnp.exp(scores - m)
        # approx reciprocal (EUP slot); ~1e-3 rel err, fine for inference.
        p = p * pl.reciprocal(jnp.sum(p, axis=-1, keepdims=True), approx=True)

        # Per-head PV, head-concat along lanes; head merge folded into ONE
        # K=d output-projection matmul for both groups.
        att = jnp.concatenate(
            [jnp.dot(p[h * s2:(h + 1) * s2, :], v[:, h * dh:(h + 1) * dh],
                     preferred_element_type=f32)
             for h in range(num_heads)], axis=-1)                  # (s2, d)
        attn_out = sel(jnp.dot(att, wo_cat, preferred_element_type=f32), d) + bo_r

        h1 = layer_norm(z + attn_out, g1_r, be1_r)
        ff = jnp.maximum(
            sel(jnp.dot(h1, w1_cat, preferred_element_type=f32), ffn) + b1_r, 0.0)
        ff_out = sel(jnp.dot(ff, w2_cat, preferred_element_type=f32), d) + b2_r
        return layer_norm(h1 + ff_out, g2_r, be2_r)

    acc = x0                                   # embedsLst[0]
    cur = x0
    for _ in range(num_layers):                # static unroll (TRANSGNN_LAYER)
        # gnn_message_passing: t.spmm(adj, embeds)  (dense stand-in)
        # TODO(synk): the args.data == 'DrugBank' l2_norm branch is not used.
        tmp = jnp.dot(adj, cur, preferred_element_type=f32)        # (s2, d)
        cur = encoder(tmp) + tmp               # wrapper residual (`+= tmp`)
        acc = acc + cur                        # running sum over embedsLst

    # Emit all three module outputs directly (no post-kernel HLO slices).
    o_ref[...] = acc
    od_ref[...] = acc[0:drug, :]
    og_ref[...] = acc[drug:, :]


# ---------------------------------------------------------------------------
# Edge sampling (identity path only, matching edgeSampRate == 1.0 usage)
# ---------------------------------------------------------------------------
def pick_samp_edges(adj, edge_samp_rate):
    if edge_samp_rate == 1.0:
        return adj
    # TODO(synk): Bernoulli edge sampling of a sparse adjacency (rate < 1.0)
    # is not implemented; only the edgeSampRate == 1.0 identity path is used.
    return adj


# ---------------------------------------------------------------------------
# Parameter initialization / packing (xavier-uniform like the module)
# ---------------------------------------------------------------------------
def xavier_uniform(key, shape):
    fan_in, fan_out = shape
    limit = math.sqrt(6.0 / (fan_in + fan_out))
    return jax.random.uniform(key, shape, jnp.float32, -limit, limit)


def init_encoder_params(key, d_model, ffn_dim):
    ks = jax.random.split(key, 6)
    return dict(
        wq=xavier_uniform(ks[0], (d_model, d_model)),
        wk=xavier_uniform(ks[1], (d_model, d_model)),
        wv=xavier_uniform(ks[2], (d_model, d_model)),
        wo=xavier_uniform(ks[3], (d_model, d_model)),
        w1=xavier_uniform(ks[4], (d_model, ffn_dim)),
        w2=xavier_uniform(ks[5], (ffn_dim, d_model)),
        bq=jnp.zeros((d_model,), jnp.float32),
        bk=jnp.zeros((d_model,), jnp.float32),
        bv=jnp.zeros((d_model,), jnp.float32),
        bo=jnp.zeros((d_model,), jnp.float32),
        b1=jnp.zeros((ffn_dim,), jnp.float32),
        b2=jnp.zeros((d_model,), jnp.float32),
        g1=jnp.ones((d_model,), jnp.float32),
        be1=jnp.zeros((d_model,), jnp.float32),
        g2=jnp.ones((d_model,), jnp.float32),
        be2=jnp.zeros((d_model,), jnp.float32),
    )


def pack_transgnn_params(d_embeds, g_embeds, drug_p, gene_p):
    """Pack embeddings + both encoders into one lane-dense (rows, 256) slab."""
    drug, d = d_embeds.shape
    gene = g_embeds.shape[0]
    ffn = drug_p["w1"].shape[1]
    layout, rows, lane = _slab_layout(drug, gene, d, ffn)
    slab = jnp.zeros((rows, lane), jnp.float32)

    def per_row(dv, gv):
        return jnp.concatenate([jnp.broadcast_to(dv, (drug, dv.shape[-1])),
                                jnp.broadcast_to(gv, (gene, gv.shape[-1]))], axis=0)

    def put(s, name, val):
        r0, r1, c0, c1 = layout[name]
        assert val.shape == (r1 - r0, c1 - c0), (name, val.shape)
        return s.at[r0:r1, c0:c1].set(val.astype(jnp.float32))

    slab = put(slab, "x0", jnp.concatenate([d_embeds, g_embeds], axis=0))
    slab = put(slab, "bo", per_row(drug_p["bo"], gene_p["bo"]))
    slab = put(slab, "b2", per_row(drug_p["b2"], gene_p["b2"]))
    slab = put(slab, "g1", per_row(drug_p["g1"], gene_p["g1"]))
    slab = put(slab, "be1", per_row(drug_p["be1"], gene_p["be1"]))
    slab = put(slab, "g2", per_row(drug_p["g2"], gene_p["g2"]))
    slab = put(slab, "be2", per_row(drug_p["be2"], gene_p["be2"]))
    bqkv_d = jnp.concatenate([drug_p["bq"], drug_p["bk"], drug_p["bv"]])
    bqkv_g = jnp.concatenate([gene_p["bq"], gene_p["bk"], gene_p["bv"]])
    slab = put(slab, "bqkv", per_row(bqkv_d, bqkv_g))
    slab = put(slab, "b1", per_row(drug_p["b1"], gene_p["b1"]))
    wqkv_d = jnp.concatenate([drug_p["wq"], drug_p["wk"], drug_p["wv"]], axis=1)
    wqkv_g = jnp.concatenate([gene_p["wq"], gene_p["wk"], gene_p["wv"]], axis=1)
    slab = put(slab, "wqkv", jnp.concatenate([wqkv_d, wqkv_g], axis=1))
    slab = put(slab, "wo", jnp.concatenate([drug_p["wo"], gene_p["wo"]], axis=1))
    slab = put(slab, "w1", jnp.concatenate([drug_p["w1"], gene_p["w1"]], axis=1))
    slab = put(slab, "w2", jnp.concatenate([drug_p["w2"], gene_p["w2"]], axis=1))
    return slab


# ---------------------------------------------------------------------------
# TransGNN forward (single fused pallas_call, 2 inputs, 3 outputs)
# ---------------------------------------------------------------------------
def transgnn_forward(adj, packed_params, *, drug=DRUG, gene=GENE,
                     latdim=LATDIM, ffn=FFN_DIM, num_heads=NUM_HEAD,
                     num_layers=TRANSGNN_LAYER, edge_samp_rate=1.0):
    layout, rows, lane = _slab_layout(drug, gene, latdim, ffn)
    assert packed_params.shape == (rows, lane)
    n = drug + gene
    assert adj.shape == (n, n)

    adj_s = pick_samp_edges(adj, edge_samp_rate)

    vmem = pl.BlockSpec(memory_space=pltpu.MemorySpace.VMEM)
    out_shapes = (jax.ShapeDtypeStruct((n, latdim), jnp.float32),
                  jax.ShapeDtypeStruct((drug, latdim), jnp.float32),
                  jax.ShapeDtypeStruct((gene, latdim), jnp.float32))

    embeds, drug_embeds, gene_embeds = pl.pallas_call(
        functools.partial(_transgnn_fused_kernel, layout=layout, drug=drug,
                          gene=gene, d=latdim, ffn=ffn, num_heads=num_heads,
                          num_layers=num_layers),
        out_shape=out_shapes,
        in_specs=[vmem, vmem],
        out_specs=(vmem, vmem, vmem),
    )(packed_params, adj_s)
    return embeds, drug_embeds, gene_embeds


# ---------------------------------------------------------------------------
if __name__ == "__main__":
    key = jax.random.PRNGKey(0)
    k_d, k_g, k_adj, k_enc_d, k_enc_g = jax.random.split(key, 5)

    d_embeds = xavier_uniform(k_d, (DRUG, LATDIM))
    g_embeds = xavier_uniform(k_g, (GENE, LATDIM))

    n = DRUG + GENE
    # dense, symmetric, non-negative adjacency (stand-in for the sparse adj)
    adj_raw = jax.random.uniform(k_adj, (n, n), jnp.float32)
    adj = (adj_raw + adj_raw.T) * 0.5
    adj = adj * (adj > 0.6)  # sparsify a bit

    drug_params = init_encoder_params(k_enc_d, LATDIM, FFN_DIM)
    gene_params = init_encoder_params(k_enc_g, LATDIM, FFN_DIM)
    packed = pack_transgnn_params(d_embeds, g_embeds, drug_params, gene_params)

    fwd = jax.jit(transgnn_forward)
    embeds, drug_embeds, gene_embeds = fwd(adj, packed)
    jax.block_until_ready((embeds, drug_embeds, gene_embeds))

    assert embeds.shape == (n, LATDIM)
    assert drug_embeds.shape == (DRUG, LATDIM)
    assert gene_embeds.shape == (GENE, LATDIM)
    assert bool(jnp.all(jnp.isfinite(embeds)))
    assert bool(jnp.all(jnp.isfinite(drug_embeds)))
    assert bool(jnp.all(jnp.isfinite(gene_embeds)))
    print("KERNEL_OK")
</pallas_src>

<mosaic_0001>
module attributes {stable_mosaic.version = 11 : i64} {
  func.func @_transgnn_fused_kernel(%arg0: memref<224x256xf32, #tpu.memory_space<vmem>>, %arg1: memref<16x16xf32, #tpu.memory_space<vmem>>, %arg2: memref<16x32xf32, #tpu.memory_space<vmem>>, %arg3: memref<8x32xf32, #tpu.memory_space<vmem>>, %arg4: memref<8x32xf32, #tpu.memory_space<vmem>>) attributes {dimension_semantics = [], scalar_prefetch = 0 : i64, scratch_operands = 0 : i64, tpu.core_type = #tpu.core_type<tc>} {
    %c0 = arith.constant 0 : index
    %c0_0 = arith.constant 0 : index
    %0 = vector.load %arg0[%c0, %c0_0] : memref<224x256xf32, #tpu.memory_space<vmem>>, vector<16x32xf32>
    %c0_1 = arith.constant 0 : index
    %c32 = arith.constant 32 : index
    %1 = vector.load %arg0[%c0_1, %c32] : memref<224x256xf32, #tpu.memory_space<vmem>>, vector<16x32xf32>
    %c0_2 = arith.constant 0 : index
    %c64 = arith.constant 64 : index
    %2 = vector.load %arg0[%c0_2, %c64] : memref<224x256xf32, #tpu.memory_space<vmem>>, vector<16x32xf32>
    %c0_3 = arith.constant 0 : index
    %c96 = arith.constant 96 : index
    %3 = vector.load %arg0[%c0_3, %c96] : memref<224x256xf32, #tpu.memory_space<vmem>>, vector<16x32xf32>
    %c0_4 = arith.constant 0 : index
    %c128 = arith.constant 128 : index
    %4 = vector.load %arg0[%c0_4, %c128] : memref<224x256xf32, #tpu.memory_space<vmem>>, vector<16x32xf32>
    %c0_5 = arith.constant 0 : index
    %c160 = arith.constant 160 : index
    %5 = vector.load %arg0[%c0_5, %c160] : memref<224x256xf32, #tpu.memory_space<vmem>>, vector<16x32xf32>
    %c0_6 = arith.constant 0 : index
    %c192 = arith.constant 192 : index
    %6 = vector.load %arg0[%c0_6, %c192] : memref<224x256xf32, #tpu.memory_space<vmem>>, vector<16x32xf32>
    %c16 = arith.constant 16 : index
    %c0_7 = arith.constant 0 : index
    %7 = vector.load %arg0[%c16, %c0_7] : memref<224x256xf32, #tpu.memory_space<vmem>>, vector<16x96xf32>
    %c16_8 = arith.constant 16 : index
    %c128_9 = arith.constant 128 : index
    %8 = vector.load %arg0[%c16_8, %c128_9] : memref<224x256xf32, #tpu.memory_space<vmem>>, vector<16x128xf32>
    %c32_10 = arith.constant 32 : index
    %c0_11 = arith.constant 0 : index
    %9 = vector.load %arg0[%c32_10, %c0_11] : memref<224x256xf32, #tpu.memory_space<vmem>>, vector<32x192xf32>
    %c32_12 = arith.constant 32 : index
    %c192_13 = arith.constant 192 : index
    %10 = vector.load %arg0[%c32_12, %c192_13] : memref<224x256xf32, #tpu.memory_space<vmem>>, vector<32x64xf32>
    %c64_14 = arith.constant 64 : index
    %c0_15 = arith.constant 0 : index
    %11 = vector.load %arg0[%c64_14, %c0_15] : memref<224x256xf32, #tpu.memory_space<vmem>>, vector<32x256xf32>
    %c96_16 = arith.constant 96 : index
    %c0_17 = arith.constant 0 : index
    %12 = vector.load %arg0[%c96_16, %c0_17] : memref<224x256xf32, #tpu.memory_space<vmem>>, vector<128x64xf32>
    %c0_18 = arith.constant 0 : index
    %c0_19 = arith.constant 0 : index
    %13 = vector.load %arg1[%c0_18, %c0_19] : memref<16x16xf32, #tpu.memory_space<vmem>>, vector<16x16xf32>
    %14 = tpu.iota {dimensions = array<i32: 0>} : vector<16x1xi32>
    %c8_i32 = arith.constant 8 : i32
    %15 = vector.broadcast %c8_i32 : i32 to vector<16x1xi32>
    %16 = arith.cmpi slt, %14, %15 : vector<16x1xi32>
    %17 = tpu.iota {dimensions = array<i32: 0>} : vector<16x16xi32>
    %18 = tpu.iota {dimensions = array<i32: 1>} : vector<16x16xi32>
    %c8_i32_20 = arith.constant 8 : i32
    %19 = vector.broadcast %c8_i32_20 : i32 to vector<16x16xi32>
    %20 = arith.cmpi slt, %17, %19 : vector<16x16xi32>
    %c8_i32_21 = arith.constant 8 : i32
    %21 = vector.broadcast %c8_i32_21 : i32 to vector<16x16xi32>
    %22 = arith.cmpi slt, %18, %21 : vector<16x16xi32>
    %23 = arith.xori %20, %22 : vector<16x16xi1>
    %cst = arith.constant dense<true> : vector<16x16xi1>
    %24 = arith.xori %23, %cst : vector<16x16xi1>
    %cst_22 = arith.constant 0.000000e+00 : f32
    %cst_23 = arith.constant -1.000000e+30 : f32
    %25 = vector.broadcast %cst_22 : f32 to vector<16x16xf32>
    %26 = vector.broadcast %cst_23 : f32 to vector<16x16xf32>
    %27 = arith.select %24, %25, %26 : vector<16x16xi1>, vector<16x16xf32>
    %28 = tpu.concatenate %27, %27, %27, %27 in 0 : vector<16x16xf32>, vector<16x16xf32>, vector<16x16xf32>, vector<16x16xf32> -> vector<64x16xf32>
    %cst_24 = arith.constant dense<0.000000e+00> : vector<16x32xf32>
    %29 = tpu.matmul %13, %0, %cst_24 {dimension_numbers = #tpu.dot_dimension_numbers<[1], [0], [0], [1], [0, 0, 1, 1], [], []>} : vector<16x16xf32>, vector<16x32xf32>, vector<16x32xf32> -> vector<16x32xf32>
    %cst_25 = arith.constant dense<0.000000e+00> : vector<16x192xf32>
    %30 = tpu.matmul %29, %9, %cst_25 {dimension_numbers = #tpu.dot_dimension_numbers<[1], [0], [0], [1], [0, 0, 1, 1], [], []>} : vector<16x32xf32>, vector<32x192xf32>, vector<16x192xf32> -> vector<16x192xf32>
    %31 = vector.extract_strided_slice %30 {offsets = [0, 0], sizes = [16, 96], strides = [1, 1]} : vector<16x192xf32> to vector<16x96xf32>
    %32 = vector.extract_strided_slice %30 {offsets = [0, 96], sizes = [16, 96], strides = [1, 1]} : vector<16x192xf32> to vector<16x96xf32>
    %33 = vector.shape_cast %16 : vector<16x1xi1> to vector<16x1xi1>
    %34 = vector.broadcast %33 : vector<16x1xi1> to vector<16x96xi1>
    %35 = arith.select %34, %31, %32 : vector<16x96xi1>, vector<16x96xf32>
    %36 = arith.addf %35, %7 : vector<16x96xf32>
    %37 = vector.extract_strided_slice %36 {offsets = [0, 0], sizes = [16, 32], strides = [1, 1]} : vector<16x96xf32> to vector<16x32xf32>
    %38 = vector.extract_strided_slice %36 {offsets = [0, 32], sizes = [16, 32], strides = [1, 1]} : vector<16x96xf32> to vector<16x32xf32>
    %39 = vector.extract_strided_slice %36 {offsets = [0, 64], sizes = [16, 32], strides = [1, 1]} : vector<16x96xf32> to vector<16x32xf32>
    %40 = vector.extract_strided_slice %37 {offsets = [0, 0], sizes = [16, 8], strides = [1, 1]} : vector<16x32xf32> to vector<16x8xf32>
    %41 = vector.extract_strided_slice %38 {offsets = [0, 0], sizes = [16, 8], strides = [1, 1]} : vector<16x32xf32> to vector<16x8xf32>
    "tpu.trace_start"() <{level = 10 : i32, message = "qc,kc->qk"}> : () -> ()
    %cst_26 = arith.constant dense<0.000000e+00> : vector<16x16xf32>
    %42 = tpu.matmul %40, %41, %cst_26 {dimension_numbers = #tpu.dot_dimension_numbers<[1], [1], [0], [0], [0, 0, 1, 0], [], []>} : vector<16x8xf32>, vector<16x8xf32>, vector<16x16xf32> -> vector<16x16xf32>
    "tpu.trace_stop"() : () -> ()
    %43 = vector.extract_strided_slice %37 {offsets = [0, 8], sizes = [16, 8], strides = [1, 1]} : vector<16x32xf32> to vector<16x8xf32>
    %44 = vector.extract_strided_slice %38 {offsets = [0, 8], sizes = [16, 8], strides = [1, 1]} : vector<16x32xf32> to vector<16x8xf32>
    "tpu.trace_start"() <{level = 10 : i32, message = "qc,kc->qk"}> : () -> ()
    %cst_27 = arith.constant dense<0.000000e+00> : vector<16x16xf32>
    %45 = tpu.matmul %43, %44, %cst_27 {dimension_numbers = #tpu.dot_dimension_numbers<[1], [1], [0], [0], [0, 0, 1, 0], [], []>} : vector<16x8xf32>, vector<16x8xf32>, vector<16x16xf32> -> vector<16x16xf32>
    "tpu.trace_stop"() : () -> ()
    %46 = vector.extract_strided_slice %37 {offsets = [0, 16], sizes = [16, 8], strides = [1, 1]} : vector<16x32xf32> to vector<16x8xf32>
    %47 = vector.extract_strided_slice %38 {offsets = [0, 16], sizes = [16, 8], strides = [1, 1]} : vector<16x32xf32> to vector<16x8xf32>
    "tpu.trace_start"() <{level = 10 : i32, message = "qc,kc->qk"}> : () -> ()
    %cst_28 = arith.constant dense<0.000000e+00> : vector<16x16xf32>
    %48 = tpu.matmul %46, %47, %cst_28 {dimension_numbers = #tpu.dot_dimension_numbers<[1], [1], [0], [0], [0, 0, 1, 0], [], []>} : vector<16x8xf32>, vector<16x8xf32>, vector<16x16xf32> -> vector<16x16xf32>
    "tpu.trace_stop"() : () -> ()
    %49 = vector.extract_strided_slice %37 {offsets = [0, 24], sizes = [16, 8], strides = [1, 1]} : vector<16x32xf32> to vector<16x8xf32>
    %50 = vector.extract_strided_slice %38 {offsets = [0, 24], sizes = [16, 8], strides = [1, 1]} : vector<16x32xf32> to vector<16x8xf32>
    "tpu.trace_start"() <{level = 10 : i32, message = "qc,kc->qk"}> : () -> ()
    %cst_29 = arith.constant dense<0.000000e+00> : vector<16x16xf32>
    %51 = tpu.matmul %49, %50, %cst_29 {dimension_numbers = #tpu.dot_dimension_numbers<[1], [1], [0], [0], [0, 0, 1, 0], [], []>} : vector<16x8xf32>, vector<16x8xf32>, vector<16x16xf32> -> vector<16x16xf32>
    "tpu.trace_stop"() : () -> ()
    %52 = tpu.concatenate %42, %45, %48, %51 in 0 : vector<16x16xf32>, vector<16x16xf32>, vector<16x16xf32>, vector<16x16xf32> -> vector<64x16xf32>
    %cst_30 = arith.constant 0.353553385 : f32
    %53 = vector.broadcast %cst_30 : f32 to vector<64x16xf32>
    %54 = arith.mulf %52, %53 : vector<64x16xf32>
    %55 = arith.addf %54, %28 : vector<64x16xf32>
    %cst_31 = arith.constant dense<0xFF800000> : vector<64xf32>
    %56 = vector.multi_reduction <maximumf>, %55, %cst_31 [1] : vector<64x16xf32> to vector<64xf32>
    %57 = vector.shape_cast %56 : vector<64xf32> to vector<64x1xf32>
    %58 = vector.broadcast %57 : vector<64x1xf32> to vector<64x16xf32>
    %59 = arith.subf %55, %58 : vector<64x16xf32>
    %60 = math.exp %59 : vector<64x16xf32>
    %cst_32 = arith.constant dense<0.000000e+00> : vector<64xf32>
    %61 = vector.multi_reduction <add>, %60, %cst_32 [1] : vector<64x16xf32> to vector<64xf32>
    %62 = vector.shape_cast %61 : vector<64xf32> to vector<64x1xf32>
    %63 = tpu.reciprocal %62 {approx = true} : vector<64x1xf32> -> vector<64x1xf32>
    %64 = vector.broadcast %63 : vector<64x1xf32> to vector<64x16xf32>
    %65 = arith.mulf %60, %64 : vector<64x16xf32>
    %66 = vector.extract_strided_slice %65 {offsets = [0, 0], sizes = [16, 16], strides = [1, 1]} : vector<64x16xf32> to vector<16x16xf32>
    %67 = vector.extract_strided_slice %39 {offsets = [0, 0], sizes = [16, 8], strides = [1, 1]} : vector<16x32xf32> to vector<16x8xf32>
    %cst_33 = arith.constant dense<0.000000e+00> : vector<16x8xf32>
    %68 = tpu.matmul %66, %67, %cst_33 {dimension_numbers = #tpu.dot_dimension_numbers<[1], [0], [0], [1], [0, 0, 1, 1], [], []>} : vector<16x16xf32>, vector<16x8xf32>, vector<16x8xf32> -> vector<16x8xf32>
    %69 = vector.extract_strided_slice %65 {offsets = [16, 0], sizes = [16, 16], strides = [1, 1]} : vector<64x16xf32> to vector<16x16xf32>
    %70 = vector.extract_strided_slice %39 {offsets = [0, 8], sizes = [16, 8], strides = [1, 1]} : vector<16x32xf32> to vector<16x8xf32>
    %cst_34 = arith.constant dense<0.000000e+00> : vector<16x8xf32>
    %71 = tpu.matmul %69, %70, %cst_34 {dimension_numbers = #tpu.dot_dimension_numbers<[1], [0], [0], [1], [0, 0, 1, 1], [], []>} : vector<16x16xf32>, vector<16x8xf32>, vector<16x8xf32> -> vector<16x8xf32>
    %72 = vector.extract_strided_slice %65 {offsets = [32, 0], sizes = [16, 16], strides = [1, 1]} : vector<64x16xf32> to vector<16x16xf32>
    %73 = vector.extract_strided_slice %39 {offsets = [0, 16], sizes = [16, 8], strides = [1, 1]} : vector<16x32xf32> to vector<16x8xf32>
    %cst_35 = arith.constant dense<0.000000e+00> : vector<16x8xf32>
    %74 = tpu.matmul %72, %73, %cst_35 {dimension_numbers = #tpu.dot_dimension_numbers<[1], [0], [0], [1], [0, 0, 1, 1], [], []>} : vector<16x16xf32>, vector<16x8xf32>, vector<16x8xf32> -> vector<16x8xf32>
    %75 = vector.extract_strided_slice %65 {offsets = [48, 0], sizes = [16, 16], strides = [1, 1]} : vector<64x16xf32> to vector<16x16xf32>
    %76 = vector.extract_strided_slice %39 {offsets = [0, 24], sizes = [16, 8], strides = [1, 1]} : vector<16x32xf32> to vector<16x8xf32>
    %cst_36 = arith.constant dense<0.000000e+00> : vector<16x8xf32>
    %77 = tpu.matmul %75, %76, %cst_36 {dimension_numbers = #tpu.dot_dimension_numbers<[1], [0], [0], [1], [0, 0, 1, 1], [], []>} : vector<16x16xf32>, vector<16x8xf32>, vector<16x8xf32> -> vector<16x8xf32>
    %78 = tpu.concatenate %68, %71, %74, %77 in 1 : vector<16x8xf32>, vector<16x8xf32>, vector<16x8xf32>, vector<16x8xf32> -> vector<16x32xf32>
    %cst_37 = arith.constant dense<0.000000e+00> : vector<16x64xf32>
    %79 = tpu.matmul %78, %10, %cst_37 {dimension_numbers = #tpu.dot_dimension_numbers<[1], [0], [0], [1], [0, 0, 1, 1], [], []>} : vector<16x32xf32>, vector<32x64xf32>, vector<16x64xf32> -> vector<16x64xf32>
    %80 = vector.extract_strided_slice %79 {offsets = [0, 0], sizes = [16, 32], strides = [1, 1]} : vector<16x64xf32> to vector<16x32xf32>
    %81 = vector.extract_strided_slice %79 {offsets = [0, 32], sizes = [16, 32], strides = [1, 1]} : vector<16x64xf32> to vector<16x32xf32>
    %82 = vector.shape_cast %16 : vector<16x1xi1> to vector<16x1xi1>
    %83 = vector.broadcast %82 : vector<16x1xi1> to vector<16x32xi1>
    %84 = arith.select %83, %80, %81 : vector<16x32xi1>, vector<16x32xf32>
    %85 = arith.addf %84, %1 : vector<16x32xf32>
    %86 = arith.addf %29, %85 : vector<16x32xf32>
    %cst_38 = arith.constant dense<0.000000e+00> : vector<16xf32>
    %87 = vector.multi_reduction <add>, %86, %cst_38 [1] : vector<16x32xf32> to vector<16xf32>
    %88 = vector.shape_cast %87 : vector<16xf32> to vector<16x1xf32>
    %cst_39 = arith.constant 3.200000e+01 : f32
    %89 = vector.broadcast %cst_39 : f32 to vector<16x1xf32>
    %90 = arith.divf %88, %89 : vector<16x1xf32>
    %91 = vector.broadcast %90 : vector<16x1xf32> to vector<16x32xf32>
    %92 = arith.subf %86, %91 : vector<16x32xf32>
    %93 = arith.mulf %92, %92 : vector<16x32xf32>
    %cst_40 = arith.constant dense<0.000000e+00> : vector<16xf32>
    %94 = vector.multi_reduction <add>, %93, %cst_40 [1] : vector<16x32xf32> to vector<16xf32>
    %95 = vector.shape_cast %94 : vector<16xf32> to vector<16x1xf32>
    %cst_41 = arith.constant 3.200000e+01 : f32
    %96 = vector.broadcast %cst_41 : f32 to vector<16x1xf32>
    %97 = arith.divf %95, %96 : vector<16x1xf32>
    %cst_42 = arith.constant 9.99999974E-6 : f32
    %98 = vector.broadcast %cst_42 : f32 to vector<16x1xf32>
    %99 = arith.addf %97, %98 : vector<16x1xf32>
    %100 = math.rsqrt %99 : vector<16x1xf32>
    %101 = vector.broadcast %100 : vector<16x1xf32> to vector<16x32xf32>
    %102 = arith.mulf %92, %101 : vector<16x32xf32>
    %103 = arith.mulf %102, %3 : vector<16x32xf32>
    %104 = arith.addf %103, %4 : vector<16x32xf32>
    %cst_43 = arith.constant dense<0.000000e+00> : vector<16x256xf32>
    %105 = tpu.matmul %104, %11, %cst_43 {dimension_numbers = #tpu.dot_dimension_numbers<[1], [0], [0], [1], [0, 0, 1, 1], [], []>} : vector<16x32xf32>, vector<32x256xf32>, vector<16x256xf32> -> vector<16x256xf32>
    %106 = vector.extract_strided_slice %105 {offsets = [0, 0], sizes = [16, 128], strides = [1, 1]} : vector<16x256xf32> to vector<16x128xf32>
    %107 = vector.extract_strided_slice %105 {offsets = [0, 128], sizes = [16, 128], strides = [1, 1]} : vector<16x256xf32> to vector<16x128xf32>
    %108 = vector.shape_cast %16 : vector<16x1xi1> to vector<16x1xi1>
    %109 = vector.broadcast %108 : vector<16x1xi1> to vector<16x128xi1>
    %110 = arith.select %109, %106, %107 : vector<16x128xi1>, vector<16x128xf32>
    %111 = arith.addf %110, %8 : vector<16x128xf32>
    %cst_44 = arith.constant 0.000000e+00 : f32
    %112 = vector.broadcast %cst_44 : f32 to vector<16x128xf32>
    %113 = arith.maximumf %111, %112 : vector<16x128xf32>
    %cst_45 = arith.constant dense<0.000000e+00> : vector<16x64xf32>
    %114 = tpu.matmul %113, %12, %cst_45 {dimension_numbers = #tpu.dot_dimension_numbers<[1], [0], [0], [1], [0, 0, 1, 1], [], []>} : vector<16x128xf32>, vector<128x64xf32>, vector<16x64xf32> -> vector<16x64xf32>
    %115 = vector.extract_strided_slice %114 {offsets = [0, 0], sizes = [16, 32], strides = [1, 1]} : vector<16x64xf32> to vector<16x32xf32>
    %116 = vector.extract_strided_slice %114 {offsets = [0, 32], sizes = [16, 32], strides = [1, 1]} : vector<16x64xf32> to vector<16x32xf32>
    %117 = vector.shape_cast %16 : vector<16x1xi1> to vector<16x1xi1>
    %118 = vector.broadcast %117 : vector<16x1xi1> to vector<16x32xi1>
    %119 = arith.select %118, %115, %116 : vector<16x32xi1>, vector<16x32xf32>
    %120 = arith.addf %119, %2 : vector<16x32xf32>
    %121 = arith.addf %104, %120 : vector<16x32xf32>
    %cst_46 = arith.constant dense<0.000000e+00> : vector<16xf32>
    %122 = vector.multi_reduction <add>, %121, %cst_46 [1] : vector<16x32xf32> to vector<16xf32>
    %123 = vector.shape_cast %122 : vector<16xf32> to vector<16x1xf32>
    %cst_47 = arith.constant 3.200000e+01 : f32
    %124 = vector.broadcast %cst_47 : f32 to vector<16x1xf32>
    %125 = arith.divf %123, %124 : vector<16x1xf32>
    %126 = vector.broadcast %125 : vector<16x1xf32> to vector<16x32xf32>
    %127 = arith.subf %121, %126 : vector<16x32xf32>
    %128 = arith.mulf %127, %127 : vector<16x32xf32>
    %cst_48 = arith.constant dense<0.000000e+00> : vector<16xf32>
    %129 = vector.multi_reduction <add>, %128, %cst_48 [1] : vector<16x32xf32> to vector<16xf32>
    %130 = vector.shape_cast %129 : vector<16xf32> to vector<16x1xf32>
    %cst_49 = arith.constant 3.200000e+01 : f32
    %131 = vector.broadcast %cst_49 : f32 to vector<16x1xf32>
    %132 = arith.divf %130, %131 : vector<16x1xf32>
    %cst_50 = arith.constant 9.99999974E-6 : f32
    %133 = vector.broadcast %cst_50 : f32 to vector<16x1xf32>
    %134 = arith.addf %132, %133 : vector<16x1xf32>
    %135 = math.rsqrt %134 : vector<16x1xf32>
    %136 = vector.broadcast %135 : vector<16x1xf32> to vector<16x32xf32>
    %137 = arith.mulf %127, %136 : vector<16x32xf32>
    %138 = arith.mulf %137, %5 : vector<16x32xf32>
    %139 = arith.addf %138, %6 : vector<16x32xf32>
    %140 = arith.addf %139, %29 : vector<16x32xf32>
    %141 = arith.addf %0, %140 : vector<16x32xf32>
    %cst_51 = arith.constant dense<0.000000e+00> : vector<16x32xf32>
    %142 = tpu.matmul %13, %140, %cst_51 {dimension_numbers = #tpu.dot_dimension_numbers<[1], [0], [0], [1], [0, 0, 1, 1], [], []>} : vector<16x16xf32>, vector<16x32xf32>, vector<16x32xf32> -> vector<16x32xf32>
    %cst_52 = arith.constant dense<0.000000e+00> : vector<16x192xf32>
    %143 = tpu.matmul %142, %9, %cst_52 {dimension_numbers = #tpu.dot_dimension_numbers<[1], [0], [0], [1], [0, 0, 1, 1], [], []>} : vector<16x32xf32>, vector<32x192xf32>, vector<16x192xf32> -> vector<16x192xf32>
    %144 = vector.extract_strided_slice %143 {offsets = [0, 0], sizes = [16, 96], strides = [1, 1]} : vector<16x192xf32> to vector<16x96xf32>
    %145 = vector.extract_strided_slice %143 {offsets = [0, 96], sizes = [16, 96], strides = [1, 1]} : vector<16x192xf32> to vector<16x96xf32>
    %146 = vector.shape_cast %16 : vector<16x1xi1> to vector<16x1xi1>
    %147 = vector.broadcast %146 : vector<16x1xi1> to vector<16x96xi1>
    %148 = arith.select %147, %144, %145 : vector<16x96xi1>, vector<16x96xf32>
    %149 = arith.addf %148, %7 : vector<16x96xf32>
    %150 = vector.extract_strided_slice %149 {offsets = [0, 0], sizes = [16, 32], strides = [1, 1]} : vector<16x96xf32> to vector<16x32xf32>
    %151 = vector.extract_strided_slice %149 {offsets = [0, 32], sizes = [16, 32], strides = [1, 1]} : vector<16x96xf32> to vector<16x32xf32>
    %152 = vector.extract_strided_slice %149 {offsets = [0, 64], sizes = [16, 32], strides = [1, 1]} : vector<16x96xf32> to vector<16x32xf32>
    %153 = vector.extract_strided_slice %150 {offsets = [0, 0], sizes = [16, 8], strides = [1, 1]} : vector<16x32xf32> to vector<16x8xf32>
    %154 = vector.extract_strided_slice %151 {offsets = [0, 0], sizes = [16, 8], strides = [1, 1]} : vector<16x32xf32> to vector<16x8xf32>
    "tpu.trace_start"() <{level = 10 : i32, message = "qc,kc->qk"}> : () -> ()
    %cst_53 = arith.constant dense<0.000000e+00> : vector<16x16xf32>
    %155 = tpu.matmul %153, %154, %cst_53 {dimension_numbers = #tpu.dot_dimension_numbers<[1], [1], [0], [0], [0, 0, 1, 0], [], []>} : vector<16x8xf32>, vector<16x8xf32>, vector<16x16xf32> -> vector<16x16xf32>
    "tpu.trace_stop"() : () -> ()
    %156 = vector.extract_strided_slice %150 {offsets = [0, 8], sizes = [16, 8], strides = [1, 1]} : vector<16x32xf32> to vector<16x8xf32>
    %157 = vector.extract_strided_slice %151 {offsets = [0, 8], sizes = [16, 8], strides = [1, 1]} : vector<16x32xf32> to vector<16x8xf32>
    "tpu.trace_start"() <{level = 10 : i32, message = "qc,kc->qk"}> : () -> ()
    %cst_54 = arith.constant dense<0.000000e+00> : vector<16x16xf32>
    %158 = tpu.matmul %156, %157, %cst_54 {dimension_numbers = #tpu.dot_dimension_numbers<[1], [1], [0], [0], [0, 0, 1, 0], [], []>} : vector<16x8xf32>, vector<16x8xf32>, vector<16x16xf32> -> vector<16x16xf32>
    "tpu.trace_stop"() : () -> ()
    %159 = vector.extract_strided_slice %150 {offsets = [0, 16], sizes = [16, 8], strides = [1, 1]} : vector<16x32xf32> to vector<16x8xf32>
    %160 = vector.extract_strided_slice %151 {offsets = [0, 16], sizes = [16, 8], strides = [1, 1]} : vector<16x32xf32> to vector<16x8xf32>
    "tpu.trace_start"() <{level = 10 : i32, message = "qc,kc->qk"}> : () -> ()
    %cst_55 = arith.constant dense<0.000000e+00> : vector<16x16xf32>
    %161 = tpu.matmul %159, %160, %cst_55 {dimension_numbers = #tpu.dot_dimension_numbers<[1], [1], [0], [0], [0, 0, 1, 0], [], []>} : vector<16x8xf32>, vector<16x8xf32>, vector<16x16xf32> -> vector<16x16xf32>
    "tpu.trace_stop"() : () -> ()
    %162 = vector.extract_strided_slice %150 {offsets = [0, 24], sizes = [16, 8], strides = [1, 1]} : vector<16x32xf32> to vector<16x8xf32>
    %163 = vector.extract_strided_slice %151 {offsets = [0, 24], sizes = [16, 8], strides = [1, 1]} : vector<16x32xf32> to vector<16x8xf32>
    "tpu.trace_start"() <{level = 10 : i32, message = "qc,kc->qk"}> : () -> ()
    %cst_56 = arith.constant dense<0.000000e+00> : vector<16x16xf32>
    %164 = tpu.matmul %162, %163, %cst_56 {dimension_numbers = #tpu.dot_dimension_numbers<[1], [1], [0], [0], [0, 0, 1, 0], [], []>} : vector<16x8xf32>, vector<16x8xf32>, vector<16x16xf32> -> vector<16x16xf32>
    "tpu.trace_stop"() : () -> ()
    %165 = tpu.concatenate %155, %158, %161, %164 in 0 : vector<16x16xf32>, vector<16x16xf32>, vector<16x16xf32>, vector<16x16xf32> -> vector<64x16xf32>
    %cst_57 = arith.constant 0.353553385 : f32
    %166 = vector.broadcast %cst_57 : f32 to vector<64x16xf32>
    %167 = arith.mulf %165, %166 : vector<64x16xf32>
    %168 = arith.addf %167, %28 : vector<64x16xf32>
    %cst_58 = arith.constant dense<0xFF800000> : vector<64xf32>
    %169 = vector.multi_reduction <maximumf>, %168, %cst_58 [1] : vector<64x16xf32> to vector<64xf32>
    %170 = vector.shape_cast %169 : vector<64xf32> to vector<64x1xf32>
    %171 = vector.broadcast %170 : vector<64x1xf32> to vector<64x16xf32>
    %172 = arith.subf %168, %171 : vector<64x16xf32>
    %173 = math.exp %172 : vector<64x16xf32>
    %cst_59 = arith.constant dense<0.000000e+00> : vector<64xf32>
    %174 = vector.multi_reduction <add>, %173, %cst_59 [1] : vector<64x16xf32> to vector<64xf32>
    %175 = vector.shape_cast %174 : vector<64xf32> to vector<64x1xf32>
    %176 = tpu.reciprocal %175 {approx = true} : vector<64x1xf32> -> vector<64x1xf32>
    %177 = vector.broadcast %176 : vector<64x1xf32> to vector<64x16xf32>
    %178 = arith.mulf %173, %177 : vector<64x16xf32>
    %179 = vector.extract_strided_slice %178 {offsets = [0, 0], sizes = [16, 16], strides = [1, 1]} : vector<64x16xf32> to vector<16x16xf32>
    %180 = vector.extract_strided_slice %152 {offsets = [0, 0], sizes = [16, 8], strides = [1, 1]} : vector<16x32xf32> to vector<16x8xf32>
    %cst_60 = arith.constant dense<0.000000e+00> : vector<16x8xf32>
    %181 = tpu.matmul %179, %180, %cst_60 {dimension_numbers = #tpu.dot_dimension_numbers<[1], [0], [0], [1], [0, 0, 1, 1], [], []>} : vector<16x16xf32>, vector<16x8xf32>, vector<16x8xf32> -> vector<16x8xf32>
    %182 = vector.extract_strided_slice %178 {offsets = [16, 0], sizes = [16, 16], strides = [1, 1]} : vector<64x16xf32> to vector<16x16xf32>
    %183 = vector.extract_strided_slice %152 {offsets = [0, 8], sizes = [16, 8], strides = [1, 1]} : vector<16x32xf32> to vector<16x8xf32>
    %cst_61 = arith.constant dense<0.000000e+00> : vector<16x8xf32>
    %184 = tpu.matmul %182, %183, %cst_61 {dimension_numbers = #tpu.dot_dimension_numbers<[1], [0], [0], [1], [0, 0, 1, 1], [], []>} : vector<16x16xf32>, vector<16x8xf32>, vector<16x8xf32> -> vector<16x8xf32>
    %185 = vector.extract_strided_slice %178 {offsets = [32, 0], sizes = [16, 16], strides = [1, 1]} : vector<64x16xf32> to vector<16x16xf32>
    %186 = vector.extract_strided_slice %152 {offsets = [0, 16], sizes = [16, 8], strides = [1, 1]} : vector<16x32xf32> to vector<16x8xf32>
    %cst_62 = arith.constant dense<0.000000e+00> : vector<16x8xf32>
    %187 = tpu.matmul %185, %186, %cst_62 {dimension_numbers = #tpu.dot_dimension_numbers<[1], [0], [0], [1], [0, 0, 1, 1], [], []>} : vector<16x16xf32>, vector<16x8xf32>, vector<16x8xf32> -> vector<16x8xf32>
    %188 = vector.extract_strided_slice %178 {offsets = [48, 0], sizes = [16, 16], strides = [1, 1]} : vector<64x16xf32> to vector<16x16xf32>
    %189 = vector.extract_strided_slice %152 {offsets = [0, 24], sizes = [16, 8], strides = [1, 1]} : vector<16x32xf32> to vector<16x8xf32>
    %cst_63 = arith.constant dense<0.000000e+00> : vector<16x8xf32>
    %190 = tpu.matmul %188, %189, %cst_63 {dimension_numbers = #tpu.dot_dimension_numbers<[1], [0], [0], [1], [0, 0, 1, 1], [], []>} : vector<16x16xf32>, vector<16x8xf32>, vector<16x8xf32> -> vector<16x8xf32>
    %191 = tpu.concatenate %181, %184, %187, %190 in 1 : vector<16x8xf32>, vector<16x8xf32>, vector<16x8xf32>, vector<16x8xf32> -> vector<16x32xf32>
    %cst_64 = arith.constant dense<0.000000e+00> : vector<16x64xf32>
    %192 = tpu.matmul %191, %10, %cst_64 {dimension_numbers = #tpu.dot_dimension_numbers<[1], [0], [0], [1], [0, 0, 1, 1], [], []>} : vector<16x32xf32>, vector<32x64xf32>, vector<16x64xf32> -> vector<16x64xf32>
    %193 = vector.extract_strided_slice %192 {offsets = [0, 0], sizes = [16, 32], strides = [1, 1]} : vector<16x64xf32> to vector<16x32xf32>
    %194 = vector.extract_strided_slice %192 {offsets = [0, 32], sizes = [16, 32], strides = [1, 1]} : vector<16x64xf32> to vector<16x32xf32>
    %195 = vector.shape_cast %16 : vector<16x1xi1> to vector<16x1xi1>
    %196 = vector.broadcast %195 : vector<16x1xi1> to vector<16x32xi1>
    %197 = arith.select %196, %193, %194 : vector<16x32xi1>, vector<16x32xf32>
    %198 = arith.addf %197, %1 : vector<16x32xf32>
    %199 = arith.addf %142, %198 : vector<16x32xf32>
    %cst_65 = arith.constant dense<0.000000e+00> : vector<16xf32>
    %200 = vector.multi_reduction <add>, %199, %cst_65 [1] : vector<16x32xf32> to vector<16xf32>
    %201 = vector.shape_cast %200 : vector<16xf32> to vector<16x1xf32>
    %cst_66 = arith.constant 3.200000e+01 : f32
    %202 = vector.broadcast %cst_66 : f32 to vector<16x1xf32>
    %203 = arith.divf %201, %202 : vector<16x1xf32>
    %204 = vector.broadcast %203 : vector<16x1xf32> to vector<16x32xf32>
    %205 = arith.subf %199, %204 : vector<16x32xf32>
    %206 = arith.mulf %205, %205 : vector<16x32xf32>
    %cst_67 = arith.constant dense<0.000000e+00> : vector<16xf32>
    %207 = vector.multi_reduction <add>, %206, %cst_67 [1] : vector<16x32xf32> to vector<16xf32>
    %208 = vector.shape_cast %207 : vector<16xf32> to vector<16x1xf32>
    %cst_68 = arith.constant 3.200000e+01 : f32
    %209 = vector.broadcast %cst_68 : f32 to vector<16x1xf32>
    %210 = arith.divf %208, %209 : vector<16x1xf32>
    %cst_69 = arith.constant 9.99999974E-6 : f32
    %211 = vector.broadcast %cst_69 : f32 to vector<16x1xf32>
    %212 = arith.addf %210, %211 : vector<16x1xf32>
    %213 = math.rsqrt %212 : vector<16x1xf32>
    %214 = vector.broadcast %213 : vector<16x1xf32> to vector<16x32xf32>
    %215 = arith.mulf %205, %214 : vector<16x32xf32>
    %216 = arith.mulf %215, %3 : vector<16x32xf32>
    %217 = arith.addf %216, %4 : vector<16x32xf32>
    %cst_70 = arith.constant dense<0.000000e+00> : vector<16x256xf32>
    %218 = tpu.matmul %217, %11, %cst_70 {dimension_numbers = #tpu.dot_dimension_numbers<[1], [0], [0], [1], [0, 0, 1, 1], [], []>} : vector<16x32xf32>, vector<32x256xf32>, vector<16x256xf32> -> vector<16x256xf32>
    %219 = vector.extract_strided_slice %218 {offsets = [0, 0], sizes = [16, 128], strides = [1, 1]} : vector<16x256xf32> to vector<16x128xf32>
    %220 = vector.extract_strided_slice %218 {offsets = [0, 128], sizes = [16, 128], strides = [1, 1]} : vector<16x256xf32> to vector<16x128xf32>
    %221 = vector.shape_cast %16 : vector<16x1xi1> to vector<16x1xi1>
    %222 = vector.broadcast %221 : vector<16x1xi1> to vector<16x128xi1>
    %223 = arith.select %222, %219, %220 : vector<16x128xi1>, vector<16x128xf32>
    %224 = arith.addf %223, %8 : vector<16x128xf32>
    %cst_71 = arith.constant 0.000000e+00 : f32
    %225 = vector.broadcast %cst_71 : f32 to vector<16x128xf32>
    %226 = arith.maximumf %224, %225 : vector<16x128xf32>
    %cst_72 = arith.constant dense<0.000000e+00> : vector<16x64xf32>
    %227 = tpu.matmul %226, %12, %cst_72 {dimension_numbers = #tpu.dot_dimension_numbers<[1], [0], [0], [1], [0, 0, 1, 1], [], []>} : vector<16x128xf32>, vector<128x64xf32>, vector<16x64xf32> -> vector<16x64xf32>
    %228 = vector.extract_strided_slice %227 {offsets = [0, 0], sizes = [16, 32], strides = [1, 1]} : vector<16x64xf32> to vector<16x32xf32>
    %229 = vector.extract_strided_slice %227 {offsets = [0, 32], sizes = [16, 32], strides = [1, 1]} : vector<16x64xf32> to vector<16x32xf32>
    %230 = vector.shape_cast %16 : vector<16x1xi1> to vector<16x1xi1>
    %231 = vector.broadcast %230 : vector<16x1xi1> to vector<16x32xi1>
    %232 = arith.select %231, %228, %229 : vector<16x32xi1>, vector<16x32xf32>
    %233 = arith.addf %232, %2 : vector<16x32xf32>
    %234 = arith.addf %217, %233 : vector<16x32xf32>
    %cst_73 = arith.constant dense<0.000000e+00> : vector<16xf32>
    %235 = vector.multi_reduction <add>, %234, %cst_73 [1] : vector<16x32xf32> to vector<16xf32>
    %236 = vector.shape_cast %235 : vector<16xf32> to vector<16x1xf32>
    %cst_74 = arith.constant 3.200000e+01 : f32
    %237 = vector.broadcast %cst_74 : f32 to vector<16x1xf32>
    %238 = arith.divf %236, %237 : vector<16x1xf32>
    %239 = vector.broadcast %238 : vector<16x1xf32> to vector<16x32xf32>
    %240 = arith.subf %234, %239 : vector<16x32xf32>
    %241 = arith.mulf %240, %240 : vector<16x32xf32>
    %cst_75 = arith.constant dense<0.000000e+00> : vector<16xf32>
    %242 = vector.multi_reduction <add>, %241, %cst_75 [1] : vector<16x32xf32> to vector<16xf32>
    %243 = vector.shape_cast %242 : vector<16xf32> to vector<16x1xf32>
    %cst_76 = arith.constant 3.200000e+01 : f32
    %244 = vector.broadcast %cst_76 : f32 to vector<16x1xf32>
    %245 = arith.divf %243, %244 : vector<16x1xf32>
    %cst_77 = arith.constant 9.99999974E-6 : f32
    %246 = vector.broadcast %cst_77 : f32 to vector<16x1xf32>
    %247 = arith.addf %245, %246 : vector<16x1xf32>
    %248 = math.rsqrt %247 : vector<16x1xf32>
    %249 = vector.broadcast %248 : vector<16x1xf32> to vector<16x32xf32>
    %250 = arith.mulf %240, %249 : vector<16x32xf32>
    %251 = arith.mulf %250, %5 : vector<16x32xf32>
    %252 = arith.addf %251, %6 : vector<16x32xf32>
    %253 = arith.addf %252, %142 : vector<16x32xf32>
    %254 = arith.addf %141, %253 : vector<16x32xf32>
    %c0_78 = arith.constant 0 : index
    %c0_79 = arith.constant 0 : index
    %255 = vector.load %arg2[%c0_78, %c0_79] : memref<16x32xf32, #tpu.memory_space<vmem>>, vector<16x32xf32>
    tpu.vector_store %arg2[%c0_78, %c0_79], %254 {strides = array<i32>} : memref<16x32xf32, #tpu.memory_space<vmem>>, vector<16x32xf32>,
    %256 = vector.extract_strided_slice %254 {offsets = [0, 0], sizes = [8, 32], strides = [1, 1]} : vector<16x32xf32> to vector<8x32xf32>
    %c0_80 = arith.constant 0 : index
    %c0_81 = arith.constant 0 : index
    %257 = vector.load %arg3[%c0_80, %c0_81] : memref<8x32xf32, #tpu.memory_space<vmem>>, vector<8x32xf32>
    tpu.vector_store %arg3[%c0_80, %c0_81], %256 {strides = array<i32>} : memref<8x32xf32, #tpu.memory_space<vmem>>, vector<8x32xf32>,
    %258 = vector.extract_strided_slice %254 {offsets = [8, 0], sizes = [8, 32], strides = [1, 1]} : vector<16x32xf32> to vector<8x32xf32>
    %c0_82 = arith.constant 0 : index
    %c0_83 = arith.constant 0 : index
    %259 = vector.load %arg4[%c0_82, %c0_83] : memref<8x32xf32, #tpu.memory_space<vmem>>, vector<8x32xf32>
    tpu.vector_store %arg4[%c0_82, %c0_83], %258 {strides = array<i32>} : memref<8x32xf32, #tpu.memory_space<vmem>>, vector<8x32xf32>,
    return
  }
}

</mosaic_0001>

<llo_original>
// kernel: transgnn_forward.1
$region0: #{transgnn_forward.1}
  #allocation0 [shape = 'u32[]', space=smem, size = 0x4, offset = 0x4, fixed_abs, tag = 'smem constant byte address 0x4 - core index']
  #allocation1 [shape = 'u32[144,128]{1,0:T(1,128)}', space=vmem, size = 0x12000, scoped, tag = 'internal scratch']
  %s0 = inlined_call_operand.hbm [shape: f32[224,256], index: 0, kind: input, shape index: {}]
  %s1 = inlined_call_operand.hbm [shape: f32[16,16], index: 1, kind: input, shape index: {}]
  %s2 = inlined_call_operand.hbm [shape: f32[16,32], index: 2, kind: output, shape index: {0}]
  %s3 = inlined_call_operand.hbm [shape: f32[8,32], index: 3, kind: output, shape index: {1}]
  %s4 = inlined_call_operand.hbm [shape: f32[8,32], index: 4, kind: output, shape index: {2}]
  %5 = xla_tuple %s2, %s3, %s4
  %s6 = sld [smem:[#allocation0]]
  $region42: #{transgnn_forward.1} parent=0
    _
  %s8 = ssub.s32 1, %s6
  %s9 = scalar_select 0, %s8, %s6
  $region1: #{transgnn_forward.1} parent=0
    #allocation2 [shape = 'u8[229376]{0}', space=vmem, size = 0x38000, scoped, tag = 'input window, operand 0, single buffered']
    #allocation3 [shape = 's32[1]{0}', space=sflag, size = 0x4, scoped, tag = 'scoped memory for transgnn_forward.1']
    #allocation4 [shape = 's32[1]{0}', space=sflag, size = 0x4, scoped, tag = 'scoped memory for transgnn_forward.1']
    #allocation5 [shape = 'u8[8192]{0}', space=vmem, size = 0x2000, scoped, tag = 'input window, operand 1, single buffered']
    #allocation6 [shape = 's32[1]{0}', space=sflag, size = 0x4, scoped, tag = 'scoped memory for transgnn_forward.1']
    #allocation7 [shape = 'u8[8192]{0}', space=vmem, size = 0x2000, scoped, tag = 'output window, operand 0, single buffered']
    #allocation8 [shape = 'u8[4096]{0}', space=vmem, size = 0x1000, scoped, tag = 'output window, operand 1, single buffered']
    #allocation9 [shape = 's32[1]{0}', space=sflag, size = 0x4, scoped, tag = 'scoped memory for transgnn_forward.1']
    #allocation10 [shape = 'u8[4096]{0}', space=vmem, size = 0x1000, scoped, tag = 'output window, operand 2, single buffered']
    %10 = vsyncpa [#allocation3], 0
    %11 = vsyncpa [#allocation6], 0
    %12 = vsyncpa [#allocation4], 0
    %13 = vsyncpa [#allocation9], 0
    // Predicated region
    $region2: #{transgnn_forward.1} parent=1 // pred_check
      _
    $region3: #{transgnn_forward.1} parent=1 // pred_check_branch
      %15 = sbr.rel (0) target = $region5
    $region4: #{transgnn_forward.1} parent=1 // pred_region
      %s17 = ssub.s32 7168, 7168
      %18 = vsyncadd [#allocation3], %s17
      %s19 = sshll.u32 [#allocation2], 4
      %s20 = int_to_ptr.vmem [resolvable:$true] %s19
      %25 = dma.hbm_to_vmem [thread:$0]  %s0, 7168, %s20, [#allocation3], 256, 256, 16
    $region5: #{transgnn_forward.1} parent=1 // pred_fallthru
      _
    // Predicated region
    $region6: #{transgnn_forward.1} parent=1 // pred_check
      _
    $region7: #{transgnn_forward.1} parent=1 // pred_check_branch
      %27 = sbr.rel (0) target = $region9
    $region8: #{transgnn_forward.1} parent=1 // pred_region
      %s29 = ssub.s32 256, 256
      %30 = vsyncadd [#allocation6], %s29
      %s31 = sshll.u32 [#allocation5], 4
      %s32 = int_to_ptr.vmem [resolvable:$true] %s31
      %37 = dma.hbm_to_vmem [thread:$0]  %s1, 256, %s32, [#allocation6], 128, 128, 8
    $region9: #{transgnn_forward.1} parent=1 // pred_fallthru
      _
    // Predicated region
    $region10: #{transgnn_forward.1} parent=1 // pred_check
      _
    $region11: #{transgnn_forward.1} parent=1 // pred_check_branch
      %39 = sbr.rel (0) target = $region13
    $region12: #{transgnn_forward.1} parent=1 // pred_region
      %40 = dma.done [#allocation3], 7168
    $region13: #{transgnn_forward.1} parent=1 // pred_fallthru
      _
    // Predicated region
    $region14: #{transgnn_forward.1} parent=1 // pred_check
      _
    $region15: #{transgnn_forward.1} parent=1 // pred_check_branch
      %42 = sbr.rel (0) target = $region17
    $region16: #{transgnn_forward.1} parent=1 // pred_region
      %43 = dma.done [#allocation6], 256
    $region17: #{transgnn_forward.1} parent=1 // pred_fallthru
      _
    %v44 = vld [vmem:[#allocation2] sm:$0xff]
    %v45 = vld [vmem:[#allocation2 + $0x10] sm:$0xff]
    %v46 = vld [vmem:[#allocation2 + $0x8] sm:$0xff]
    %v47 = vld [vmem:[#allocation2 + $0x18] sm:$0xff]
    %v48 = vld [vmem:[#allocation2 + $0x20] sm:$0xff]
    %v49 = vld [vmem:[#allocation2 + $0x30] sm:$0xff]
    %v50 = vld [vmem:[#allocation2 + $0x28] sm:$0xff]
    %v51 = vld [vmem:[#allocation2 + $0x38] sm:$0xff]
    %v52 = vld [vmem:[#allocation2 + $0x40] sm:$0xff]
    %v53 = vld [vmem:[#allocation2 + $0x48] sm:$0xff]
    %v54 = vld [vmem:[#allocation2 + $0x50] sm:$0xff]
    %v55 = vld [vmem:[#allocation2 + $0x58] sm:$0xff]
    %v56 = vld [vmem:[#allocation2 + $0x60] sm:$0xff]
    %v57 = vld [vmem:[#allocation2 + $0x68] sm:$0xff]
    %v58 = vld [vmem:[#allocation2 + $0x70] sm:$0xff]
    %v59 = vld [vmem:[#allocation2 + $0x78] sm:$0xff]
    %v60 = vld [vmem:[#allocation2 + $0x80] sm:$0xff]
    %v61 = vld [vmem:[#allocation2 + $0x88] sm:$0xff]
    %v62 = vld [vmem:[#allocation2 + $0x90] sm:$0xff]
    %v63 = vld [vmem:[#allocation2 + $0x98] sm:$0xff]
    %v64 = vld [vmem:[#allocation2 + $0xa0] sm:$0xff]
    %v65 = vld [vmem:[#allocation2 + $0xa8] sm:$0xff]
    %v66 = vld [vmem:[#allocation2 + $0xb0] sm:$0xff]
    %v67 = vld [vmem:[#allocation2 + $0xb8] sm:$0xff]
    %v68 = vld [vmem:[#allocation2 + $0xc0] sm:$0xff]
    %v69 = vld [vmem:[#allocation2 + $0xd0] sm:$0xff]
    %v70 = vld [vmem:[#allocation2 + $0xe0] sm:$0xff]
    %v71 = vld [vmem:[#allocation2 + $0xf0] sm:$0xff]
    %v72 = vld [vmem:[#allocation2 + $0x100] sm:$0xff]
    %v73 = vld [vmem:[#allocation2 + $0x110] sm:$0xff]
    %v74 = vld [vmem:[#allocation2 + $0x120] sm:$0xff]
    %v75 = vld [vmem:[#allocation2 + $0x130] sm:$0xff]
    %v76 = vld [vmem:[#allocation2 + $0x140] sm:$0xff]
    %v77 = vld [vmem:[#allocation2 + $0x150] sm:$0xff]
    %v78 = vld [vmem:[#allocation2 + $0x160] sm:$0xff]
    %v79 = vld [vmem:[#allocation2 + $0x170] sm:$0xff]
    %v80 = vld [vmem:[#allocation2 + $0x180] sm:$0xff]
    %v81 = vld [vmem:[#allocation2 + $0x190] sm:$0xff]
    %v82 = vld [vmem:[#allocation2 + $0x1a0] sm:$0xff]
    %v83 = vld [vmem:[#allocation2 + $0x1b0] sm:$0xff]
    %v84 = vld [vmem:[#allocation5] sm:$0xff]
    %v85 = vld [vmem:[#allocation5 + $0x8] sm:$0xff]
    %v86 = vlaneseq
    %v87 = vshrl.u32 %v86, 7
    %v88 = vadd.s32 %v87, 8
    %vm89 = vcmp.lt.s32.totalorder %v87, 8
    %vm90 = vcmp.lt.s32.totalorder %v88, 8
    %v91 = vlaneseq
    %v92 = vand.u32 %v91, 127
    %vm93 = vcmp.lt.s32.totalorder %v92, 8
    %vm94 = vmxor %vm89, %vm93
    %vm95 = vmxor %vm90, %vm93
    %vm96 = vmxor %vm94, 1
    %vm97 = vmxor %vm95, 1
    %v98 = vsel %vm96, 0.0, -1e+30
    %v99 = vsel %vm97, 0.0, -1e+30
    %vm100 = vcmask 130048
    %v102 = vsel %vm100, %v84, 0
    %v105 = vsel %vm100, %v85, 0
    %107 = vmatprep.subr.mxu0 0.0
    %108 = vmatpush1.msra.mxu0 %v44
    %109 = vmatprep.subr.mxu0 0.0
    %110 = vmatpush1.msra.mxu0 %v45
    %111 = vmatprep.subr.mxu0 0.0
    %112 = vmatpush1.msra.mxu0 0.0
    %113 = vmatprep.subr.mxu0 0.0
    %114 = vmatpush1.msra.mxu0 0.0
    %115 = vmatprep.subr.mxu0 0.0
    %116 = vmatpush1.msra.mxu0 0.0
    %117 = vmatprep.subr.mxu0 0.0
    %118 = vmatpush1.msra.mxu0 0.0
    %119 = vmatprep.subr.mxu0 0.0
    %120 = vmatpush1.msra.mxu0 0.0
    %121 = vmatprep.subr.mxu0 0.0
    %122 = vmatpush1.msra.mxu0 0.0
    %123 = vmatprep.subr.mxu0 0.0
    %124 = vmatpush1.msra.mxu0 0.0
    %125 = vmatprep.subr.mxu0 0.0
    %126 = vmatpush1.msra.mxu0 0.0
    %127 = vmatprep.subr.mxu0 0.0
    %128 = vmatpush1.msra.mxu0 0.0
    %129 = vmatprep.subr.mxu0 0.0
    %130 = vmatpush1.msra.mxu0 0.0
    %131 = vmatprep.subr.mxu0 0.0
    %132 = vmatpush1.msra.mxu0 0.0
    %133 = vmatprep.subr.mxu0 0.0
    %134 = vmatpush1.msra.mxu0 0.0
    %135 = vmatprep.subr.mxu0 0.0
    %136 = vmatpush1.msra.mxu0 0.0
    %137 = vmatprep.subr.mxu0 0.0
    %138 = vmatpush1.msra.mxu0 0.0
    %139 = vmatprep.subr.mxu0 0.0
    %140 = vmatpush1.msra.mxu0 0.0
    %141 = vmatprep.subr.mxu0 0.0
    %142 = vmatpush1.msra.mxu0 0.0
    %143 = vmatprep.subr.mxu0 0.0
    %144 = vmatpush1.msra.mxu0 0.0
    %145 = vmatprep.subr.mxu0 0.0
    %146 = vmatpush1.msra.mxu0 0.0
    %147 = vmatprep.subr.mxu0 0.0
    %148 = vmatpush1.msra.mxu0 0.0
    %149 = vmatprep.subr.mxu0 0.0
    %150 = vmatpush1.msra.mxu0 0.0
    %151 = vmatprep.subr.mxu0 0.0
    %152 = vmatpush1.msra.mxu0 0.0
    %153 = vmatprep.subr.mxu0 0.0
    %154 = vmatpush1.msra.mxu0 0.0
    %155 = vmatprep.subr.mxu0 0.0
    %156 = vmatpush1.msra.mxu0 0.0
    %157 = vmatprep.subr.mxu0 0.0
    %158 = vmatpush1.msra.mxu0 0.0
    %159 = vmatprep.subr.mxu0 0.0
    %160 = vmatpush1.msra.mxu0 0.0
    %161 = vmatprep.subr.mxu0 0.0
    %162 = vmatpush1.msra.mxu0 0.0
    %163 = vmatprep.subr.mxu0 0.0
    %164 = vmatpush1.msra.mxu0 0.0
    %165 = vmatprep.subr.mxu0 0.0
    %166 = vmatpush1.msra.mxu0 0.0
    %167 = vmatprep.subr.mxu0 0.0
    %168 = vmatpush1.msra.mxu0 0.0
    %169 = vmatprep.subr.mxu0 0.0
    %170 = vmatpush1.msra.mxu0 0.0
    %171 = vmatprep.mubr.f32.mxu0 0.0
    %172 = vmatmul.mubr.f32.gmra.mrb[0].mxu0 %v102
    %v173 = vpop.f32.mrb[0].mxu0
    %v174 = vadd.f32 0.0, %v173
    %v175 = vpop.f32.mrb[0].mxu0
    %176 = vmatprep.mubr.f32.mxu0 0.0
    %177 = vmatmul.mubr.f32.gmra.mrb[0].mxu0 %v105
    %v178 = vpop.f32.mrb[0].mxu0
    %v179 = vadd.f32 0.0, %v178
    %v180 = vpop.f32.mrb[0].mxu0
    %181 = vdwg.mxu0
    %vm182 = vcmask 261120
    %v184 = vsel %vm182, %v174, 0
    %v187 = vsel %vm182, %v179, 0
    %189 = vmatprep.subr.mxu0 %v53
    %190 = vmatpush1.msra.mxu0 %v52
    %191 = vmatprep.subr.mxu0 %v55
    %192 = vmatpush1.msra.mxu0 %v54
    %193 = vmatprep.subr.mxu0 %v57
    %194 = vmatpush1.msra.mxu0 %v56
    %195 = vmatprep.subr.mxu0 %v59
    %196 = vmatpush1.msra.mxu0 %v58
    %197 = vmatprep.subr.mxu0 0.0
    %198 = vmatpush1.msra.mxu0 0.0
    %199 = vmatprep.subr.mxu0 0.0
    %200 = vmatpush1.msra.mxu0 0.0
    %201 = vmatprep.subr.mxu0 0.0
    %202 = vmatpush1.msra.mxu0 0.0
    %203 = vmatprep.subr.mxu0 0.0
    %204 = vmatpush1.msra.mxu0 0.0
    %205 = vmatprep.subr.mxu0 0.0
    %206 = vmatpush1.msra.mxu0 0.0
    %207 = vmatprep.subr.mxu0 0.0
    %208 = vmatpush1.msra.mxu0 0.0
    %209 = vmatprep.subr.mxu0 0.0
    %210 = vmatpush1.msra.mxu0 0.0
    %211 = vmatprep.subr.mxu0 0.0
    %212 = vmatpush1.msra.mxu0 0.0
    %213 = vmatprep.subr.mxu0 0.0
    %214 = vmatpush1.msra.mxu0 0.0
    %215 = vmatprep.subr.mxu0 0.0
    %216 = vmatpush1.msra.mxu0 0.0
    %217 = vmatprep.subr.mxu0 0.0
    %218 = vmatpush1.msra.mxu0 0.0
    %219 = vmatprep.subr.mxu0 0.0
    %220 = vmatpush1.msra.mxu0 0.0
    %221 = vmatprep.subr.mxu0 0.0
    %222 = vmatpush1.msra.mxu0 0.0
    %223 = vmatprep.subr.mxu0 0.0
    %224 = vmatpush1.msra.mxu0 0.0
    %225 = vmatprep.subr.mxu0 0.0
    %226 = vmatpush1.msra.mxu0 0.0
    %227 = vmatprep.subr.mxu0 0.0
    %228 = vmatpush1.msra.mxu0 0.0
    %229 = vmatprep.subr.mxu0 0.0
    %230 = vmatpush1.msra.mxu0 0.0
    %231 = vmatprep.subr.mxu0 0.0
    %232 = vmatpush1.msra.mxu0 0.0
    %233 = vmatprep.subr.mxu0 0.0
    %234 = vmatpush1.msra.mxu0 0.0
    %235 = vmatprep.subr.mxu0 0.0
    %236 = vmatpush1.msra.mxu0 0.0
    %237 = vmatprep.subr.mxu0 0.0
    %238 = vmatpush1.msra.mxu0 0.0
    %239 = vmatprep.subr.mxu0 0.0
    %240 = vmatpush1.msra.mxu0 0.0
    %241 = vmatprep.subr.mxu0 0.0
    %242 = vmatpush1.msra.mxu0 0.0
    %243 = vmatprep.subr.mxu0 0.0
    %244 = vmatpush1.msra.mxu0 0.0
    %245 = vmatprep.subr.mxu0 0.0
    %246 = vmatpush1.msra.mxu0 0.0
    %247 = vmatprep.subr.mxu0 0.0
    %248 = vmatpush1.msra.mxu0 0.0
    %249 = vmatprep.subr.mxu0 0.0
    %250 = vmatpush1.msra.mxu0 0.0
    %251 = vmatprep.subr.mxu0 0.0
    %252 = vmatpush1.msra.mxu0 0.0
    %253 = vmatprep.mubr.f32.mxu0 0.0
    %254 = vmatmul.mubr.f32.gmra.mrb[0].mxu0 %v184
    %v255 = vpop.f32.mrb[0].mxu0
    %v256 = vadd.f32 0.0, %v255
    %v257 = vpop.f32.mrb[0].mxu0
    %v258 = vadd.f32 0.0, %v257
    %259 = vmatprep.mubr.f32.mxu0 0.0
    %260 = vmatmul.mubr.f32.gmra.mrb[0].mxu0 %v187
    %v261 = vpop.f32.mrb[0].mxu0
    %v262 = vadd.f32 0.0, %v261
    %v263 = vpop.f32.mrb[0].mxu0
    %v264 = vadd.f32 0.0, %v263
    %265 = vdwg.mxu0
    %v266 = vsel %vm89, 1, 0
    %v267 = vsel %vm90, 1, 0
    %vm268 = vcmp.eq.s32.totalorder %v266, 1
    %vm269 = vcmp.eq.s32.totalorder %v267, 1
    %274 = vrot.lane.b32.xlu0 %v256, 32
    %v275 = vpop.permute.xlu0 %274
    %276 = vrot.lane.b32.xlu0 %v258, 32
    %v277 = vpop.permute.xlu0 %276
    %278 = vrot.lane.b32.xlu0 %v262, 32
    %v279 = vpop.permute.xlu0 %278
    %280 = vrot.lane.b32.xlu0 %v264, 32
    %v281 = vpop.permute.xlu0 %280
    %v282 = vsel %vm182, %v275, %v277
    %v283 = vsel %vm182, %v279, %v281
    %v286 = vsel %vm268, %v256, %v282
    %v287 = vsel %vm269, %v262, %v283
    %v288 = vadd.f32 %v286, %v48
    %v289 = vadd.f32 %v287, %v49
    %292 = vrot.lane.b32.xlu0 %v288, 96
    %v293 = vpop.permute.xlu0 %292
    %294 = vrot.lane.b32.xlu0 %v289, 96
    %v295 = vpop.permute.xlu0 %294
    %vm296 = vcmask 64512
    %v297 = vsel %vm296, %v288, 0
    %v299 = vsel %vm296, %v289, 0
    %v301 = vsel %vm296, %v293, 0
    %v303 = vsel %vm296, %v295, 0
    %305 = vmatprep.subr.mxu0 0.0
    %306 = vmatpush1.xpose.msra.mxu0 %v301
    %307 = vmatprep.subr.mxu0 0.0
    %308 = vmatpush1.xpose.msra.mxu0 %v303
    %309 = vmatprep.subr.mxu0 0.0
    %310 = vmatpush1.xpose.msra.mxu0 0.0
    %311 = vmatprep.subr.mxu0 0.0
    %312 = vmatpush1.xpose.msra.mxu0 0.0
    %313 = vmatprep.subr.mxu0 0.0
    %314 = vmatpush1.xpose.msra.mxu0 0.0
    %315 = vmatprep.subr.mxu0 0.0
    %316 = vmatpush1.xpose.msra.mxu0 0.0
    %317 = vmatprep.subr.mxu0 0.0
    %318 = vmatpush1.xpose.msra.mxu0 0.0
    %319 = vmatprep.subr.mxu0 0.0
    %320 = vmatpush1.xpose.msra.mxu0 0.0
    %321 = vmatprep.subr.mxu0 0.0
    %322 = vmatpush1.xpose.msra.mxu0 0.0
    %323 = vmatprep.subr.mxu0 0.0
    %324 = vmatpush1.xpose.msra.mxu0 0.0
    %325 = vmatprep.subr.mxu0 0.0
    %326 = vmatpush1.xpose.msra.mxu0 0.0
    %327 = vmatprep.subr.mxu0 0.0
    %328 = vmatpush1.xpose.msra.mxu0 0.0
    %329 = vmatprep.subr.mxu0 0.0
    %330 = vmatpush1.xpose.msra.mxu0 0.0
    %331 = vmatprep.subr.mxu0 0.0
    %332 = vmatpush1.xpose.msra.mxu0 0.0
    %333 = vmatprep.subr.mxu0 0.0
    %334 = vmatpush1.xpose.msra.mxu0 0.0
    %335 = vmatprep.subr.mxu0 0.0
    %336 = vmatpush1.xpose.msra.mxu0 0.0
    %337 = vmatprep.subr.mxu0 0.0
    %338 = vmatpush1.xpose.msra.mxu0 0.0
    %339 = vmatprep.subr.mxu0 0.0
    %340 = vmatpush1.xpose.msra.mxu0 0.0
    %341 = vmatprep.subr.mxu0 0.0
    %342 = vmatpush1.xpose.msra.mxu0 0.0
    %343 = vmatprep.subr.mxu0 0.0
    %344 = vmatpush1.xpose.msra.mxu0 0.0
    %345 = vmatprep.subr.mxu0 0.0
    %346 = vmatpush1.xpose.msra.mxu0 0.0
    %347 = vmatprep.subr.mxu0 0.0
    %348 = vmatpush1.xpose.msra.mxu0 0.0
    %349 = vmatprep.subr.mxu0 0.0
    %350 = vmatpush1.xpose.msra.mxu0 0.0
    %351 = vmatprep.subr.mxu0 0.0
    %352 = vmatpush1.xpose.msra.mxu0 0.0
    %353 = vmatprep.subr.mxu0 0.0
    %354 = vmatpush1.xpose.msra.mxu0 0.0
    %355 = vmatprep.subr.mxu0 0.0
    %356 = vmatpush1.xpose.msra.mxu0 0.0
    %357 = vmatprep.subr.mxu0 0.0
    %358 = vmatpush1.xpose.msra.mxu0 0.0
    %359 = vmatprep.subr.mxu0 0.0
    %360 = vmatpush1.xpose.msra.mxu0 0.0
    %361 = vmatprep.subr.mxu0 0.0
    %362 = vmatpush1.xpose.msra.mxu0 0.0
    %363 = vmatprep.subr.mxu0 0.0
    %364 = vmatpush1.xpose.msra.mxu0 0.0
    %365 = vmatprep.subr.mxu0 0.0
    %366 = vmatpush1.xpose.msra.mxu0 0.0
    %367 = vmatprep.subr.mxu0 0.0
    %368 = vmatpush1.xpose.msra.mxu0 0.0
    %369 = vmatprep.mubr.f32.mxu0 0.0
    %370 = vmatmul.mubr.f32.gmra.mrb[0].mxu0 %v297
    %v371 = vpop.f32.mrb[0].mxu0
    %v372 = vadd.f32 0.0, %v371
    %v373 = vpop.f32.mrb[0].mxu0
    %374 = vmatprep.mubr.f32.mxu0 0.0
    %375 = vmatmul.mubr.f32.gmra.mrb[0].mxu0 %v299
    %v376 = vpop.f32.mrb[0].mxu0
    %v377 = vadd.f32 0.0, %v376
    %v378 = vpop.f32.mrb[0].mxu0
    %379 = vdwg.mxu0
    %380 = vrot.lane.b32.xlu0 %v288, 120
    %v381 = vpop.permute.xlu0 %380
    %382 = vrot.lane.b32.xlu0 %v289, 120
    %v383 = vpop.permute.xlu0 %382
    %384 = vrot.lane.b32.xlu0 %v288, 88
    %v385 = vpop.permute.xlu0 %384
    %386 = vrot.lane.b32.xlu0 %v289, 88
    %v387 = vpop.permute.xlu0 %386
    %v388 = vsel %vm296, %v381, 0
    %v390 = vsel %vm296, %v383, 0
    %v392 = vsel %vm296, %v385, 0
    %v394 = vsel %vm296, %v387, 0
    %396 = vmatprep.subr.mxu0 0.0
    %397 = vmatpush1.xpose.msra.mxu0 %v392
    %398 = vmatprep.subr.mxu0 0.0
    %399 = vmatpush1.xpose.msra.mxu0 %v394
    %400 = vmatprep.subr.mxu0 0.0
    %401 = vmatpush1.xpose.msra.mxu0 0.0
    %402 = vmatprep.subr.mxu0 0.0
    %403 = vmatpush1.xpose.msra.mxu0 0.0
    %404 = vmatprep.subr.mxu0 0.0
    %405 = vmatpush1.xpose.msra.mxu0 0.0
    %406 = vmatprep.subr.mxu0 0.0
    %407 = vmatpush1.xpose.msra.mxu0 0.0
    %408 = vmatprep.subr.mxu0 0.0
    %409 = vmatpush1.xpose.msra.mxu0 0.0
    %410 = vmatprep.subr.mxu0 0.0
    %411 = vmatpush1.xpose.msra.mxu0 0.0
    %412 = vmatprep.subr.mxu0 0.0
    %413 = vmatpush1.xpose.msra.mxu0 0.0
    %414 = vmatprep.subr.mxu0 0.0
    %415 = vmatpush1.xpose.msra.mxu0 0.0
    %416 = vmatprep.subr.mxu0 0.0
    %417 = vmatpush1.xpose.msra.mxu0 0.0
    %418 = vmatprep.subr.mxu0 0.0
    %419 = vmatpush1.xpose.msra.mxu0 0.0
    %420 = vmatprep.subr.mxu0 0.0
    %421 = vmatpush1.xpose.msra.mxu0 0.0
    %422 = vmatprep.subr.mxu0 0.0
    %423 = vmatpush1.xpose.msra.mxu0 0.0
    %424 = vmatprep.subr.mxu0 0.0
    %425 = vmatpush1.xpose.msra.mxu0 0.0
    %426 = vmatprep.subr.mxu0 0.0
    %427 = vmatpush1.xpose.msra.mxu0 0.0
    %428 = vmatprep.subr.mxu0 0.0
    %429 = vmatpush1.xpose.msra.mxu0 0.0
    %430 = vmatprep.subr.mxu0 0.0
    %431 = vmatpush1.xpose.msra.mxu0 0.0
    %432 = vmatprep.subr.mxu0 0.0
    %433 = vmatpush1.xpose.msra.mxu0 0.0
    %434 = vmatprep.subr.mxu0 0.0
    %435 = vmatpush1.xpose.msra.mxu0 0.0
    %436 = vmatprep.subr.mxu0 0.0
    %437 = vmatpush1.xpose.msra.mxu0 0.0
    %438 = vmatprep.subr.mxu0 0.0
    %439 = vmatpush1.xpose.msra.mxu0 0.0
    %440 = vmatprep.subr.mxu0 0.0
    %441 = vmatpush1.xpose.msra.mxu0 0.0
    %442 = vmatprep.subr.mxu0 0.0
    %443 = vmatpush1.xpose.msra.mxu0 0.0
    %444 = vmatprep.subr.mxu0 0.0
    %445 = vmatpush1.xpose.msra.mxu0 0.0
    %446 = vmatprep.subr.mxu0 0.0
    %447 = vmatpush1.xpose.msra.mxu0 0.0
    %448 = vmatprep.subr.mxu0 0.0
    %449 = vmatpush1.xpose.msra.mxu0 0.0
    %450 = vmatprep.subr.mxu0 0.0
    %451 = vmatpush1.xpose.msra.mxu0 0.0
    %452 = vmatprep.subr.mxu0 0.0
    %453 = vmatpush1.xpose.msra.mxu0 0.0
    %454 = vmatprep.subr.mxu0 0.0
    %455 = vmatpush1.xpose.msra.mxu0 0.0
    %456 = vmatprep.subr.mxu0 0.0
    %457 = vmatpush1.xpose.msra.mxu0 0.0
    %458 = vmatprep.subr.mxu0 0.0
    %459 = vmatpush1.xpose.msra.mxu0 0.0
    %460 = vmatprep.mubr.f32.mxu0 0.0
    %461 = vmatmul.mubr.f32.gmra.mrb[0].mxu0 %v388
    %v462 = vpop.f32.mrb[0].mxu0
    %v463 = vadd.f32 0.0, %v462
    %v464 = vpop.f32.mrb[0].mxu0
    %465 = vmatprep.mubr.f32.mxu0 0.0
    %466 = vmatmul.mubr.f32.gmra.mrb[0].mxu0 %v390
    %v467 = vpop.f32.mrb[0].mxu0
    %v468 = vadd.f32 0.0, %v467
    %v469 = vpop.f32.mrb[0].mxu0
    %470 = vdwg.mxu0
    %471 = vrot.lane.b32.xlu0 %v288, 112
    %v472 = vpop.permute.xlu0 %471
    %473 = vrot.lane.b32.xlu0 %v289, 112
    %v474 = vpop.permute.xlu0 %473
    %475 = vrot.lane.b32.xlu0 %v288, 80
    %v476 = vpop.permute.xlu0 %475
    %477 = vrot.lane.b32.xlu0 %v289, 80
    %v478 = vpop.permute.xlu0 %477
    %v479 = vsel %vm296, %v472, 0
    %v481 = vsel %vm296, %v474, 0
    %v483 = vsel %vm296, %v476, 0
    %v485 = vsel %vm296, %v478, 0
    %487 = vmatprep.subr.mxu0 0.0
    %488 = vmatpush1.xpose.msra.mxu0 %v483
    %489 = vmatprep.subr.mxu0 0.0
    %490 = vmatpush1.xpose.msra.mxu0 %v485
    %491 = vmatprep.subr.mxu0 0.0
    %492 = vmatpush1.xpose.msra.mxu0 0.0
    %493 = vmatprep.subr.mxu0 0.0
    %494 = vmatpush1.xpose.msra.mxu0 0.0
    %495 = vmatprep.subr.mxu0 0.0
    %496 = vmatpush1.xpose.msra.mxu0 0.0
    %497 = vmatprep.subr.mxu0 0.0
    %498 = vmatpush1.xpose.msra.mxu0 0.0
    %499 = vmatprep.subr.mxu0 0.0
    %500 = vmatpush1.xpose.msra.mxu0 0.0
    %501 = vmatprep.subr.mxu0 0.0
    %502 = vmatpush1.xpose.msra.mxu0 0.0
    %503 = vmatprep.subr.mxu0 0.0
    %504 = vmatpush1.xpose.msra.mxu0 0.0
    %505 = vmatprep.subr.mxu0 0.0
    %506 = vmatpush1.xpose.msra.mxu0 0.0
    %507 = vmatprep.subr.mxu0 0.0
    %508 = vmatpush1.xpose.msra.mxu0 0.0
    %509 = vmatprep.subr.mxu0 0.0
    %510 = vmatpush1.xpose.msra.mxu0 0.0
    %511 = vmatprep.subr.mxu0 0.0
    %512 = vmatpush1.xpose.msra.mxu0 0.0
    %513 = vmatprep.subr.mxu0 0.0
    %514 = vmatpush1.xpose.msra.mxu0 0.0
    %515 = vmatprep.subr.mxu0 0.0
    %516 = vmatpush1.xpose.msra.mxu0 0.0
    %517 = vmatprep.subr.mxu0 0.0
    %518 = vmatpush1.xpose.msra.mxu0 0.0
    %519 = vmatprep.subr.mxu0 0.0
    %520 = vmatpush1.xpose.msra.mxu0 0.0
    %521 = vmatprep.subr.mxu0 0.0
    %522 = vmatpush1.xpose.msra.mxu0 0.0
    %523 = vmatprep.subr.mxu0 0.0
    %524 = vmatpush1.xpose.msra.mxu0 0.0
    %525 = vmatprep.subr.mxu0 0.0
    %526 = vmatpush1.xpose.msra.mxu0 0.0
    %527 = vmatprep.subr.mxu0 0.0
    %528 = vmatpush1.xpose.msra.mxu0 0.0
    %529 = vmatprep.subr.mxu0 0.0
    %530 = vmatpush1.xpose.msra.mxu0 0.0
    %531 = vmatprep.subr.mxu0 0.0
    %532 = vmatpush1.xpose.msra.mxu0 0.0
    %533 = vmatprep.subr.mxu0 0.0
    %534 = vmatpush1.xpose.msra.mxu0 0.0
    %535 = vmatprep.subr.mxu0 0.0
    %536 = vmatpush1.xpose.msra.mxu0 0.0
    %537 = vmatprep.subr.mxu0 0.0
    %538 = vmatpush1.xpose.msra.mxu0 0.0
    %539 = vmatprep.subr.mxu0 0.0
    %540 = vmatpush1.xpose.msra.mxu0 0.0
    %541 = vmatprep.subr.mxu0 0.0
    %542 = vmatpush1.xpose.msra.mxu0 0.0
    %543 = vmatprep.subr.mxu0 0.0
    %544 = vmatpush1.xpose.msra.mxu0 0.0
    %545 = vmatprep.subr.mxu0 0.0
    %546 = vmatpush1.xpose.msra.mxu0 0.0
    %547 = vmatprep.subr.mxu0 0.0
    %548 = vmatpush1.xpose.msra.mxu0 0.0
    %549 = vmatprep.subr.mxu0 0.0
    %550 = vmatpush1.xpose.msra.mxu0 0.0
    %551 = vmatprep.mubr.f32.mxu0 0.0
    %552 = vmatmul.mubr.f32.gmra.mrb[0].mxu0 %v479
    %v553 = vpop.f32.mrb[0].mxu0
    %v554 = vadd.f32 0.0, %v553
    %v555 = vpop.f32.mrb[0].mxu0
    %556 = vmatprep.mubr.f32.mxu0 0.0
    %557 = vmatmul.mubr.f32.gmra.mrb[0].mxu0 %v481
    %v558 = vpop.f32.mrb[0].mxu0
    %v559 = vadd.f32 0.0, %v558
    %v560 = vpop.f32.mrb[0].mxu0
    %561 = vdwg.mxu0
    %562 = vrot.lane.b32.xlu0 %v288, 104
    %v563 = vpop.permute.xlu0 %562
    %564 = vrot.lane.b32.xlu0 %v289, 104
    %v565 = vpop.permute.xlu0 %564
    %566 = vrot.lane.b32.xlu0 %v288, 72
    %v567 = vpop.permute.xlu0 %566
    %568 = vrot.lane.b32.xlu0 %v289, 72
    %v569 = vpop.permute.xlu0 %568
    %v570 = vsel %vm296, %v563, 0
    %v572 = vsel %vm296, %v565, 0
    %v574 = vsel %vm296, %v567, 0
    %v576 = vsel %vm296, %v569, 0
    %578 = vmatprep.subr.mxu0 0.0
    %579 = vmatpush1.xpose.msra.mxu0 %v574
    %580 = vmatprep.subr.mxu0 0.0
    %581 = vmatpush1.xpose.msra.mxu0 %v576
    %582 = vmatprep.subr.mxu0 0.0
    %583 = vmatpush1.xpose.msra.mxu0 0.0
    %584 = vmatprep.subr.mxu0 0.0
    %585 = vmatpush1.xpose.msra.mxu0 0.0
    %586 = vmatprep.subr.mxu0 0.0
    %587 = vmatpush1.xpose.msra.mxu0 0.0
    %588 = vmatprep.subr.mxu0 0.0
    %589 = vmatpush1.xpose.msra.mxu0 0.0
    %590 = vmatprep.subr.mxu0 0.0
    %591 = vmatpush1.xpose.msra.mxu0 0.0
    %592 = vmatprep.subr.mxu0 0.0
    %593 = vmatpush1.xpose.msra.mxu0 0.0
    %594 = vmatprep.subr.mxu0 0.0
    %595 = vmatpush1.xpose.msra.mxu0 0.0
    %596 = vmatprep.subr.mxu0 0.0
    %597 = vmatpush1.xpose.msra.mxu0 0.0
    %598 = vmatprep.subr.mxu0 0.0
    %599 = vmatpush1.xpose.msra.mxu0 0.0
    %600 = vmatprep.subr.mxu0 0.0
    %601 = vmatpush1.xpose.msra.mxu0 0.0
    %602 = vmatprep.subr.mxu0 0.0
    %603 = vmatpush1.xpose.msra.mxu0 0.0
    %604 = vmatprep.subr.mxu0 0.0
    %605 = vmatpush1.xpose.msra.mxu0 0.0
    %606 = vmatprep.subr.mxu0 0.0
    %607 = vmatpush1.xpose.msra.mxu0 0.0
    %608 = vmatprep.subr.mxu0 0.0
    %609 = vmatpush1.xpose.msra.mxu0 0.0
    %610 = vmatprep.subr.mxu0 0.0
    %611 = vmatpush1.xpose.msra.mxu0 0.0
    %612 = vmatprep.subr.mxu0 0.0
    %613 = vmatpush1.xpose.msra.mxu0 0.0
    %614 = vmatprep.subr.mxu0 0.0
    %615 = vmatpush1.xpose.msra.mxu0 0.0
    %616 = vmatprep.subr.mxu0 0.0
    %617 = vmatpush1.xpose.msra.mxu0 0.0
    %618 = vmatprep.subr.mxu0 0.0
    %619 = vmatpush1.xpose.msra.mxu0 0.0
    %620 = vmatprep.subr.mxu0 0.0
    %621 = vmatpush1.xpose.msra.mxu0 0.0
    %622 = vmatprep.subr.mxu0 0.0
    %623 = vmatpush1.xpose.msra.mxu0 0.0
    %624 = vmatprep.subr.mxu0 0.0
    %625 = vmatpush1.xpose.msra.mxu0 0.0
    %626 = vmatprep.subr.mxu0 0.0
    %627 = vmatpush1.xpose.msra.mxu0 0.0
    %628 = vmatprep.subr.mxu0 0.0
    %629 = vmatpush1.xpose.msra.mxu0 0.0
    %630 = vmatprep.subr.mxu0 0.0
    %631 = vmatpush1.xpose.msra.mxu0 0.0
    %632 = vmatprep.subr.mxu0 0.0
    %633 = vmatpush1.xpose.msra.mxu0 0.0
    %634 = vmatprep.subr.mxu0 0.0
    %635 = vmatpush1.xpose.msra.mxu0 0.0
    %636 = vmatprep.subr.mxu0 0.0
    %637 = vmatpush1.xpose.msra.mxu0 0.0
    %638 = vmatprep.subr.mxu0 0.0
    %639 = vmatpush1.xpose.msra.mxu0 0.0
    %640 = vmatprep.subr.mxu0 0.0
    %641 = vmatpush1.xpose.msra.mxu0 0.0
    %642 = vmatprep.mubr.f32.mxu0 0.0
    %643 = vmatmul.mubr.f32.gmra.mrb[0].mxu0 %v570
    %v644 = vpop.f32.mrb[0].mxu0
    %v645 = vadd.f32 0.0, %v644
    %v646 = vpop.f32.mrb[0].mxu0
    %647 = vmatprep.mubr.f32.mxu0 0.0
    %648 = vmatmul.mubr.f32.gmra.mrb[0].mxu0 %v572
    %v649 = vpop.f32.mrb[0].mxu0
    %v650 = vadd.f32 0.0, %v649
    %v651 = vpop.f32.mrb[0].mxu0
    %652 = vdwg.mxu0
    %v653 = vmul.f32 %v372, 0.35355338
    %v654 = vmul.f32 %v377, 0.35355338
    %v655 = vmul.f32 %v463, 0.35355338
    %v656 = vmul.f32 %v468, 0.35355338
    %v657 = vmul.f32 %v554, 0.35355338
    %v658 = vmul.f32 %v559, 0.35355338
    %v659 = vmul.f32 %v645, 0.35355338
    %v660 = vmul.f32 %v650, 0.35355338
    %v661 = vadd.f32 %v653, %v98
    %v662 = vadd.f32 %v654, %v99
    %v663 = vadd.f32 %v655, %v98
    %v664 = vadd.f32 %v656, %v99
    %v665 = vadd.f32 %v657, %v98
    %v666 = vadd.f32 %v658, %v99
    %v667 = vadd.f32 %v659, %v98
    %v668 = vadd.f32 %v660, %v99
    %v669 = vsel %vm100, %v661, -inf
    %670 = vmax.xlane.f32.xlu0 %v669
    %v671 = vpop.xlane.xlu0 %670
    %v672 = vsel %vm100, %v662, -inf
    %673 = vmax.xlane.f32.xlu0 %v672
    %v674 = vpop.xlane.xlu0 %673
    %v675 = vsel %vm100, %v663, -inf
    %676 = vmax.xlane.f32.xlu0 %v675
    %v677 = vpop.xlane.xlu0 %676
    %v678 = vsel %vm100, %v664, -inf
    %679 = vmax.xlane.f32.xlu0 %v678
    %v680 = vpop.xlane.xlu0 %679
    %v681 = vsel %vm100, %v665, -inf
    %682 = vmax.xlane.f32.xlu0 %v681
    %v683 = vpop.xlane.xlu0 %682
    %v684 = vsel %vm100, %v666, -inf
    %685 = vmax.xlane.f32.xlu0 %v684
    %v686 = vpop.xlane.xlu0 %685
    %v687 = vsel %vm100, %v667, -inf
    %688 = vmax.xlane.f32.xlu0 %v687
    %v689 = vpop.xlane.xlu0 %688
    %v690 = vsel %vm100, %v668, -inf
    %691 = vmax.xlane.f32.xlu0 %v690
    %v692 = vpop.xlane.xlu0 %691
    %v693 = vsub.f32 %v661, %v671
    %v694 = vsub.f32 %v662, %v674
    %v695 = vsub.f32 %v663, %v677
    %v696 = vsub.f32 %v664, %v680
    %v697 = vsub.f32 %v665, %v683
    %v698 = vsub.f32 %v666, %v686
    %v699 = vsub.f32 %v667, %v689
    %v700 = vsub.f32 %v668, %v692
    %v701 = vmul.f32 %v693, 1.442695
    %v702 = vpow.pop %v701
    %v703 = vmul.f32 %v694, 1.442695
    %v704 = vpow.pop %v703
    %v705 = vmul.f32 %v695, 1.442695
    %v706 = vpow.pop %v705
    %v707 = vmul.f32 %v696, 1.442695
    %v708 = vpow.pop %v707
    %v709 = vmul.f32 %v697, 1.442695
    %v710 = vpow.pop %v709
    %v711 = vmul.f32 %v698, 1.442695
    %v712 = vpow.pop %v711
    %v713 = vmul.f32 %v699, 1.442695
    %v714 = vpow.pop %v713
    %v715 = vmul.f32 %v700, 1.442695
    %v716 = vpow.pop %v715
    %v717 = vsel %vm100, %v702, 0.0
    %718 = vadd.xlane.f32.xlu0 %v717
    %v719 = vpop.xlane.xlu0 %718
    %v720 = vsel %vm100, %v704, 0.0
    %721 = vadd.xlane.f32.xlu0 %v720
    %v722 = vpop.xlane.xlu0 %721
    %v723 = vsel %vm100, %v706, 0.0
    %724 = vadd.xlane.f32.xlu0 %v723
    %v725 = vpop.xlane.xlu0 %724
    %v726 = vsel %vm100, %v708, 0.0
    %727 = vadd.xlane.f32.xlu0 %v726
    %v728 = vpop.xlane.xlu0 %727
    %v729 = vsel %vm100, %v710, 0.0
    %730 = vadd.xlane.f32.xlu0 %v729
    %v731 = vpop.xlane.xlu0 %730
    %v732 = vsel %vm100, %v712, 0.0
    %733 = vadd.xlane.f32.xlu0 %v732
    %v734 = vpop.xlane.xlu0 %733
    %v735 = vsel %vm100, %v714, 0.0
    %736 = vadd.xlane.f32.xlu0 %v735
    %v737 = vpop.xlane.xlu0 %736
    %v738 = vsel %vm100, %v716, 0.0
    %739 = vadd.xlane.f32.xlu0 %v738
    %v740 = vpop.xlane.xlu0 %739
    %v741 = vrcp.pop %v719
    %v742 = vrcp.pop %v722
    %v743 = vrcp.pop %v725
    %v744 = vrcp.pop %v728
    %v745 = vrcp.pop %v731
    %v746 = vrcp.pop %v734
    %v747 = vrcp.pop %v737
    %v748 = vrcp.pop %v740
    %v749 = vmul.f32 %v702, %v741
    %v750 = vmul.f32 %v704, %v742
    %v751 = vmul.f32 %v706, %v743
    %v752 = vmul.f32 %v708, %v744
    %v753 = vmul.f32 %v710, %v745
    %v754 = vmul.f32 %v712, %v746
    %v755 = vmul.f32 %v714, %v747
    %v756 = vmul.f32 %v716, %v748
    %757 = vrot.lane.b32.xlu0 %v288, 64
    %v758 = vpop.permute.xlu0 %757
    %759 = vrot.lane.b32.xlu0 %v289, 64
    %v760 = vpop.permute.xlu0 %759
    %v764 = vsel %vm100, %v749, 0
    %v767 = vsel %vm100, %v750, 0
    %769 = vmatprep.subr.mxu0 0.0
    %770 = vmatpush1.msra.mxu0 %v758
    %771 = vmatprep.subr.mxu0 0.0
    %772 = vmatpush1.msra.mxu0 %v760
    %773 = vmatprep.subr.mxu0 0.0
    %774 = vmatpush1.msra.mxu0 0.0
    %775 = vmatprep.subr.mxu0 0.0
    %776 = vmatpush1.msra.mxu0 0.0
    %777 = vmatprep.subr.mxu0 0.0
    %778 = vmatpush1.msra.mxu0 0.0
    %779 = vmatprep.subr.mxu0 0.0
    %780 = vmatpush1.msra.mxu0 0.0
    %781 = vmatprep.subr.mxu0 0.0
    %782 = vmatpush1.msra.mxu0 0.0
    %783 = vmatprep.subr.mxu0 0.0
    %784 = vmatpush1.msra.mxu0 0.0
    %785 = vmatprep.subr.mxu0 0.0
    %786 = vmatpush1.msra.mxu0 0.0
    %787 = vmatprep.subr.mxu0 0.0
    %788 = vmatpush1.msra.mxu0 0.0
    %789 = vmatprep.subr.mxu0 0.0
    %790 = vmatpush1.msra.mxu0 0.0
    %791 = vmatprep.subr.mxu0 0.0
    %792 = vmatpush1.msra.mxu0 0.0
    %793 = vmatprep.subr.mxu0 0.0
    %794 = vmatpush1.msra.mxu0 0.0
    %795 = vmatprep.subr.mxu0 0.0
    %796 = vmatpush1.msra.mxu0 0.0
    %797 = vmatprep.subr.mxu0 0.0
    %798 = vmatpush1.msra.mxu0 0.0
    %799 = vmatprep.subr.mxu0 0.0
    %800 = vmatpush1.msra.mxu0 0.0
    %801 = vmatprep.subr.mxu0 0.0
    %802 = vmatpush1.msra.mxu0 0.0
    %803 = vmatprep.subr.mxu0 0.0
    %804 = vmatpush1.msra.mxu0 0.0
    %805 = vmatprep.subr.mxu0 0.0
    %806 = vmatpush1.msra.mxu0 0.0
    %807 = vmatprep.subr.mxu0 0.0
    %808 = vmatpush1.msra.mxu0 0.0
    %809 = vmatprep.subr.mxu0 0.0
    %810 = vmatpush1.msra.mxu0 0.0
    %811 = vmatprep.subr.mxu0 0.0
    %812 = vmatpush1.msra.mxu0 0.0
    %813 = vmatprep.subr.mxu0 0.0
    %814 = vmatpush1.msra.mxu0 0.0
    %815 = vmatprep.subr.mxu0 0.0
    %816 = vmatpush1.msra.mxu0 0.0
    %817 = vmatprep.subr.mxu0 0.0
    %818 = vmatpush1.msra.mxu0 0.0
    %819 = vmatprep.subr.mxu0 0.0
    %820 = vmatpush1.msra.mxu0 0.0
    %821 = vmatprep.subr.mxu0 0.0
    %822 = vmatpush1.msra.mxu0 0.0
    %823 = vmatprep.subr.mxu0 0.0
    %824 = vmatpush1.msra.mxu0 0.0
    %825 = vmatprep.subr.mxu0 0.0
    %826 = vmatpush1.msra.mxu0 0.0
    %827 = vmatprep.subr.mxu0 0.0
    %828 = vmatpush1.msra.mxu0 0.0
    %829 = vmatprep.subr.mxu0 0.0
    %830 = vmatpush1.msra.mxu0 0.0
    %831 = vmatprep.subr.mxu0 0.0
    %832 = vmatpush1.msra.mxu0 0.0
    %833 = vmatprep.mubr.f32.mxu0 0.0
    %834 = vmatmul.mubr.f32.gmra.mrb[0].mxu0 %v764
    %v835 = vpop.f32.mrb[0].mxu0
    %v836 = vadd.f32 0.0, %v835
    %v837 = vpop.f32.mrb[0].mxu0
    %838 = vmatprep.mubr.f32.mxu0 0.0
    %839 = vmatmul.mubr.f32.gmra.mrb[0].mxu0 %v767
    %v840 = vpop.f32.mrb[0].mxu0
    %v841 = vadd.f32 0.0, %v840
    %v842 = vpop.f32.mrb[0].mxu0
    %843 = vdwg.mxu0
    %844 = vrot.lane.b32.xlu0 %v288, 56
    %v845 = vpop.permute.xlu0 %844
    %846 = vrot.lane.b32.xlu0 %v289, 56
    %v847 = vpop.permute.xlu0 %846
    %v851 = vsel %vm100, %v751, 0
    %v854 = vsel %vm100, %v752, 0
    %856 = vmatprep.subr.mxu0 0.0
    %857 = vmatpush1.msra.mxu0 %v845
    %858 = vmatprep.subr.mxu0 0.0
    %859 = vmatpush1.msra.mxu0 %v847
    %860 = vmatprep.subr.mxu0 0.0
    %861 = vmatpush1.msra.mxu0 0.0
    %862 = vmatprep.subr.mxu0 0.0
    %863 = vmatpush1.msra.mxu0 0.0
    %864 = vmatprep.subr.mxu0 0.0
    %865 = vmatpush1.msra.mxu0 0.0
    %866 = vmatprep.subr.mxu0 0.0
    %867 = vmatpush1.msra.mxu0 0.0
    %868 = vmatprep.subr.mxu0 0.0
    %869 = vmatpush1.msra.mxu0 0.0
    %870 = vmatprep.subr.mxu0 0.0
    %871 = vmatpush1.msra.mxu0 0.0
    %872 = vmatprep.subr.mxu0 0.0
    %873 = vmatpush1.msra.mxu0 0.0
    %874 = vmatprep.subr.mxu0 0.0
    %875 = vmatpush1.msra.mxu0 0.0
    %876 = vmatprep.subr.mxu0 0.0
    %877 = vmatpush1.msra.mxu0 0.0
    %878 = vmatprep.subr.mxu0 0.0
    %879 = vmatpush1.msra.mxu0 0.0
    %880 = vmatprep.subr.mxu0 0.0
    %881 = vmatpush1.msra.mxu0 0.0
    %882 = vmatprep.subr.mxu0 0.0
    %883 = vmatpush1.msra.mxu0 0.0
    %884 = vmatprep.subr.mxu0 0.0
    %885 = vmatpush1.msra.mxu0 0.0
    %886 = vmatprep.subr.mxu0 0.0
    %887 = vmatpush1.msra.mxu0 0.0
    %888 = vmatprep.subr.mxu0 0.0
    %889 = vmatpush1.msra.mxu0 0.0
    %890 = vmatprep.subr.mxu0 0.0
    %891 = vmatpush1.msra.mxu0 0.0
    %892 = vmatprep.subr.mxu0 0.0
    %893 = vmatpush1.msra.mxu0 0.0
    %894 = vmatprep.subr.mxu0 0.0
    %895 = vmatpush1.msra.mxu0 0.0
    %896 = vmatprep.subr.mxu0 0.0
    %897 = vmatpush1.msra.mxu0 0.0
    %898 = vmatprep.subr.mxu0 0.0
    %899 = vmatpush1.msra.mxu0 0.0
    %900 = vmatprep.subr.mxu0 0.0
    %901 = vmatpush1.msra.mxu0 0.0
    %902 = vmatprep.subr.mxu0 0.0
    %903 = vmatpush1.msra.mxu0 0.0
    %904 = vmatprep.subr.mxu0 0.0
    %905 = vmatpush1.msra.mxu0 0.0
    %906 = vmatprep.subr.mxu0 0.0
    %907 = vmatpush1.msra.mxu0 0.0
    %908 = vmatprep.subr.mxu0 0.0
    %909 = vmatpush1.msra.mxu0 0.0
    %910 = vmatprep.subr.mxu0 0.0
    %911 = vmatpush1.msra.mxu0 0.0
    %912 = vmatprep.subr.mxu0 0.0
    %913 = vmatpush1.msra.mxu0 0.0
    %914 = vmatprep.subr.mxu0 0.0
    %915 = vmatpush1.msra.mxu0 0.0
    %916 = vmatprep.subr.mxu0 0.0
    %917 = vmatpush1.msra.mxu0 0.0
    %918 = vmatprep.subr.mxu0 0.0
    %919 = vmatpush1.msra.mxu0 0.0
    %920 = vmatprep.mubr.f32.mxu0 0.0
    %921 = vmatmul.mubr.f32.gmra.mrb[0].mxu0 %v851
    %v922 = vpop.f32.mrb[0].mxu0
    %v923 = vadd.f32 0.0, %v922
    %v924 = vpop.f32.mrb[0].mxu0
    %925 = vmatprep.mubr.f32.mxu0 0.0
    %926 = vmatmul.mubr.f32.gmra.mrb[0].mxu0 %v854
    %v927 = vpop.f32.mrb[0].mxu0
    %v928 = vadd.f32 0.0, %v927
    %v929 = vpop.f32.mrb[0].mxu0
    %930 = vdwg.mxu0
    %931 = vrot.lane.b32.xlu0 %v288, 48
    %v932 = vpop.permute.xlu0 %931
    %933 = vrot.lane.b32.xlu0 %v289, 48
    %v934 = vpop.permute.xlu0 %933
    %v938 = vsel %vm100, %v753, 0
    %v941 = vsel %vm100, %v754, 0
    %943 = vmatprep.subr.mxu0 0.0
    %944 = vmatpush1.msra.mxu0 %v932
    %945 = vmatprep.subr.mxu0 0.0
    %946 = vmatpush1.msra.mxu0 %v934
    %947 = vmatprep.subr.mxu0 0.0
    %948 = vmatpush1.msra.mxu0 0.0
    %949 = vmatprep.subr.mxu0 0.0
    %950 = vmatpush1.msra.mxu0 0.0
    %951 = vmatprep.subr.mxu0 0.0
    %952 = vmatpush1.msra.mxu0 0.0
    %953 = vmatprep.subr.mxu0 0.0
    %954 = vmatpush1.msra.mxu0 0.0
    %955 = vmatprep.subr.mxu0 0.0
    %956 = vmatpush1.msra.mxu0 0.0
    %957 = vmatprep.subr.mxu0 0.0
    %958 = vmatpush1.msra.mxu0 0.0
    %959 = vmatprep.subr.mxu0 0.0
    %960 = vmatpush1.msra.mxu0 0.0
    %961 = vmatprep.subr.mxu0 0.0
    %962 = vmatpush1.msra.mxu0 0.0
    %963 = vmatprep.subr.mxu0 0.0
    %964 = vmatpush1.msra.mxu0 0.0
    %965 = vmatprep.subr.mxu0 0.0
    %966 = vmatpush1.msra.mxu0 0.0
    %967 = vmatprep.subr.mxu0 0.0
    %968 = vmatpush1.msra.mxu0 0.0
    %969 = vmatprep.subr.mxu0 0.0
    %970 = vmatpush1.msra.mxu0 0.0
    %971 = vmatprep.subr.mxu0 0.0
    %972 = vmatpush1.msra.mxu0 0.0
    %973 = vmatprep.subr.mxu0 0.0
    %974 = vmatpush1.msra.mxu0 0.0
    %975 = vmatprep.subr.mxu0 0.0
    %976 = vmatpush1.msra.mxu0 0.0
    %977 = vmatprep.subr.mxu0 0.0
    %978 = vmatpush1.msra.mxu0 0.0
    %979 = vmatprep.subr.mxu0 0.0
    %980 = vmatpush1.msra.mxu0 0.0
    %981 = vmatprep.subr.mxu0 0.0
    %982 = vmatpush1.msra.mxu0 0.0
    %983 = vmatprep.subr.mxu0 0.0
    %984 = vmatpush1.msra.mxu0 0.0
    %985 = vmatprep.subr.mxu0 0.0
    %986 = vmatpush1.msra.mxu0 0.0
    %987 = vmatprep.subr.mxu0 0.0
    %988 = vmatpush1.msra.mxu0 0.0
    %989 = vmatprep.subr.mxu0 0.0
    %990 = vmatpush1.msra.mxu0 0.0
    %991 = vmatprep.subr.mxu0 0.0
    %992 = vmatpush1.msra.mxu0 0.0
    %993 = vmatprep.subr.mxu0 0.0
    %994 = vmatpush1.msra.mxu0 0.0
    %995 = vmatprep.subr.mxu0 0.0
    %996 = vmatpush1.msra.mxu0 0.0
    %997 = vmatprep.subr.mxu0 0.0
    %998 = vmatpush1.msra.mxu0 0.0
    %999 = vmatprep.subr.mxu0 0.0
    %1000 = vmatpush1.msra.mxu0 0.0
    %1001 = vmatprep.subr.mxu0 0.0
    %1002 = vmatpush1.msra.mxu0 0.0
    %1003 = vmatprep.subr.mxu0 0.0
    %1004 = vmatpush1.msra.mxu0 0.0
    %1005 = vmatprep.subr.mxu0 0.0
    %1006 = vmatpush1.msra.mxu0 0.0
    %1007 = vmatprep.mubr.f32.mxu0 0.0
    %1008 = vmatmul.mubr.f32.gmra.mrb[0].mxu0 %v938
    %v1009 = vpop.f32.mrb[0].mxu0
    %v1010 = vadd.f32 0.0, %v1009
    %v1011 = vpop.f32.mrb[0].mxu0
    %1012 = vmatprep.mubr.f32.mxu0 0.0
    %1013 = vmatmul.mubr.f32.gmra.mrb[0].mxu0 %v941
    %v1014 = vpop.f32.mrb[0].mxu0
    %v1015 = vadd.f32 0.0, %v1014
    %v1016 = vpop.f32.mrb[0].mxu0
    %1017 = vdwg.mxu0
    %1018 = vrot.lane.b32.xlu0 %v288, 40
    %v1019 = vpop.permute.xlu0 %1018
    %1020 = vrot.lane.b32.xlu0 %v289, 40
    %v1021 = vpop.permute.xlu0 %1020
    %v1025 = vsel %vm100, %v755, 0
    %v1028 = vsel %vm100, %v756, 0
    %1030 = vmatprep.subr.mxu0 0.0
    %1031 = vmatpush1.msra.mxu0 %v1019
    %1032 = vmatprep.subr.mxu0 0.0
    %1033 = vmatpush1.msra.mxu0 %v1021
    %1034 = vmatprep.subr.mxu0 0.0
    %1035 = vmatpush1.msra.mxu0 0.0
    %1036 = vmatprep.subr.mxu0 0.0
    %1037 = vmatpush1.msra.mxu0 0.0
    %1038 = vmatprep.subr.mxu0 0.0
    %1039 = vmatpush1.msra.mxu0 0.0
    %1040 = vmatprep.subr.mxu0 0.0
    %1041 = vmatpush1.msra.mxu0 0.0
    %1042 = vmatprep.subr.mxu0 0.0
    %1043 = vmatpush1.msra.mxu0 0.0
    %1044 = vmatprep.subr.mxu0 0.0
    %1045 = vmatpush1.msra.mxu0 0.0
    %1046 = vmatprep.subr.mxu0 0.0
    %1047 = vmatpush1.msra.mxu0 0.0
    %1048 = vmatprep.subr.mxu0 0.0
    %1049 = vmatpush1.msra.mxu0 0.0
    %1050 = vmatprep.subr.mxu0 0.0
    %1051 = vmatpush1.msra.mxu0 0.0
    %1052 = vmatprep.subr.mxu0 0.0
    %1053 = vmatpush1.msra.mxu0 0.0
    %1054 = vmatprep.subr.mxu0 0.0
    %1055 = vmatpush1.msra.mxu0 0.0
    %1056 = vmatprep.subr.mxu0 0.0
    %1057 = vmatpush1.msra.mxu0 0.0
    %1058 = vmatprep.subr.mxu0 0.0
    %1059 = vmatpush1.msra.mxu0 0.0
    %1060 = vmatprep.subr.mxu0 0.0
    %1061 = vmatpush1.msra.mxu0 0.0
    %1062 = vmatprep.subr.mxu0 0.0
    %1063 = vmatpush1.msra.mxu0 0.0
    %1064 = vmatprep.subr.mxu0 0.0
    %1065 = vmatpush1.msra.mxu0 0.0
    %1066 = vmatprep.subr.mxu0 0.0
    %1067 = vmatpush1.msra.mxu0 0.0
    %1068 = vmatprep.subr.mxu0 0.0
    %1069 = vmatpush1.msra.mxu0 0.0
    %1070 = vmatprep.subr.mxu0 0.0
    %1071 = vmatpush1.msra.mxu0 0.0
    %1072 = vmatprep.subr.mxu0 0.0
    %1073 = vmatpush1.msra.mxu0 0.0
    %1074 = vmatprep.subr.mxu0 0.0
    %1075 = vmatpush1.msra.mxu0 0.0
    %1076 = vmatprep.subr.mxu0 0.0
    %1077 = vmatpush1.msra.mxu0 0.0
    %1078 = vmatprep.subr.mxu0 0.0
    %1079 = vmatpush1.msra.mxu0 0.0
    %1080 = vmatprep.subr.mxu0 0.0
    %1081 = vmatpush1.msra.mxu0 0.0
    %1082 = vmatprep.subr.mxu0 0.0
    %1083 = vmatpush1.msra.mxu0 0.0
    %1084 = vmatprep.subr.mxu0 0.0
    %1085 = vmatpush1.msra.mxu0 0.0
    %1086 = vmatprep.subr.mxu0 0.0
    %1087 = vmatpush1.msra.mxu0 0.0
    %1088 = vmatprep.subr.mxu0 0.0
    %1089 = vmatpush1.msra.mxu0 0.0
    %1090 = vmatprep.subr.mxu0 0.0
    %1091 = vmatpush1.msra.mxu0 0.0
    %1092 = vmatprep.subr.mxu0 0.0
    %1093 = vmatpush1.msra.mxu0 0.0
    %1094 = vmatprep.mubr.f32.mxu0 0.0
    %1095 = vmatmul.mubr.f32.gmra.mrb[0].mxu0 %v1025
    %v1096 = vpop.f32.mrb[0].mxu0
    %v1097 = vadd.f32 0.0, %v1096
    %v1098 = vpop.f32.mrb[0].mxu0
    %1099 = vmatprep.mubr.f32.mxu0 0.0
    %1100 = vmatmul.mubr.f32.gmra.mrb[0].mxu0 %v1028
    %v1101 = vpop.f32.mrb[0].mxu0
    %v1102 = vadd.f32 0.0, %v1101
    %v1103 = vpop.f32.mrb[0].mxu0
    %1104 = vdwg.mxu0
    %1107 = vrot.lane.b32.xlu0 %v923, 8
    %v1108 = vpop.permute.xlu0 %1107
    %1109 = vrot.lane.b32.xlu0 %v928, 8
    %v1110 = vpop.permute.xlu0 %1109
    %1115 = vrot.lane.b32.xlu0 %v1010, 16
    %v1116 = vpop.permute.xlu0 %1115
    %1117 = vrot.lane.b32.xlu0 %v1015, 16
    %v1118 = vpop.permute.xlu0 %1117
    %1123 = vrot.lane.b32.xlu0 %v1097, 24
    %v1124 = vpop.permute.xlu0 %1123
    %1125 = vrot.lane.b32.xlu0 %v1102, 24
    %v1126 = vpop.permute.xlu0 %1125
    %v1129 = vsel %vm296, %v836, %v1108
    %v1130 = vsel %vm296, %v841, %v1110
    %v1131 = vsel %vm100, %v1129, %v1116
    %v1132 = vsel %vm100, %v1130, %v1118
    %vm1133 = vcmask 195584
    %v1134 = vsel %vm1133, %v1131, %v1124
    %v1135 = vsel %vm1133, %v1132, %v1126
    %1140 = vrot.lane.b32.xlu0 %v53, 64
    %v1141 = vpop.permute.xlu0 %1140
    %1142 = vrot.lane.b32.xlu0 %v55, 64
    %v1143 = vpop.permute.xlu0 %1142
    %1144 = vrot.lane.b32.xlu0 %v57, 64
    %v1145 = vpop.permute.xlu0 %1144
    %1146 = vrot.lane.b32.xlu0 %v59, 64
    %v1147 = vpop.permute.xlu0 %1146
    %v1153 = vsel %vm182, %v1134, 0
    %v1156 = vsel %vm182, %v1135, 0
    %1158 = vmatprep.subr.mxu0 0.0
    %1159 = vmatpush1.msra.mxu0 %v1141
    %1160 = vmatprep.subr.mxu0 0.0
    %1161 = vmatpush1.msra.mxu0 %v1143
    %1162 = vmatprep.subr.mxu0 0.0
    %1163 = vmatpush1.msra.mxu0 %v1145
    %1164 = vmatprep.subr.mxu0 0.0
    %1165 = vmatpush1.msra.mxu0 %v1147
    %1166 = vmatprep.subr.mxu0 0.0
    %1167 = vmatpush1.msra.mxu0 0.0
    %1168 = vmatprep.subr.mxu0 0.0
    %1169 = vmatpush1.msra.mxu0 0.0
    %1170 = vmatprep.subr.mxu0 0.0
    %1171 = vmatpush1.msra.mxu0 0.0
    %1172 = vmatprep.subr.mxu0 0.0
    %1173 = vmatpush1.msra.mxu0 0.0
    %1174 = vmatprep.subr.mxu0 0.0
    %1175 = vmatpush1.msra.mxu0 0.0
    %1176 = vmatprep.subr.mxu0 0.0
    %1177 = vmatpush1.msra.mxu0 0.0
    %1178 = vmatprep.subr.mxu0 0.0
    %1179 = vmatpush1.msra.mxu0 0.0
    %1180 = vmatprep.subr.mxu0 0.0
    %1181 = vmatpush1.msra.mxu0 0.0
    %1182 = vmatprep.subr.mxu0 0.0
    %1183 = vmatpush1.msra.mxu0 0.0
    %1184 = vmatprep.subr.mxu0 0.0
    %1185 = vmatpush1.msra.mxu0 0.0
    %1186 = vmatprep.subr.mxu0 0.0
    %1187 = vmatpush1.msra.mxu0 0.0
    %1188 = vmatprep.subr.mxu0 0.0
    %1189 = vmatpush1.msra.mxu0 0.0
    %1190 = vmatprep.subr.mxu0 0.0
    %1191 = vmatpush1.msra.mxu0 0.0
    %1192 = vmatprep.subr.mxu0 0.0
    %1193 = vmatpush1.msra.mxu0 0.0
    %1194 = vmatprep.subr.mxu0 0.0
    %1195 = vmatpush1.msra.mxu0 0.0
    %1196 = vmatprep.subr.mxu0 0.0
    %1197 = vmatpush1.msra.mxu0 0.0
    %1198 = vmatprep.subr.mxu0 0.0
    %1199 = vmatpush1.msra.mxu0 0.0
    %1200 = vmatprep.subr.mxu0 0.0
    %1201 = vmatpush1.msra.mxu0 0.0
    %1202 = vmatprep.subr.mxu0 0.0
    %1203 = vmatpush1.msra.mxu0 0.0
    %1204 = vmatprep.subr.mxu0 0.0
    %1205 = vmatpush1.msra.mxu0 0.0
    %1206 = vmatprep.subr.mxu0 0.0
    %1207 = vmatpush1.msra.mxu0 0.0
    %1208 = vmatprep.subr.mxu0 0.0
    %1209 = vmatpush1.msra.mxu0 0.0
    %1210 = vmatprep.subr.mxu0 0.0
    %1211 = vmatpush1.msra.mxu0 0.0
    %1212 = vmatprep.subr.mxu0 0.0
    %1213 = vmatpush1.msra.mxu0 0.0
    %1214 = vmatprep.subr.mxu0 0.0
    %1215 = vmatpush1.msra.mxu0 0.0
    %1216 = vmatprep.subr.mxu0 0.0
    %1217 = vmatpush1.msra.mxu0 0.0
    %1218 = vmatprep.subr.mxu0 0.0
    %1219 = vmatpush1.msra.mxu0 0.0
    %1220 = vmatprep.subr.mxu0 0.0
    %1221 = vmatpush1.msra.mxu0 0.0
    %1222 = vmatprep.mubr.f32.mxu0 0.0
    %1223 = vmatmul.mubr.f32.gmra.mrb[0].mxu0 %v1153
    %v1224 = vpop.f32.mrb[0].mxu0
    %v1225 = vadd.f32 0.0, %v1224
    %v1226 = vpop.f32.mrb[0].mxu0
    %1227 = vmatprep.mubr.f32.mxu0 0.0
    %1228 = vmatmul.mubr.f32.gmra.mrb[0].mxu0 %v1156
    %v1229 = vpop.f32.mrb[0].mxu0
    %v1230 = vadd.f32 0.0, %v1229
    %v1231 = vpop.f32.mrb[0].mxu0
    %1232 = vdwg.mxu0
    %1235 = vrot.lane.b32.xlu0 %v1225, 96
    %v1236 = vpop.permute.xlu0 %1235
    %1237 = vrot.lane.b32.xlu0 %v1230, 96
    %v1238 = vpop.permute.xlu0 %1237
    %v1241 = vsel %vm268, %v1225, %v1236
    %v1242 = vsel %vm269, %v1230, %v1238
    %1245 = vrot.lane.b32.xlu0 %v44, 96
    %v1246 = vpop.permute.xlu0 %1245
    %1247 = vrot.lane.b32.xlu0 %v45, 96
    %v1248 = vpop.permute.xlu0 %1247
    %v1251 = vadd.f32 %v1241, %v1246
    %v1252 = vadd.f32 %v1242, %v1248
    %v1253 = vadd.f32 %v174, %v1251
    %v1254 = vadd.f32 %v179, %v1252
    %v1255 = vsel %vm182, %v1253, 0.0
    %1256 = vadd.xlane.f32.xlu0 %v1255
    %v1257 = vpop.xlane.xlu0 %1256
    %v1258 = vsel %vm182, %v1254, 0.0
    %1259 = vadd.xlane.f32.xlu0 %v1258
    %v1260 = vpop.xlane.xlu0 %1259
    %v1261 = vrcp.pop 32.0
    %v1262 = vmul.f32 %v1257, %v1261
    %v1263 = vmul.f32 %v1260, %v1261
    %v1264 = vsub.f32 %v1253, %v1262
    %v1265 = vsub.f32 %v1254, %v1263
    %v1266 = vmul.f32 %v1264, %v1264
    %v1267 = vmul.f32 %v1265, %v1265
    %v1268 = vsel %vm182, %v1266, 0.0
    %1269 = vadd.xlane.f32.xlu0 %v1268
    %v1270 = vpop.xlane.xlu0 %1269
    %v1271 = vsel %vm182, %v1267, 0.0
    %1272 = vadd.xlane.f32.xlu0 %v1271
    %v1273 = vpop.xlane.xlu0 %1272
    %v1274 = vmul.f32 %v1270, %v1261
    %v1275 = vmul.f32 %v1273, %v1261
    %v1276 = vadd.f32 %v1274, 1e-05
    %v1277 = vadd.f32 %v1275, 1e-05
    %v1278 = vrsqrt.pop %v1276
    %v1279 = vrsqrt.pop %v1277
    %v1280 = vmul.f32 %v1264, %v1278
    %v1281 = vmul.f32 %v1265, %v1279
    %1282 = vrot.lane.b32.xlu0 %v44, 32
    %v1283 = vpop.permute.xlu0 %1282
    %1284 = vrot.lane.b32.xlu0 %v45, 32
    %v1285 = vpop.permute.xlu0 %1284
    %v1288 = vmul.f32 %v1280, %v1283
    %v1289 = vmul.f32 %v1281, %v1285
    %v1290 = vadd.f32 %v1288, %v46
    %v1291 = vadd.f32 %v1289, %v47
    %v1293 = vsel %vm182, %v1290, 0
    %v1296 = vsel %vm182, %v1291, 0
    %1298 = vmatprep.subr.mxu0 %v61
    %1299 = vmatpush1.msra.mxu0 %v60
    %1300 = vmatprep.subr.mxu0 %v63
    %1301 = vmatpush1.msra.mxu0 %v62
    %1302 = vmatprep.subr.mxu0 %v65
    %1303 = vmatpush1.msra.mxu0 %v64
    %1304 = vmatprep.subr.mxu0 %v67
    %1305 = vmatpush1.msra.mxu0 %v66
    %1306 = vmatprep.subr.mxu0 0.0
    %1307 = vmatpush1.msra.mxu0 0.0
    %1308 = vmatprep.subr.mxu0 0.0
    %1309 = vmatpush1.msra.mxu0 0.0
    %1310 = vmatprep.subr.mxu0 0.0
    %1311 = vmatpush1.msra.mxu0 0.0
    %1312 = vmatprep.subr.mxu0 0.0
    %1313 = vmatpush1.msra.mxu0 0.0
    %1314 = vmatprep.subr.mxu0 0.0
    %1315 = vmatpush1.msra.mxu0 0.0
    %1316 = vmatprep.subr.mxu0 0.0
    %1317 = vmatpush1.msra.mxu0 0.0
    %1318 = vmatprep.subr.mxu0 0.0
    %1319 = vmatpush1.msra.mxu0 0.0
    %1320 = vmatprep.subr.mxu0 0.0
    %1321 = vmatpush1.msra.mxu0 0.0
    %1322 = vmatprep.subr.mxu0 0.0
    %1323 = vmatpush1.msra.mxu0 0.0
    %1324 = vmatprep.subr.mxu0 0.0
    %1325 = vmatpush1.msra.mxu0 0.0
    %1326 = vmatprep.subr.mxu0 0.0
    %1327 = vmatpush1.msra.mxu0 0.0
    %1328 = vmatprep.subr.mxu0 0.0
    %1329 = vmatpush1.msra.mxu0 0.0
    %1330 = vmatprep.subr.mxu0 0.0
    %1331 = vmatpush1.msra.mxu0 0.0
    %1332 = vmatprep.subr.mxu0 0.0
    %1333 = vmatpush1.msra.mxu0 0.0
    %1334 = vmatprep.subr.mxu0 0.0
    %1335 = vmatpush1.msra.mxu0 0.0
    %1336 = vmatprep.subr.mxu0 0.0
    %1337 = vmatpush1.msra.mxu0 0.0
    %1338 = vmatprep.subr.mxu0 0.0
    %1339 = vmatpush1.msra.mxu0 0.0
    %1340 = vmatprep.subr.mxu0 0.0
    %1341 = vmatpush1.msra.mxu0 0.0
    %1342 = vmatprep.subr.mxu0 0.0
    %1343 = vmatpush1.msra.mxu0 0.0
    %1344 = vmatprep.subr.mxu0 0.0
    %1345 = vmatpush1.msra.mxu0 0.0
    %1346 = vmatprep.subr.mxu0 0.0
    %1347 = vmatpush1.msra.mxu0 0.0
    %1348 = vmatprep.subr.mxu0 0.0
    %1349 = vmatpush1.msra.mxu0 0.0
    %1350 = vmatprep.subr.mxu0 0.0
    %1351 = vmatpush1.msra.mxu0 0.0
    %1352 = vmatprep.subr.mxu0 0.0
    %1353 = vmatpush1.msra.mxu0 0.0
    %1354 = vmatprep.subr.mxu0 0.0
    %1355 = vmatpush1.msra.mxu0 0.0
    %1356 = vmatprep.subr.mxu0 0.0
    %1357 = vmatpush1.msra.mxu0 0.0
    %1358 = vmatprep.subr.mxu0 0.0
    %1359 = vmatpush1.msra.mxu0 0.0
    %1360 = vmatprep.subr.mxu0 0.0
    %1361 = vmatpush1.msra.mxu0 0.0
    %1362 = vmatprep.mubr.f32.mxu0 0.0
    %1363 = vmatmul.mubr.f32.gmra.mrb[0].mxu0 %v1293
    %v1364 = vpop.f32.mrb[0].mxu0
    %v1365 = vadd.f32 0.0, %v1364
    %v1366 = vpop.f32.mrb[0].mxu0
    %v1367 = vadd.f32 0.0, %v1366
    %1368 = vmatprep.mubr.f32.mxu0 0.0
    %1369 = vmatmul.mubr.f32.gmra.mrb[0].mxu0 %v1296
    %v1370 = vpop.f32.mrb[0].mxu0
    %v1371 = vadd.f32 0.0, %v1370
    %v1372 = vpop.f32.mrb[0].mxu0
    %v1373 = vadd.f32 0.0, %v1372
    %1374 = vdwg.mxu0
    %v1375 = vsel %vm268, %v1365, %v1367
    %v1376 = vsel %vm269, %v1371, %v1373
    %v1377 = vadd.f32 %v1375, %v50
    %v1378 = vadd.f32 %v1376, %v51
    %v1379 = vmax.f32 %v1377, 0.0
    %v1380 = vmax.f32 %v1378, 0.0
    %1381 = vmatprep.subr.mxu0 0.0
    %1382 = vmatpush1.msra.mxu0 %v68
    %1383 = vmatprep.subr.mxu0 0.0
    %1384 = vmatpush1.msra.mxu0 %v69
    %1385 = vmatprep.subr.mxu0 0.0
    %1386 = vmatpush1.msra.mxu0 %v70
    %1387 = vmatprep.subr.mxu0 0.0
    %1388 = vmatpush1.msra.mxu0 %v71
    %1389 = vmatprep.subr.mxu0 0.0
    %1390 = vmatpush1.msra.mxu0 %v72
    %1391 = vmatprep.subr.mxu0 0.0
    %1392 = vmatpush1.msra.mxu0 %v73
    %1393 = vmatprep.subr.mxu0 0.0
    %1394 = vmatpush1.msra.mxu0 %v74
    %1395 = vmatprep.subr.mxu0 0.0
    %1396 = vmatpush1.msra.mxu0 %v75
    %1397 = vmatprep.subr.mxu0 0.0
    %1398 = vmatpush1.msra.mxu0 %v76
    %1399 = vmatprep.subr.mxu0 0.0
    %1400 = vmatpush1.msra.mxu0 %v77
    %1401 = vmatprep.subr.mxu0 0.0
    %1402 = vmatpush1.msra.mxu0 %v78
    %1403 = vmatprep.subr.mxu0 0.0
    %1404 = vmatpush1.msra.mxu0 %v79
    %1405 = vmatprep.subr.mxu0 0.0
    %1406 = vmatpush1.msra.mxu0 %v80
    %1407 = vmatprep.subr.mxu0 0.0
    %1408 = vmatpush1.msra.mxu0 %v81
    %1409 = vmatprep.subr.mxu0 0.0
    %1410 = vmatpush1.msra.mxu0 %v82
    %1411 = vmatprep.subr.mxu0 0.0
    %1412 = vmatpush1.msra.mxu0 %v83
    %1413 = vmatprep.subr.mxu0 0.0
    %1414 = vmatpush1.msra.mxu0 0.0
    %1415 = vmatprep.subr.mxu0 0.0
    %1416 = vmatpush1.msra.mxu0 0.0
    %1417 = vmatprep.subr.mxu0 0.0
    %1418 = vmatpush1.msra.mxu0 0.0
    %1419 = vmatprep.subr.mxu0 0.0
    %1420 = vmatpush1.msra.mxu0 0.0
    %1421 = vmatprep.subr.mxu0 0.0
    %1422 = vmatpush1.msra.mxu0 0.0
    %1423 = vmatprep.subr.mxu0 0.0
    %1424 = vmatpush1.msra.mxu0 0.0
    %1425 = vmatprep.subr.mxu0 0.0
    %1426 = vmatpush1.msra.mxu0 0.0
    %1427 = vmatprep.subr.mxu0 0.0
    %1428 = vmatpush1.msra.mxu0 0.0
    %1429 = vmatprep.subr.mxu0 0.0
    %1430 = vmatpush1.msra.mxu0 0.0
    %1431 = vmatprep.subr.mxu0 0.0
    %1432 = vmatpush1.msra.mxu0 0.0
    %1433 = vmatprep.subr.mxu0 0.0
    %1434 = vmatpush1.msra.mxu0 0.0
    %1435 = vmatprep.subr.mxu0 0.0
    %1436 = vmatpush1.msra.mxu0 0.0
    %1437 = vmatprep.subr.mxu0 0.0
    %1438 = vmatpush1.msra.mxu0 0.0
    %1439 = vmatprep.subr.mxu0 0.0
    %1440 = vmatpush1.msra.mxu0 0.0
    %1441 = vmatprep.subr.mxu0 0.0
    %1442 = vmatpush1.msra.mxu0 0.0
    %1443 = vmatprep.subr.mxu0 0.0
    %1444 = vmatpush1.msra.mxu0 0.0
    %1445 = vmatprep.mubr.f32.mxu0 0.0
    %1446 = vmatmul.mubr.f32.gmra.mrb[0].mxu0 %v1379
    %v1447 = vpop.f32.mrb[0].mxu0
    %v1448 = vadd.f32 0.0, %v1447
    %v1449 = vpop.f32.mrb[0].mxu0
    %1450 = vmatprep.mubr.f32.mxu0 0.0
    %1451 = vmatmul.mubr.f32.gmra.mrb[0].mxu0 %v1380
    %v1452 = vpop.f32.mrb[0].mxu0
    %v1453 = vadd.f32 0.0, %v1452
    %v1454 = vpop.f32.mrb[0].mxu0
    %1455 = vdwg.mxu0
    %1458 = vrot.lane.b32.xlu0 %v1448, 96
    %v1459 = vpop.permute.xlu0 %1458
    %1460 = vrot.lane.b32.xlu0 %v1453, 96
    %v1461 = vpop.permute.xlu0 %1460
    %v1464 = vsel %vm268, %v1448, %v1459
    %v1465 = vsel %vm269, %v1453, %v1461
    %1466 = vrot.lane.b32.xlu0 %v44, 64
    %v1467 = vpop.permute.xlu0 %1466
    %1468 = vrot.lane.b32.xlu0 %v45, 64
    %v1469 = vpop.permute.xlu0 %1468
    %v1472 = vadd.f32 %v1464, %v1467
    %v1473 = vadd.f32 %v1465, %v1469
    %v1474 = vadd.f32 %v1290, %v1472
    %v1475 = vadd.f32 %v1291, %v1473
    %v1476 = vsel %vm182, %v1474, 0.0
    %1477 = vadd.xlane.f32.xlu0 %v1476
    %v1478 = vpop.xlane.xlu0 %1477
    %v1479 = vsel %vm182, %v1475, 0.0
    %1480 = vadd.xlane.f32.xlu0 %v1479
    %v1481 = vpop.xlane.xlu0 %1480
    %v1482 = vmul.f32 %v1478, %v1261
    %v1483 = vmul.f32 %v1481, %v1261
    %v1484 = vsub.f32 %v1474, %v1482
    %v1485 = vsub.f32 %v1475, %v1483
    %v1486 = vmul.f32 %v1484, %v1484
    %v1487 = vmul.f32 %v1485, %v1485
    %v1488 = vsel %vm182, %v1486, 0.0
    %1489 = vadd.xlane.f32.xlu0 %v1488
    %v1490 = vpop.xlane.xlu0 %1489
    %v1491 = vsel %vm182, %v1487, 0.0
    %1492 = vadd.xlane.f32.xlu0 %v1491
    %v1493 = vpop.xlane.xlu0 %1492
    %v1494 = vmul.f32 %v1490, %v1261
    %v1495 = vmul.f32 %v1493, %v1261
    %v1496 = vadd.f32 %v1494, 1e-05
    %v1497 = vadd.f32 %v1495, 1e-05
    %v1498 = vrsqrt.pop %v1496
    %v1499 = vrsqrt.pop %v1497
    %v1500 = vmul.f32 %v1484, %v1498
    %v1501 = vmul.f32 %v1485, %v1499
    %1504 = vrot.lane.b32.xlu0 %v46, 96
    %v1505 = vpop.permute.xlu0 %1504
    %1506 = vrot.lane.b32.xlu0 %v47, 96
    %v1507 = vpop.permute.xlu0 %1506
    %v1510 = vmul.f32 %v1500, %v1505
    %v1511 = vmul.f32 %v1501, %v1507
    %1512 = vrot.lane.b32.xlu0 %v46, 64
    %v1513 = vpop.permute.xlu0 %1512
    %1514 = vrot.lane.b32.xlu0 %v47, 64
    %v1515 = vpop.permute.xlu0 %1514
    %v1518 = vadd.f32 %v1510, %v1513
    %v1519 = vadd.f32 %v1511, %v1515
    %v1520 = vadd.f32 %v1518, %v174
    %v1521 = vadd.f32 %v1519, %v179
    %v1522 = vadd.f32 %v44, %v1520
    %v1523 = vadd.f32 %v45, %v1521
    %1524 = vmatprep.subr.mxu0 0.0
    %1525 = vmatpush1.msra.mxu0 %v1520
    %1526 = vmatprep.subr.mxu0 0.0
    %1527 = vmatpush1.msra.mxu0 %v1521
    %1528 = vmatprep.subr.mxu0 0.0
    %1529 = vmatpush1.msra.mxu0 0.0
    %1530 = vmatprep.subr.mxu0 0.0
    %1531 = vmatpush1.msra.mxu0 0.0
    %1532 = vmatprep.subr.mxu0 0.0
    %1533 = vmatpush1.msra.mxu0 0.0
    %1534 = vmatprep.subr.mxu0 0.0
    %1535 = vmatpush1.msra.mxu0 0.0
    %1536 = vmatprep.subr.mxu0 0.0
    %1537 = vmatpush1.msra.mxu0 0.0
    %1538 = vmatprep.subr.mxu0 0.0
    %1539 = vmatpush1.msra.mxu0 0.0
    %1540 = vmatprep.subr.mxu0 0.0
    %1541 = vmatpush1.msra.mxu0 0.0
    %1542 = vmatprep.subr.mxu0 0.0
    %1543 = vmatpush1.msra.mxu0 0.0
    %1544 = vmatprep.subr.mxu0 0.0
    %1545 = vmatpush1.msra.mxu0 0.0
    %1546 = vmatprep.subr.mxu0 0.0
    %1547 = vmatpush1.msra.mxu0 0.0
    %1548 = vmatprep.subr.mxu0 0.0
    %1549 = vmatpush1.msra.mxu0 0.0
    %1550 = vmatprep.subr.mxu0 0.0
    %1551 = vmatpush1.msra.mxu0 0.0
    %1552 = vmatprep.subr.mxu0 0.0
    %1553 = vmatpush1.msra.mxu0 0.0
    %1554 = vmatprep.subr.mxu0 0.0
    %1555 = vmatpush1.msra.mxu0 0.0
    %1556 = vmatprep.subr.mxu0 0.0
    %1557 = vmatpush1.msra.mxu0 0.0
    %1558 = vmatprep.subr.mxu0 0.0
    %1559 = vmatpush1.msra.mxu0 0.0
    %1560 = vmatprep.subr.mxu0 0.0
    %1561 = vmatpush1.msra.mxu0 0.0
    %1562 = vmatprep.subr.mxu0 0.0
    %1563 = vmatpush1.msra.mxu0 0.0
    %1564 = vmatprep.subr.mxu0 0.0
    %1565 = vmatpush1.msra.mxu0 0.0
    %1566 = vmatprep.subr.mxu0 0.0
    %1567 = vmatpush1.msra.mxu0 0.0
    %1568 = vmatprep.subr.mxu0 0.0
    %1569 = vmatpush1.msra.mxu0 0.0
    %1570 = vmatprep.subr.mxu0 0.0
    %1571 = vmatpush1.msra.mxu0 0.0
    %1572 = vmatprep.subr.mxu0 0.0
    %1573 = vmatpush1.msra.mxu0 0.0
    %1574 = vmatprep.subr.mxu0 0.0
    %1575 = vmatpush1.msra.mxu0 0.0
    %1576 = vmatprep.subr.mxu0 0.0
    %1577 = vmatpush1.msra.mxu0 0.0
    %1578 = vmatprep.subr.mxu0 0.0
    %1579 = vmatpush1.msra.mxu0 0.0
    %1580 = vmatprep.subr.mxu0 0.0
    %1581 = vmatpush1.msra.mxu0 0.0
    %1582 = vmatprep.subr.mxu0 0.0
    %1583 = vmatpush1.msra.mxu0 0.0
    %1584 = vmatprep.subr.mxu0 0.0
    %1585 = vmatpush1.msra.mxu0 0.0
    %1586 = vmatprep.subr.mxu0 0.0
    %1587 = vmatpush1.msra.mxu0 0.0
    %1588 = vmatprep.mubr.f32.mxu0 0.0
    %1589 = vmatmul.mubr.f32.gmra.mrb[0].mxu0 %v102
    %v1590 = vpop.f32.mrb[0].mxu0
    %v1591 = vadd.f32 0.0, %v1590
    %v1592 = vpop.f32.mrb[0].mxu0
    %1593 = vmatprep.mubr.f32.mxu0 0.0
    %1594 = vmatmul.mubr.f32.gmra.mrb[0].mxu0 %v105
    %v1595 = vpop.f32.mrb[0].mxu0
    %v1596 = vadd.f32 0.0, %v1595
    %v1597 = vpop.f32.mrb[0].mxu0
    %1598 = vdwg.mxu0
    %v1600 = vsel %vm182, %v1591, 0
    %v1603 = vsel %vm182, %v1596, 0
    %1605 = vmatprep.subr.mxu0 %v53
    %1606 = vmatpush1.msra.mxu0 %v52
    %1607 = vmatprep.subr.mxu0 %v55
    %1608 = vmatpush1.msra.mxu0 %v54
    %1609 = vmatprep.subr.mxu0 %v57
    %1610 = vmatpush1.msra.mxu0 %v56
    %1611 = vmatprep.subr.mxu0 %v59
    %1612 = vmatpush1.msra.mxu0 %v58
    %1613 = vmatprep.subr.mxu0 0.0
    %1614 = vmatpush1.msra.mxu0 0.0
    %1615 = vmatprep.subr.mxu0 0.0
    %1616 = vmatpush1.msra.mxu0 0.0
    %1617 = vmatprep.subr.mxu0 0.0
    %1618 = vmatpush1.msra.mxu0 0.0
    %1619 = vmatprep.subr.mxu0 0.0
    %1620 = vmatpush1.msra.mxu0 0.0
    %1621 = vmatprep.subr.mxu0 0.0
    %1622 = vmatpush1.msra.mxu0 0.0
    %1623 = vmatprep.subr.mxu0 0.0
    %1624 = vmatpush1.msra.mxu0 0.0
    %1625 = vmatprep.subr.mxu0 0.0
    %1626 = vmatpush1.msra.mxu0 0.0
    %1627 = vmatprep.subr.mxu0 0.0
    %1628 = vmatpush1.msra.mxu0 0.0
    %1629 = vmatprep.subr.mxu0 0.0
    %1630 = vmatpush1.msra.mxu0 0.0
    %1631 = vmatprep.subr.mxu0 0.0
    %1632 = vmatpush1.msra.mxu0 0.0
    %1633 = vmatprep.subr.mxu0 0.0
    %1634 = vmatpush1.msra.mxu0 0.0
    %1635 = vmatprep.subr.mxu0 0.0
    %1636 = vmatpush1.msra.mxu0 0.0
    %1637 = vmatprep.subr.mxu0 0.0
    %1638 = vmatpush1.msra.mxu0 0.0
    %1639 = vmatprep.subr.mxu0 0.0
    %1640 = vmatpush1.msra.mxu0 0.0
    %1641 = vmatprep.subr.mxu0 0.0
    %1642 = vmatpush1.msra.mxu0 0.0
    %1643 = vmatprep.subr.mxu0 0.0
    %1644 = vmatpush1.msra.mxu0 0.0
    %1645 = vmatprep.subr.mxu0 0.0
    %1646 = vmatpush1.msra.mxu0 0.0
    %1647 = vmatprep.subr.mxu0 0.0
    %1648 = vmatpush1.msra.mxu0 0.0
    %1649 = vmatprep.subr.mxu0 0.0
    %1650 = vmatpush1.msra.mxu0 0.0
    %1651 = vmatprep.subr.mxu0 0.0
    %1652 = vmatpush1.msra.mxu0 0.0
    %1653 = vmatprep.subr.mxu0 0.0
    %1654 = vmatpush1.msra.mxu0 0.0
    %1655 = vmatprep.subr.mxu0 0.0
    %1656 = vmatpush1.msra.mxu0 0.0
    %1657 = vmatprep.subr.mxu0 0.0
    %1658 = vmatpush1.msra.mxu0 0.0
    %1659 = vmatprep.subr.mxu0 0.0
    %1660 = vmatpush1.msra.mxu0 0.0
    %1661 = vmatprep.subr.mxu0 0.0
    %1662 = vmatpush1.msra.mxu0 0.0
    %1663 = vmatprep.subr.mxu0 0.0
    %1664 = vmatpush1.msra.mxu0 0.0
    %1665 = vmatprep.subr.mxu0 0.0
    %1666 = vmatpush1.msra.mxu0 0.0
    %1667 = vmatprep.subr.mxu0 0.0
    %1668 = vmatpush1.msra.mxu0 0.0
    %1669 = vmatprep.mubr.f32.mxu0 0.0
    %1670 = vmatmul.mubr.f32.gmra.mrb[0].mxu0 %v1600
    %v1671 = vpop.f32.mrb[0].mxu0
    %v1672 = vadd.f32 0.0, %v1671
    %v1673 = vpop.f32.mrb[0].mxu0
    %v1674 = vadd.f32 0.0, %v1673
    %1675 = vmatprep.mubr.f32.mxu0 0.0
    %1676 = vmatmul.mubr.f32.gmra.mrb[0].mxu0 %v1603
    %v1677 = vpop.f32.mrb[0].mxu0
    %v1678 = vadd.f32 0.0, %v1677
    %v1679 = vpop.f32.mrb[0].mxu0
    %v1680 = vadd.f32 0.0, %v1679
    %1681 = vdwg.mxu0
    %1686 = vrot.lane.b32.xlu0 %v1672, 32
    %v1687 = vpop.permute.xlu0 %1686
    %1688 = vrot.lane.b32.xlu0 %v1674, 32
    %v1689 = vpop.permute.xlu0 %1688
    %1690 = vrot.lane.b32.xlu0 %v1678, 32
    %v1691 = vpop.permute.xlu0 %1690
    %1692 = vrot.lane.b32.xlu0 %v1680, 32
    %v1693 = vpop.permute.xlu0 %1692
    %v1694 = vsel %vm182, %v1687, %v1689
    %v1695 = vsel %vm182, %v1691, %v1693
    %v1698 = vsel %vm268, %v1672, %v1694
    %v1699 = vsel %vm269, %v1678, %v1695
    %v1700 = vadd.f32 %v1698, %v48
    %v1701 = vadd.f32 %v1699, %v49
    %1704 = vrot.lane.b32.xlu0 %v1700, 96
    %v1705 = vpop.permute.xlu0 %1704
    %1706 = vrot.lane.b32.xlu0 %v1701, 96
    %v1707 = vpop.permute.xlu0 %1706
    %v1708 = vsel %vm296, %v1700, 0
    %v1710 = vsel %vm296, %v1701, 0
    %v1712 = vsel %vm296, %v1705, 0
    %v1714 = vsel %vm296, %v1707, 0
    %1716 = vmatprep.subr.mxu0 0.0
    %1717 = vmatpush1.xpose.msra.mxu0 %v1712
    %1718 = vmatprep.subr.mxu0 0.0
    %1719 = vmatpush1.xpose.msra.mxu0 %v1714
    %1720 = vmatprep.subr.mxu0 0.0
    %1721 = vmatpush1.xpose.msra.mxu0 0.0
    %1722 = vmatprep.subr.mxu0 0.0
    %1723 = vmatpush1.xpose.msra.mxu0 0.0
    %1724 = vmatprep.subr.mxu0 0.0
    %1725 = vmatpush1.xpose.msra.mxu0 0.0
    %1726 = vmatprep.subr.mxu0 0.0
    %1727 = vmatpush1.xpose.msra.mxu0 0.0
    %1728 = vmatprep.subr.mxu0 0.0
    %1729 = vmatpush1.xpose.msra.mxu0 0.0
    %1730 = vmatprep.subr.mxu0 0.0
    %1731 = vmatpush1.xpose.msra.mxu0 0.0
    %1732 = vmatprep.subr.mxu0 0.0
    %1733 = vmatpush1.xpose.msra.mxu0 0.0
    %1734 = vmatprep.subr.mxu0 0.0
    %1735 = vmatpush1.xpose.msra.mxu0 0.0
    %1736 = vmatprep.subr.mxu0 0.0
    %1737 = vmatpush1.xpose.msra.mxu0 0.0
    %1738 = vmatprep.subr.mxu0 0.0
    %1739 = vmatpush1.xpose.msra.mxu0 0.0
    %1740 = vmatprep.subr.mxu0 0.0
    %1741 = vmatpush1.xpose.msra.mxu0 0.0
    %1742 = vmatprep.subr.mxu0 0.0
    %1743 = vmatpush1.xpose.msra.mxu0 0.0
    %1744 = vmatprep.subr.mxu0 0.0
    %1745 = vmatpush1.xpose.msra.mxu0 0.0
    %1746 = vmatprep.subr.mxu0 0.0
    %1747 = vmatpush1.xpose.msra.mxu0 0.0
    %1748 = vmatprep.subr.mxu0 0.0
    %1749 = vmatpush1.xpose.msra.mxu0 0.0
    %1750 = vmatprep.subr.mxu0 0.0
    %1751 = vmatpush1.xpose.msra.mxu0 0.0
    %1752 = vmatprep.subr.mxu0 0.0
    %1753 = vmatpush1.xpose.msra.mxu0 0.0
    %1754 = vmatprep.subr.mxu0 0.0
    %1755 = vmatpush1.xpose.msra.mxu0 0.0
    %1756 = vmatprep.subr.mxu0 0.0
    %1757 = vmatpush1.xpose.msra.mxu0 0.0
    %1758 = vmatprep.subr.mxu0 0.0
    %1759 = vmatpush1.xpose.msra.mxu0 0.0
    %1760 = vmatprep.subr.mxu0 0.0
    %1761 = vmatpush1.xpose.msra.mxu0 0.0
    %1762 = vmatprep.subr.mxu0 0.0
    %1763 = vmatpush1.xpose.msra.mxu0 0.0
    %1764 = vmatprep.subr.mxu0 0.0
    %1765 = vmatpush1.xpose.msra.mxu0 0.0
    %1766 = vmatprep.subr.mxu0 0.0
    %1767 = vmatpush1.xpose.msra.mxu0 0.0
    %1768 = vmatprep.subr.mxu0 0.0
    %1769 = vmatpush1.xpose.msra.mxu0 0.0
    %1770 = vmatprep.subr.mxu0 0.0
    %1771 = vmatpush1.xpose.msra.mxu0 0.0
    %1772 = vmatprep.subr.mxu0 0.0
    %1773 = vmatpush1.xpose.msra.mxu0 0.0
    %1774 = vmatprep.subr.mxu0 0.0
    %1775 = vmatpush1.xpose.msra.mxu0 0.0
    %1776 = vmatprep.subr.mxu0 0.0
    %1777 = vmatpush1.xpose.msra.mxu0 0.0
    %1778 = vmatprep.subr.mxu0 0.0
    %1779 = vmatpush1.xpose.msra.mxu0 0.0
    %1780 = vmatprep.mubr.f32.mxu0 0.0
    %1781 = vmatmul.mubr.f32.gmra.mrb[0].mxu0 %v1708
    %v1782 = vpop.f32.mrb[0].mxu0
    %v1783 = vadd.f32 0.0, %v1782
    %v1784 = vpop.f32.mrb[0].mxu0
    %1785 = vmatprep.mubr.f32.mxu0 0.0
    %1786 = vmatmul.mubr.f32.gmra.mrb[0].mxu0 %v1710
    %v1787 = vpop.f32.mrb[0].mxu0
    %v1788 = vadd.f32 0.0, %v1787
    %v1789 = vpop.f32.mrb[0].mxu0
    %1790 = vdwg.mxu0
    %1791 = vrot.lane.b32.xlu0 %v1700, 120
    %v1792 = vpop.permute.xlu0 %1791
    %1793 = vrot.lane.b32.xlu0 %v1701, 120
    %v1794 = vpop.permute.xlu0 %1793
    %1795 = vrot.lane.b32.xlu0 %v1700, 88
    %v1796 = vpop.permute.xlu0 %1795
    %1797 = vrot.lane.b32.xlu0 %v1701, 88
    %v1798 = vpop.permute.xlu0 %1797
    %v1799 = vsel %vm296, %v1792, 0
    %v1801 = vsel %vm296, %v1794, 0
    %v1803 = vsel %vm296, %v1796, 0
    %v1805 = vsel %vm296, %v1798, 0
    %1807 = vmatprep.subr.mxu0 0.0
    %1808 = vmatpush1.xpose.msra.mxu0 %v1803
    %1809 = vmatprep.subr.mxu0 0.0
    %1810 = vmatpush1.xpose.msra.mxu0 %v1805
    %1811 = vmatprep.subr.mxu0 0.0
    %1812 = vmatpush1.xpose.msra.mxu0 0.0
    %1813 = vmatprep.subr.mxu0 0.0
    %1814 = vmatpush1.xpose.msra.mxu0 0.0
    %1815 = vmatprep.subr.mxu0 0.0
    %1816 = vmatpush1.xpose.msra.mxu0 0.0
    %1817 = vmatprep.subr.mxu0 0.0
    %1818 = vmatpush1.xpose.msra.mxu0 0.0
    %1819 = vmatprep.subr.mxu0 0.0
    %1820 = vmatpush1.xpose.msra.mxu0 0.0
    %1821 = vmatprep.subr.mxu0 0.0
    %1822 = vmatpush1.xpose.msra.mxu0 0.0
    %1823 = vmatprep.subr.mxu0 0.0
    %1824 = vmatpush1.xpose.msra.mxu0 0.0
    %1825 = vmatprep.subr.mxu0 0.0
    %1826 = vmatpush1.xpose.msra.mxu0 0.0
    %1827 = vmatprep.subr.mxu0 0.0
    %1828 = vmatpush1.xpose.msra.mxu0 0.0
    %1829 = vmatprep.subr.mxu0 0.0
    %1830 = vmatpush1.xpose.msra.mxu0 0.0
    %1831 = vmatprep.subr.mxu0 0.0
    %1832 = vmatpush1.xpose.msra.mxu0 0.0
    %1833 = vmatprep.subr.mxu0 0.0
    %1834 = vmatpush1.xpose.msra.mxu0 0.0
    %1835 = vmatprep.subr.mxu0 0.0
    %1836 = vmatpush1.xpose.msra.mxu0 0.0
    %1837 = vmatprep.subr.mxu0 0.0
    %1838 = vmatpush1.xpose.msra.mxu0 0.0
    %1839 = vmatprep.subr.mxu0 0.0
    %1840 = vmatpush1.xpose.msra.mxu0 0.0
    %1841 = vmatprep.subr.mxu0 0.0
    %1842 = vmatpush1.xpose.msra.mxu0 0.0
    %1843 = vmatprep.subr.mxu0 0.0
    %1844 = vmatpush1.xpose.msra.mxu0 0.0
    %1845 = vmatprep.subr.mxu0 0.0
    %1846 = vmatpush1.xpose.msra.mxu0 0.0
    %1847 = vmatprep.subr.mxu0 0.0
    %1848 = vmatpush1.xpose.msra.mxu0 0.0
    %1849 = vmatprep.subr.mxu0 0.0
    %1850 = vmatpush1.xpose.msra.mxu0 0.0
    %1851 = vmatprep.subr.mxu0 0.0
    %1852 = vmatpush1.xpose.msra.mxu0 0.0
    %1853 = vmatprep.subr.mxu0 0.0
    %1854 = vmatpush1.xpose.msra.mxu0 0.0
    %1855 = vmatprep.subr.mxu0 0.0
    %1856 = vmatpush1.xpose.msra.mxu0 0.0
    %1857 = vmatprep.subr.mxu0 0.0
    %1858 = vmatpush1.xpose.msra.mxu0 0.0
    %1859 = vmatprep.subr.mxu0 0.0
    %1860 = vmatpush1.xpose.msra.mxu0 0.0
    %1861 = vmatprep.subr.mxu0 0.0
    %1862 = vmatpush1.xpose.msra.mxu0 0.0
    %1863 = vmatprep.subr.mxu0 0.0
    %1864 = vmatpush1.xpose.msra.mxu0 0.0
    %1865 = vmatprep.subr.mxu0 0.0
    %1866 = vmatpush1.xpose.msra.mxu0 0.0
    %1867 = vmatprep.subr.mxu0 0.0
    %1868 = vmatpush1.xpose.msra.mxu0 0.0
    %1869 = vmatprep.subr.mxu0 0.0
    %1870 = vmatpush1.xpose.msra.mxu0 0.0
    %1871 = vmatprep.mubr.f32.mxu0 0.0
    %1872 = vmatmul.mubr.f32.gmra.mrb[0].mxu0 %v1799
    %v1873 = vpop.f32.mrb[0].mxu0
    %v1874 = vadd.f32 0.0, %v1873
    %v1875 = vpop.f32.mrb[0].mxu0
    %1876 = vmatprep.mubr.f32.mxu0 0.0
    %1877 = vmatmul.mubr.f32.gmra.mrb[0].mxu0 %v1801
    %v1878 = vpop.f32.mrb[0].mxu0
    %v1879 = vadd.f32 0.0, %v1878
    %v1880 = vpop.f32.mrb[0].mxu0
    %1881 = vdwg.mxu0
    %1882 = vrot.lane.b32.xlu0 %v1700, 112
    %v1883 = vpop.permute.xlu0 %1882
    %1884 = vrot.lane.b32.xlu0 %v1701, 112
    %v1885 = vpop.permute.xlu0 %1884
    %1886 = vrot.lane.b32.xlu0 %v1700, 80
    %v1887 = vpop.permute.xlu0 %1886
    %1888 = vrot.lane.b32.xlu0 %v1701, 80
    %v1889 = vpop.permute.xlu0 %1888
    %v1890 = vsel %vm296, %v1883, 0
    %v1892 = vsel %vm296, %v1885, 0
    %v1894 = vsel %vm296, %v1887, 0
    %v1896 = vsel %vm296, %v1889, 0
    %1898 = vmatprep.subr.mxu0 0.0
    %1899 = vmatpush1.xpose.msra.mxu0 %v1894
    %1900 = vmatprep.subr.mxu0 0.0
    %1901 = vmatpush1.xpose.msra.mxu0 %v1896
    %1902 = vmatprep.subr.mxu0 0.0
    %1903 = vmatpush1.xpose.msra.mxu0 0.0
    %1904 = vmatprep.subr.mxu0 0.0
    %1905 = vmatpush1.xpose.msra.mxu0 0.0
    %1906 = vmatprep.subr.mxu0 0.0
    %1907 = vmatpush1.xpose.msra.mxu0 0.0
    %1908 = vmatprep.subr.mxu0 0.0
    %1909 = vmatpush1.xpose.msra.mxu0 0.0
    %1910 = vmatprep.subr.mxu0 0.0
    %1911 = vmatpush1.xpose.msra.mxu0 0.0
    %1912 = vmatprep.subr.mxu0 0.0
    %1913 = vmatpush1.xpose.msra.mxu0 0.0
    %1914 = vmatprep.subr.mxu0 0.0
    %1915 = vmatpush1.xpose.msra.mxu0 0.0
    %1916 = vmatprep.subr.mxu0 0.0
    %1917 = vmatpush1.xpose.msra.mxu0 0.0
    %1918 = vmatprep.subr.mxu0 0.0
    %1919 = vmatpush1.xpose.msra.mxu0 0.0
    %1920 = vmatprep.subr.mxu0 0.0
    %1921 = vmatpush1.xpose.msra.mxu0 0.0
    %1922 = vmatprep.subr.mxu0 0.0
    %1923 = vmatpush1.xpose.msra.mxu0 0.0
    %1924 = vmatprep.subr.mxu0 0.0
    %1925 = vmatpush1.xpose.msra.mxu0 0.0
    %1926 = vmatprep.subr.mxu0 0.0
    %1927 = vmatpush1.xpose.msra.mxu0 0.0
    %1928 = vmatprep.subr.mxu0 0.0
    %1929 = vmatpush1.xpose.msra.mxu0 0.0
    %1930 = vmatprep.subr.mxu0 0.0
    %1931 = vmatpush1.xpose.msra.mxu0 0.0
    %1932 = vmatprep.subr.mxu0 0.0
    %1933 = vmatpush1.xpose.msra.mxu0 0.0
    %1934 = vmatprep.subr.mxu0 0.0
    %1935 = vmatpush1.xpose.msra.mxu0 0.0
    %1936 = vmatprep.subr.mxu0 0.0
    %1937 = vmatpush1.xpose.msra.mxu0 0.0
    %1938 = vmatprep.subr.mxu0 0.0
    %1939 = vmatpush1.xpose.msra.mxu0 0.0
    %1940 = vmatprep.subr.mxu0 0.0
    %1941 = vmatpush1.xpose.msra.mxu0 0.0
    %1942 = vmatprep.subr.mxu0 0.0
    %1943 = vmatpush1.xpose.msra.mxu0 0.0
    %1944 = vmatprep.subr.mxu0 0.0
    %1945 = vmatpush1.xpose.msra.mxu0 0.0
    %1946 = vmatprep.subr.mxu0 0.0
    %1947 = vmatpush1.xpose.msra.mxu0 0.0
    %1948 = vmatprep.subr.mxu0 0.0
    %1949 = vmatpush1.xpose.msra.mxu0 0.0
    %1950 = vmatprep.subr.mxu0 0.0
    %1951 = vmatpush1.xpose.msra.mxu0 0.0
    %1952 = vmatprep.subr.mxu0 0.0
    %1953 = vmatpush1.xpose.msra.mxu0 0.0
    %1954 = vmatprep.subr.mxu0 0.0
    %1955 = vmatpush1.xpose.msra.mxu0 0.0
    %1956 = vmatprep.subr.mxu0 0.0
    %1957 = vmatpush1.xpose.msra.mxu0 0.0
    %1958 = vmatprep.subr.mxu0 0.0
    %1959 = vmatpush1.xpose.msra.mxu0 0.0
    %1960 = vmatprep.subr.mxu0 0.0
    %1961 = vmatpush1.xpose.msra.mxu0 0.0
    %1962 = vmatprep.mubr.f32.mxu0 0.0
    %1963 = vmatmul.mubr.f32.gmra.mrb[0].mxu0 %v1890
    %v1964 = vpop.f32.mrb[0].mxu0
    %v1965 = vadd.f32 0.0, %v1964
    %v1966 = vpop.f32.mrb[0].mxu0
    %1967 = vmatprep.mubr.f32.mxu0 0.0
    %1968 = vmatmul.mubr.f32.gmra.mrb[0].mxu0 %v1892
    %v1969 = vpop.f32.mrb[0].mxu0
    %v1970 = vadd.f32 0.0, %v1969
    %v1971 = vpop.f32.mrb[0].mxu0
    %1972 = vdwg.mxu0
    %1973 = vrot.lane.b32.xlu0 %v1700, 104
    %v1974 = vpop.permute.xlu0 %1973
    %1975 = vrot.lane.b32.xlu0 %v1701, 104
    %v1976 = vpop.permute.xlu0 %1975
    %1977 = vrot.lane.b32.xlu0 %v1700, 72
    %v1978 = vpop.permute.xlu0 %1977
    %1979 = vrot.lane.b32.xlu0 %v1701, 72
    %v1980 = vpop.permute.xlu0 %1979
    %v1981 = vsel %vm296, %v1974, 0
    %v1983 = vsel %vm296, %v1976, 0
    %v1985 = vsel %vm296, %v1978, 0
    %v1987 = vsel %vm296, %v1980, 0
    %1989 = vmatprep.subr.mxu0 0.0
    %1990 = vmatpush1.xpose.msra.mxu0 %v1985
    %1991 = vmatprep.subr.mxu0 0.0
    %1992 = vmatpush1.xpose.msra.mxu0 %v1987
    %1993 = vmatprep.subr.mxu0 0.0
    %1994 = vmatpush1.xpose.msra.mxu0 0.0
    %1995 = vmatprep.subr.mxu0 0.0
    %1996 = vmatpush1.xpose.msra.mxu0 0.0
    %1997 = vmatprep.subr.mxu0 0.0
    %1998 = vmatpush1.xpose.msra.mxu0 0.0
    %1999 = vmatprep.subr.mxu0 0.0
    %2000 = vmatpush1.xpose.msra.mxu0 0.0
    %2001 = vmatprep.subr.mxu0 0.0
    %2002 = vmatpush1.xpose.msra.mxu0 0.0
    %2003 = vmatprep.subr.mxu0 0.0
    %2004 = vmatpush1.xpose.msra.mxu0 0.0
    %2005 = vmatprep.subr.mxu0 0.0
    %2006 = vmatpush1.xpose.msra.mxu0 0.0
    %2007 = vmatprep.subr.mxu0 0.0
    %2008 = vmatpush1.xpose.msra.mxu0 0.0
    %2009 = vmatprep.subr.mxu0 0.0
    %2010 = vmatpush1.xpose.msra.mxu0 0.0
    %2011 = vmatprep.subr.mxu0 0.0
    %2012 = vmatpush1.xpose.msra.mxu0 0.0
    %2013 = vmatprep.subr.mxu0 0.0
    %2014 = vmatpush1.xpose.msra.mxu0 0.0
    %2015 = vmatprep.subr.mxu0 0.0
    %2016 = vmatpush1.xpose.msra.mxu0 0.0
    %2017 = vmatprep.subr.mxu0 0.0
    %2018 = vmatpush1.xpose.msra.mxu0 0.0
    %2019 = vmatprep.subr.mxu0 0.0
    %2020 = vmatpush1.xpose.msra.mxu0 0.0
    %2021 = vmatprep.subr.mxu0 0.0
    %2022 = vmatpush1.xpose.msra.mxu0 0.0
    %2023 = vmatprep.subr.mxu0 0.0
    %2024 = vmatpush1.xpose.msra.mxu0 0.0
    %2025 = vmatprep.subr.mxu0 0.0
    %2026 = vmatpush1.xpose.msra.mxu0 0.0
    %2027 = vmatprep.subr.mxu0 0.0
    %2028 = vmatpush1.xpose.msra.mxu0 0.0
    %2029 = vmatprep.subr.mxu0 0.0
    %2030 = vmatpush1.xpose.msra.mxu0 0.0
    %2031 = vmatprep.subr.mxu0 0.0
    %2032 = vmatpush1.xpose.msra.mxu0 0.0
    %2033 = vmatprep.subr.mxu0 0.0
    %2034 = vmatpush1.xpose.msra.mxu0 0.0
    %2035 = vmatprep.subr.mxu0 0.0
    %2036 = vmatpush1.xpose.msra.mxu0 0.0
    %2037 = vmatprep.subr.mxu0 0.0
    %2038 = vmatpush1.xpose.msra.mxu0 0.0
    %2039 = vmatprep.subr.mxu0 0.0
    %2040 = vmatpush1.xpose.msra.mxu0 0.0
    %2041 = vmatprep.subr.mxu0 0.0
    %2042 = vmatpush1.xpose.msra.mxu0 0.0
    %2043 = vmatprep.subr.mxu0 0.0
    %2044 = vmatpush1.xpose.msra.mxu0 0.0
    %2045 = vmatprep.subr.mxu0 0.0
    %2046 = vmatpush1.xpose.msra.mxu0 0.0
    %2047 = vmatprep.subr.mxu0 0.0
    %2048 = vmatpush1.xpose.msra.mxu0 0.0
    %2049 = vmatprep.subr.mxu0 0.0
    %2050 = vmatpush1.xpose.msra.mxu0 0.0
    %2051 = vmatprep.subr.mxu0 0.0
    %2052 = vmatpush1.xpose.msra.mxu0 0.0
    %2053 = vmatprep.mubr.f32.mxu0 0.0
    %2054 = vmatmul.mubr.f32.gmra.mrb[0].mxu0 %v1981
    %v2055 = vpop.f32.mrb[0].mxu0
    %v2056 = vadd.f32 0.0, %v2055
    %v2057 = vpop.f32.mrb[0].mxu0
    %2058 = vmatprep.mubr.f32.mxu0 0.0
    %2059 = vmatmul.mubr.f32.gmra.mrb[0].mxu0 %v1983
    %v2060 = vpop.f32.mrb[0].mxu0
    %v2061 = vadd.f32 0.0, %v2060
    %v2062 = vpop.f32.mrb[0].mxu0
    %2063 = vdwg.mxu0
    %v2064 = vmul.f32 %v1783, 0.35355338
    %v2065 = vmul.f32 %v1788, 0.35355338
    %v2066 = vmul.f32 %v1874, 0.35355338
    %v2067 = vmul.f32 %v1879, 0.35355338
    %v2068 = vmul.f32 %v1965, 0.35355338
    %v2069 = vmul.f32 %v1970, 0.35355338
    %v2070 = vmul.f32 %v2056, 0.35355338
    %v2071 = vmul.f32 %v2061, 0.35355338
    %v2072 = vadd.f32 %v2064, %v98
    %v2073 = vadd.f32 %v2065, %v99
    %v2074 = vadd.f32 %v2066, %v98
    %v2075 = vadd.f32 %v2067, %v99
    %v2076 = vadd.f32 %v2068, %v98
    %v2077 = vadd.f32 %v2069, %v99
    %v2078 = vadd.f32 %v2070, %v98
    %v2079 = vadd.f32 %v2071, %v99
    %v2080 = vsel %vm100, %v2072, -inf
    %2081 = vmax.xlane.f32.xlu0 %v2080
    %v2082 = vpop.xlane.xlu0 %2081
    %v2083 = vsel %vm100, %v2073, -inf
    %2084 = vmax.xlane.f32.xlu0 %v2083
    %v2085 = vpop.xlane.xlu0 %2084
    %v2086 = vsel %vm100, %v2074, -inf
    %2087 = vmax.xlane.f32.xlu0 %v2086
    %v2088 = vpop.xlane.xlu0 %2087
    %v2089 = vsel %vm100, %v2075, -inf
    %2090 = vmax.xlane.f32.xlu0 %v2089
    %v2091 = vpop.xlane.xlu0 %2090
    %v2092 = vsel %vm100, %v2076, -inf
    %2093 = vmax.xlane.f32.xlu0 %v2092
    %v2094 = vpop.xlane.xlu0 %2093
    %v2095 = vsel %vm100, %v2077, -inf
    %2096 = vmax.xlane.f32.xlu0 %v2095
    %v2097 = vpop.xlane.xlu0 %2096
    %v2098 = vsel %vm100, %v2078, -inf
    %2099 = vmax.xlane.f32.xlu0 %v2098
    %v2100 = vpop.xlane.xlu0 %2099
    %v2101 = vsel %vm100, %v2079, -inf
    %2102 = vmax.xlane.f32.xlu0 %v2101
    %v2103 = vpop.xlane.xlu0 %2102
    %v2104 = vsub.f32 %v2072, %v2082
    %v2105 = vsub.f32 %v2073, %v2085
    %v2106 = vsub.f32 %v2074, %v2088
    %v2107 = vsub.f32 %v2075, %v2091
    %v2108 = vsub.f32 %v2076, %v2094
    %v2109 = vsub.f32 %v2077, %v2097
    %v2110 = vsub.f32 %v2078, %v2100
    %v2111 = vsub.f32 %v2079, %v2103
    %v2112 = vmul.f32 %v2104, 1.442695
    %v2113 = vpow.pop %v2112
    %v2114 = vmul.f32 %v2105, 1.442695
    %v2115 = vpow.pop %v2114
    %v2116 = vmul.f32 %v2106, 1.442695
    %v2117 = vpow.pop %v2116
    %v2118 = vmul.f32 %v2107, 1.442695
    %v2119 = vpow.pop %v2118
    %v2120 = vmul.f32 %v2108, 1.442695
    %v2121 = vpow.pop %v2120
    %v2122 = vmul.f32 %v2109, 1.442695
    %v2123 = vpow.pop %v2122
    %v2124 = vmul.f32 %v2110, 1.442695
    %v2125 = vpow.pop %v2124
    %v2126 = vmul.f32 %v2111, 1.442695
    %v2127 = vpow.pop %v2126
    %v2128 = vsel %vm100, %v2113, 0.0
    %2129 = vadd.xlane.f32.xlu0 %v2128
    %v2130 = vpop.xlane.xlu0 %2129
    %v2131 = vsel %vm100, %v2115, 0.0
    %2132 = vadd.xlane.f32.xlu0 %v2131
    %v2133 = vpop.xlane.xlu0 %2132
    %v2134 = vsel %vm100, %v2117, 0.0
    %2135 = vadd.xlane.f32.xlu0 %v2134
    %v2136 = vpop.xlane.xlu0 %2135
    %v2137 = vsel %vm100, %v2119, 0.0
    %2138 = vadd.xlane.f32.xlu0 %v2137
    %v2139 = vpop.xlane.xlu0 %2138
    %v2140 = vsel %vm100, %v2121, 0.0
    %2141 = vadd.xlane.f32.xlu0 %v2140
    %v2142 = vpop.xlane.xlu0 %2141
    %v2143 = vsel %vm100, %v2123, 0.0
    %2144 = vadd.xlane.f32.xlu0 %v2143
    %v2145 = vpop.xlane.xlu0 %2144
    %v2146 = vsel %vm100, %v2125, 0.0
    %2147 = vadd.xlane.f32.xlu0 %v2146
    %v2148 = vpop.xlane.xlu0 %2147
    %v2149 = vsel %vm100, %v2127, 0.0
    %2150 = vadd.xlane.f32.xlu0 %v2149
    %v2151 = vpop.xlane.xlu0 %2150
    %v2152 = vrcp.pop %v2130
    %v2153 = vrcp.pop %v2133
    %v2154 = vrcp.pop %v2136
    %v2155 = vrcp.pop %v2139
    %v2156 = vrcp.pop %v2142
    %v2157 = vrcp.pop %v2145
    %v2158 = vrcp.pop %v2148
    %v2159 = vrcp.pop %v2151
    %v2160 = vmul.f32 %v2113, %v2152
    %v2161 = vmul.f32 %v2115, %v2153
    %v2162 = vmul.f32 %v2117, %v2154
    %v2163 = vmul.f32 %v2119, %v2155
    %v2164 = vmul.f32 %v2121, %v2156
    %v2165 = vmul.f32 %v2123, %v2157
    %v2166 = vmul.f32 %v2125, %v2158
    %v2167 = vmul.f32 %v2127, %v2159
    %2168 = vrot.lane.b32.xlu0 %v1700, 64
    %v2169 = vpop.permute.xlu0 %2168
    %2170 = vrot.lane.b32.xlu0 %v1701, 64
    %v2171 = vpop.permute.xlu0 %2170
    %v2175 = vsel %vm100, %v2160, 0
    %v2178 = vsel %vm100, %v2161, 0
    %2180 = vmatprep.subr.mxu0 0.0
    %2181 = vmatpush1.msra.mxu0 %v2169
    %2182 = vmatprep.subr.mxu0 0.0
    %2183 = vmatpush1.msra.mxu0 %v2171
    %2184 = vmatprep.subr.mxu0 0.0
    %2185 = vmatpush1.msra.mxu0 0.0
    %2186 = vmatprep.subr.mxu0 0.0
    %2187 = vmatpush1.msra.mxu0 0.0
    %2188 = vmatprep.subr.mxu0 0.0
    %2189 = vmatpush1.msra.mxu0 0.0
    %2190 = vmatprep.subr.mxu0 0.0
    %2191 = vmatpush1.msra.mxu0 0.0
    %2192 = vmatprep.subr.mxu0 0.0
    %2193 = vmatpush1.msra.mxu0 0.0
    %2194 = vmatprep.subr.mxu0 0.0
    %2195 = vmatpush1.msra.mxu0 0.0
    %2196 = vmatprep.subr.mxu0 0.0
    %2197 = vmatpush1.msra.mxu0 0.0
    %2198 = vmatprep.subr.mxu0 0.0
    %2199 = vmatpush1.msra.mxu0 0.0
    %2200 = vmatprep.subr.mxu0 0.0
    %2201 = vmatpush1.msra.mxu0 0.0
    %2202 = vmatprep.subr.mxu0 0.0
    %2203 = vmatpush1.msra.mxu0 0.0
    %2204 = vmatprep.subr.mxu0 0.0
    %2205 = vmatpush1.msra.mxu0 0.0
    %2206 = vmatprep.subr.mxu0 0.0
    %2207 = vmatpush1.msra.mxu0 0.0
    %2208 = vmatprep.subr.mxu0 0.0
    %2209 = vmatpush1.msra.mxu0 0.0
    %2210 = vmatprep.subr.mxu0 0.0
    %2211 = vmatpush1.msra.mxu0 0.0
    %2212 = vmatprep.subr.mxu0 0.0
    %2213 = vmatpush1.msra.mxu0 0.0
    %2214 = vmatprep.subr.mxu0 0.0
    %2215 = vmatpush1.msra.mxu0 0.0
    %2216 = vmatprep.subr.mxu0 0.0
    %2217 = vmatpush1.msra.mxu0 0.0
    %2218 = vmatprep.subr.mxu0 0.0
    %2219 = vmatpush1.msra.mxu0 0.0
    %2220 = vmatprep.subr.mxu0 0.0
    %2221 = vmatpush1.msra.mxu0 0.0
    %2222 = vmatprep.subr.mxu0 0.0
    %2223 = vmatpush1.msra.mxu0 0.0
    %2224 = vmatprep.subr.mxu0 0.0
    %2225 = vmatpush1.msra.mxu0 0.0
    %2226 = vmatprep.subr.mxu0 0.0
    %2227 = vmatpush1.msra.mxu0 0.0
    %2228 = vmatprep.subr.mxu0 0.0
    %2229 = vmatpush1.msra.mxu0 0.0
    %2230 = vmatprep.subr.mxu0 0.0
    %2231 = vmatpush1.msra.mxu0 0.0
    %2232 = vmatprep.subr.mxu0 0.0
    %2233 = vmatpush1.msra.mxu0 0.0
    %2234 = vmatprep.subr.mxu0 0.0
    %2235 = vmatpush1.msra.mxu0 0.0
    %2236 = vmatprep.subr.mxu0 0.0
    %2237 = vmatpush1.msra.mxu0 0.0
    %2238 = vmatprep.subr.mxu0 0.0
    %2239 = vmatpush1.msra.mxu0 0.0
    %2240 = vmatprep.subr.mxu0 0.0
    %2241 = vmatpush1.msra.mxu0 0.0
    %2242 = vmatprep.subr.mxu0 0.0
    %2243 = vmatpush1.msra.mxu0 0.0
    %2244 = vmatprep.mubr.f32.mxu0 0.0
    %2245 = vmatmul.mubr.f32.gmra.mrb[0].mxu0 %v2175
    %v2246 = vpop.f32.mrb[0].mxu0
    %v2247 = vadd.f32 0.0, %v2246
    %v2248 = vpop.f32.mrb[0].mxu0
    %2249 = vmatprep.mubr.f32.mxu0 0.0
    %2250 = vmatmul.mubr.f32.gmra.mrb[0].mxu0 %v2178
    %v2251 = vpop.f32.mrb[0].mxu0
    %v2252 = vadd.f32 0.0, %v2251
    %v2253 = vpop.f32.mrb[0].mxu0
    %2254 = vdwg.mxu0
    %2255 = vrot.lane.b32.xlu0 %v1700, 56
    %v2256 = vpop.permute.xlu0 %2255
    %2257 = vrot.lane.b32.xlu0 %v1701, 56
    %v2258 = vpop.permute.xlu0 %2257
    %v2262 = vsel %vm100, %v2162, 0
    %v2265 = vsel %vm100, %v2163, 0
    %2267 = vmatprep.subr.mxu0 0.0
    %2268 = vmatpush1.msra.mxu0 %v2256
    %2269 = vmatprep.subr.mxu0 0.0
    %2270 = vmatpush1.msra.mxu0 %v2258
    %2271 = vmatprep.subr.mxu0 0.0
    %2272 = vmatpush1.msra.mxu0 0.0
    %2273 = vmatprep.subr.mxu0 0.0
    %2274 = vmatpush1.msra.mxu0 0.0
    %2275 = vmatprep.subr.mxu0 0.0
    %2276 = vmatpush1.msra.mxu0 0.0
    %2277 = vmatprep.subr.mxu0 0.0
    %2278 = vmatpush1.msra.mxu0 0.0
    %2279 = vmatprep.subr.mxu0 0.0
    %2280 = vmatpush1.msra.mxu0 0.0
    %2281 = vmatprep.subr.mxu0 0.0
    %2282 = vmatpush1.msra.mxu0 0.0
    %2283 = vmatprep.subr.mxu0 0.0
    %2284 = vmatpush1.msra.mxu0 0.0
    %2285 = vmatprep.subr.mxu0 0.0
    %2286 = vmatpush1.msra.mxu0 0.0
    %2287 = vmatprep.subr.mxu0 0.0
    %2288 = vmatpush1.msra.mxu0 0.0
    %2289 = vmatprep.subr.mxu0 0.0
    %2290 = vmatpush1.msra.mxu0 0.0
    %2291 = vmatprep.subr.mxu0 0.0
    %2292 = vmatpush1.msra.mxu0 0.0
    %2293 = vmatprep.subr.mxu0 0.0
    %2294 = vmatpush1.msra.mxu0 0.0
    %2295 = vmatprep.subr.mxu0 0.0
    %2296 = vmatpush1.msra.mxu0 0.0
    %2297 = vmatprep.subr.mxu0 0.0
    %2298 = vmatpush1.msra.mxu0 0.0
    %2299 = vmatprep.subr.mxu0 0.0
    %2300 = vmatpush1.msra.mxu0 0.0
    %2301 = vmatprep.subr.mxu0 0.0
    %2302 = vmatpush1.msra.mxu0 0.0
    %2303 = vmatprep.subr.mxu0 0.0
    %2304 = vmatpush1.msra.mxu0 0.0
    %2305 = vmatprep.subr.mxu0 0.0
    %2306 = vmatpush1.msra.mxu0 0.0
    %2307 = vmatprep.subr.mxu0 0.0
    %2308 = vmatpush1.msra.mxu0 0.0
    %2309 = vmatprep.subr.mxu0 0.0
    %2310 = vmatpush1.msra.mxu0 0.0
    %2311 = vmatprep.subr.mxu0 0.0
    %2312 = vmatpush1.msra.mxu0 0.0
    %2313 = vmatprep.subr.mxu0 0.0
    %2314 = vmatpush1.msra.mxu0 0.0
    %2315 = vmatprep.subr.mxu0 0.0
    %2316 = vmatpush1.msra.mxu0 0.0
    %2317 = vmatprep.subr.mxu0 0.0
    %2318 = vmatpush1.msra.mxu0 0.0
    %2319 = vmatprep.subr.mxu0 0.0
    %2320 = vmatpush1.msra.mxu0 0.0
    %2321 = vmatprep.subr.mxu0 0.0
    %2322 = vmatpush1.msra.mxu0 0.0
    %2323 = vmatprep.subr.mxu0 0.0
    %2324 = vmatpush1.msra.mxu0 0.0
    %2325 = vmatprep.subr.mxu0 0.0
    %2326 = vmatpush1.msra.mxu0 0.0
    %2327 = vmatprep.subr.mxu0 0.0
    %2328 = vmatpush1.msra.mxu0 0.0
    %2329 = vmatprep.subr.mxu0 0.0
    %2330 = vmatpush1.msra.mxu0 0.0
    %2331 = vmatprep.mubr.f32.mxu0 0.0
    %2332 = vmatmul.mubr.f32.gmra.mrb[0].mxu0 %v2262
    %v2333 = vpop.f32.mrb[0].mxu0
    %v2334 = vadd.f32 0.0, %v2333
    %v2335 = vpop.f32.mrb[0].mxu0
    %2336 = vmatprep.mubr.f32.mxu0 0.0
    %2337 = vmatmul.mubr.f32.gmra.mrb[0].mxu0 %v2265
    %v2338 = vpop.f32.mrb[0].mxu0
    %v2339 = vadd.f32 0.0, %v2338
    %v2340 = vpop.f32.mrb[0].mxu0
    %2341 = vdwg.mxu0
    %2342 = vrot.lane.b32.xlu0 %v1700, 48
    %v2343 = vpop.permute.xlu0 %2342
    %2344 = vrot.lane.b32.xlu0 %v1701, 48
    %v2345 = vpop.permute.xlu0 %2344
    %v2349 = vsel %vm100, %v2164, 0
    %v2352 = vsel %vm100, %v2165, 0
    %2354 = vmatprep.subr.mxu0 0.0
    %2355 = vmatpush1.msra.mxu0 %v2343
    %2356 = vmatprep.subr.mxu0 0.0
    %2357 = vmatpush1.msra.mxu0 %v2345
    %2358 = vmatprep.subr.mxu0 0.0
    %2359 = vmatpush1.msra.mxu0 0.0
    %2360 = vmatprep.subr.mxu0 0.0
    %2361 = vmatpush1.msra.mxu0 0.0
    %2362 = vmatprep.subr.mxu0 0.0
    %2363 = vmatpush1.msra.mxu0 0.0
    %2364 = vmatprep.subr.mxu0 0.0
    %2365 = vmatpush1.msra.mxu0 0.0
    %2366 = vmatprep.subr.mxu0 0.0
    %2367 = vmatpush1.msra.mxu0 0.0
    %2368 = vmatprep.subr.mxu0 0.0
    %2369 = vmatpush1.msra.mxu0 0.0
    %2370 = vmatprep.subr.mxu0 0.0
    %2371 = vmatpush1.msra.mxu0 0.0
    %2372 = vmatprep.subr.mxu0 0.0
    %2373 = vmatpush1.msra.mxu0 0.0
    %2374 = vmatprep.subr.mxu0 0.0
    %2375 = vmatpush1.msra.mxu0 0.0
    %2376 = vmatprep.subr.mxu0 0.0
    %2377 = vmatpush1.msra.mxu0 0.0
    %2378 = vmatprep.subr.mxu0 0.0
    %2379 = vmatpush1.msra.mxu0 0.0
    %2380 = vmatprep.subr.mxu0 0.0
    %2381 = vmatpush1.msra.mxu0 0.0
    %2382 = vmatprep.subr.mxu0 0.0
    %2383 = vmatpush1.msra.mxu0 0.0
    %2384 = vmatprep.subr.mxu0 0.0
    %2385 = vmatpush1.msra.mxu0 0.0
    %2386 = vmatprep.subr.mxu0 0.0
    %2387 = vmatpush1.msra.mxu0 0.0
    %2388 = vmatprep.subr.mxu0 0.0
    %2389 = vmatpush1.msra.mxu0 0.0
    %2390 = vmatprep.subr.mxu0 0.0
    %2391 = vmatpush1.msra.mxu0 0.0
    %2392 = vmatprep.subr.mxu0 0.0
    %2393 = vmatpush1.msra.mxu0 0.0
    %2394 = vmatprep.subr.mxu0 0.0
    %2395 = vmatpush1.msra.mxu0 0.0
    %2396 = vmatprep.subr.mxu0 0.0
    %2397 = vmatpush1.msra.mxu0 0.0
    %2398 = vmatprep.subr.mxu0 0.0
    %2399 = vmatpush1.msra.mxu0 0.0
    %2400 = vmatprep.subr.mxu0 0.0
    %2401 = vmatpush1.msra.mxu0 0.0
    %2402 = vmatprep.subr.mxu0 0.0
    %2403 = vmatpush1.msra.mxu0 0.0
    %2404 = vmatprep.subr.mxu0 0.0
    %2405 = vmatpush1.msra.mxu0 0.0
    %2406 = vmatprep.subr.mxu0 0.0
    %2407 = vmatpush1.msra.mxu0 0.0
    %2408 = vmatprep.subr.mxu0 0.0
    %2409 = vmatpush1.msra.mxu0 0.0
    %2410 = vmatprep.subr.mxu0 0.0
    %2411 = vmatpush1.msra.mxu0 0.0
    %2412 = vmatprep.subr.mxu0 0.0
    %2413 = vmatpush1.msra.mxu0 0.0
    %2414 = vmatprep.subr.mxu0 0.0
    %2415 = vmatpush1.msra.mxu0 0.0
    %2416 = vmatprep.subr.mxu0 0.0
    %2417 = vmatpush1.msra.mxu0 0.0
    %2418 = vmatprep.mubr.f32.mxu0 0.0
    %2419 = vmatmul.mubr.f32.gmra.mrb[0].mxu0 %v2349
    %v2420 = vpop.f32.mrb[0].mxu0
    %v2421 = vadd.f32 0.0, %v2420
    %v2422 = vpop.f32.mrb[0].mxu0
    %2423 = vmatprep.mubr.f32.mxu0 0.0
    %2424 = vmatmul.mubr.f32.gmra.mrb[0].mxu0 %v2352
    %v2425 = vpop.f32.mrb[0].mxu0
    %v2426 = vadd.f32 0.0, %v2425
    %v2427 = vpop.f32.mrb[0].mxu0
    %2428 = vdwg.mxu0
    %2429 = vrot.lane.b32.xlu0 %v1700, 40
    %v2430 = vpop.permute.xlu0 %2429
    %2431 = vrot.lane.b32.xlu0 %v1701, 40
    %v2432 = vpop.permute.xlu0 %2431
    %v2436 = vsel %vm100, %v2166, 0
    %v2439 = vsel %vm100, %v2167, 0
    %2441 = vmatprep.subr.mxu0 0.0
    %2442 = vmatpush1.msra.mxu0 %v2430
    %2443 = vmatprep.subr.mxu0 0.0
    %2444 = vmatpush1.msra.mxu0 %v2432
    %2445 = vmatprep.subr.mxu0 0.0
    %2446 = vmatpush1.msra.mxu0 0.0
    %2447 = vmatprep.subr.mxu0 0.0
    %2448 = vmatpush1.msra.mxu0 0.0
    %2449 = vmatprep.subr.mxu0 0.0
    %2450 = vmatpush1.msra.mxu0 0.0
    %2451 = vmatprep.subr.mxu0 0.0
    %2452 = vmatpush1.msra.mxu0 0.0
    %2453 = vmatprep.subr.mxu0 0.0
    %2454 = vmatpush1.msra.mxu0 0.0
    %2455 = vmatprep.subr.mxu0 0.0
    %2456 = vmatpush1.msra.mxu0 0.0
    %2457 = vmatprep.subr.mxu0 0.0
    %2458 = vmatpush1.msra.mxu0 0.0
    %2459 = vmatprep.subr.mxu0 0.0
    %2460 = vmatpush1.msra.mxu0 0.0
    %2461 = vmatprep.subr.mxu0 0.0
    %2462 = vmatpush1.msra.mxu0 0.0
    %2463 = vmatprep.subr.mxu0 0.0
    %2464 = vmatpush1.msra.mxu0 0.0
    %2465 = vmatprep.subr.mxu0 0.0
    %2466 = vmatpush1.msra.mxu0 0.0
    %2467 = vmatprep.subr.mxu0 0.0
    %2468 = vmatpush1.msra.mxu0 0.0
    %2469 = vmatprep.subr.mxu0 0.0
    %2470 = vmatpush1.msra.mxu0 0.0
    %2471 = vmatprep.subr.mxu0 0.0
    %2472 = vmatpush1.msra.mxu0 0.0
    %2473 = vmatprep.subr.mxu0 0.0
    %2474 = vmatpush1.msra.mxu0 0.0
    %2475 = vmatprep.subr.mxu0 0.0
    %2476 = vmatpush1.msra.mxu0 0.0
    %2477 = vmatprep.subr.mxu0 0.0
    %2478 = vmatpush1.msra.mxu0 0.0
    %2479 = vmatprep.subr.mxu0 0.0
    %2480 = vmatpush1.msra.mxu0 0.0
    %2481 = vmatprep.subr.mxu0 0.0
    %2482 = vmatpush1.msra.mxu0 0.0
    %2483 = vmatprep.subr.mxu0 0.0
    %2484 = vmatpush1.msra.mxu0 0.0
    %2485 = vmatprep.subr.mxu0 0.0
    %2486 = vmatpush1.msra.mxu0 0.0
    %2487 = vmatprep.subr.mxu0 0.0
    %2488 = vmatpush1.msra.mxu0 0.0
    %2489 = vmatprep.subr.mxu0 0.0
    %2490 = vmatpush1.msra.mxu0 0.0
    %2491 = vmatprep.subr.mxu0 0.0
    %2492 = vmatpush1.msra.mxu0 0.0
    %2493 = vmatprep.subr.mxu0 0.0
    %2494 = vmatpush1.msra.mxu0 0.0
    %2495 = vmatprep.subr.mxu0 0.0
    %2496 = vmatpush1.msra.mxu0 0.0
    %2497 = vmatprep.subr.mxu0 0.0
    %2498 = vmatpush1.msra.mxu0 0.0
    %2499 = vmatprep.subr.mxu0 0.0
    %2500 = vmatpush1.msra.mxu0 0.0
    %2501 = vmatprep.subr.mxu0 0.0
    %2502 = vmatpush1.msra.mxu0 0.0
    %2503 = vmatprep.subr.mxu0 0.0
    %2504 = vmatpush1.msra.mxu0 0.0
    %2505 = vmatprep.mubr.f32.mxu0 0.0
    %2506 = vmatmul.mubr.f32.gmra.mrb[0].mxu0 %v2436
    %v2507 = vpop.f32.mrb[0].mxu0
    %v2508 = vadd.f32 0.0, %v2507
    %v2509 = vpop.f32.mrb[0].mxu0
    %2510 = vmatprep.mubr.f32.mxu0 0.0
    %2511 = vmatmul.mubr.f32.gmra.mrb[0].mxu0 %v2439
    %v2512 = vpop.f32.mrb[0].mxu0
    %v2513 = vadd.f32 0.0, %v2512
    %v2514 = vpop.f32.mrb[0].mxu0
    %2515 = vdwg.mxu0
    %2518 = vrot.lane.b32.xlu0 %v2334, 8
    %v2519 = vpop.permute.xlu0 %2518
    %2520 = vrot.lane.b32.xlu0 %v2339, 8
    %v2521 = vpop.permute.xlu0 %2520
    %2526 = vrot.lane.b32.xlu0 %v2421, 16
    %v2527 = vpop.permute.xlu0 %2526
    %2528 = vrot.lane.b32.xlu0 %v2426, 16
    %v2529 = vpop.permute.xlu0 %2528
    %2534 = vrot.lane.b32.xlu0 %v2508, 24
    %v2535 = vpop.permute.xlu0 %2534
    %2536 = vrot.lane.b32.xlu0 %v2513, 24
    %v2537 = vpop.permute.xlu0 %2536
    %v2540 = vsel %vm296, %v2247, %v2519
    %v2541 = vsel %vm296, %v2252, %v2521
    %v2542 = vsel %vm100, %v2540, %v2527
    %v2543 = vsel %vm100, %v2541, %v2529
    %v2544 = vsel %vm1133, %v2542, %v2535
    %v2545 = vsel %vm1133, %v2543, %v2537
    %v2547 = vsel %vm182, %v2544, 0
    %v2550 = vsel %vm182, %v2545, 0
    %2552 = vmatprep.subr.mxu0 0.0
    %2553 = vmatpush1.msra.mxu0 %v1141
    %2554 = vmatprep.subr.mxu0 0.0
    %2555 = vmatpush1.msra.mxu0 %v1143
    %2556 = vmatprep.subr.mxu0 0.0
    %2557 = vmatpush1.msra.mxu0 %v1145
    %2558 = vmatprep.subr.mxu0 0.0
    %2559 = vmatpush1.msra.mxu0 %v1147
    %2560 = vmatprep.subr.mxu0 0.0
    %2561 = vmatpush1.msra.mxu0 0.0
    %2562 = vmatprep.subr.mxu0 0.0
    %2563 = vmatpush1.msra.mxu0 0.0
    %2564 = vmatprep.subr.mxu0 0.0
    %2565 = vmatpush1.msra.mxu0 0.0
    %2566 = vmatprep.subr.mxu0 0.0
    %2567 = vmatpush1.msra.mxu0 0.0
    %2568 = vmatprep.subr.mxu0 0.0
    %2569 = vmatpush1.msra.mxu0 0.0
    %2570 = vmatprep.subr.mxu0 0.0
    %2571 = vmatpush1.msra.mxu0 0.0
    %2572 = vmatprep.subr.mxu0 0.0
    %2573 = vmatpush1.msra.mxu0 0.0
    %2574 = vmatprep.subr.mxu0 0.0
    %2575 = vmatpush1.msra.mxu0 0.0
    %2576 = vmatprep.subr.mxu0 0.0
    %2577 = vmatpush1.msra.mxu0 0.0
    %2578 = vmatprep.subr.mxu0 0.0
    %2579 = vmatpush1.msra.mxu0 0.0
    %2580 = vmatprep.subr.mxu0 0.0
    %2581 = vmatpush1.msra.mxu0 0.0
    %2582 = vmatprep.subr.mxu0 0.0
    %2583 = vmatpush1.msra.mxu0 0.0
    %2584 = vmatprep.subr.mxu0 0.0
    %2585 = vmatpush1.msra.mxu0 0.0
    %2586 = vmatprep.subr.mxu0 0.0
    %2587 = vmatpush1.msra.mxu0 0.0
    %2588 = vmatprep.subr.mxu0 0.0
    %2589 = vmatpush1.msra.mxu0 0.0
    %2590 = vmatprep.subr.mxu0 0.0
    %2591 = vmatpush1.msra.mxu0 0.0
    %2592 = vmatprep.subr.mxu0 0.0
    %2593 = vmatpush1.msra.mxu0 0.0
    %2594 = vmatprep.subr.mxu0 0.0
    %2595 = vmatpush1.msra.mxu0 0.0
    %2596 = vmatprep.subr.mxu0 0.0
    %2597 = vmatpush1.msra.mxu0 0.0
    %2598 = vmatprep.subr.mxu0 0.0
    %2599 = vmatpush1.msra.mxu0 0.0
    %2600 = vmatprep.subr.mxu0 0.0
    %2601 = vmatpush1.msra.mxu0 0.0
    %2602 = vmatprep.subr.mxu0 0.0
    %2603 = vmatpush1.msra.mxu0 0.0
    %2604 = vmatprep.subr.mxu0 0.0
    %2605 = vmatpush1.msra.mxu0 0.0
    %2606 = vmatprep.subr.mxu0 0.0
    %2607 = vmatpush1.msra.mxu0 0.0
    %2608 = vmatprep.subr.mxu0 0.0
    %2609 = vmatpush1.msra.mxu0 0.0
    %2610 = vmatprep.subr.mxu0 0.0
    %2611 = vmatpush1.msra.mxu0 0.0
    %2612 = vmatprep.subr.mxu0 0.0
    %2613 = vmatpush1.msra.mxu0 0.0
    %2614 = vmatprep.subr.mxu0 0.0
    %2615 = vmatpush1.msra.mxu0 0.0
    %2616 = vmatprep.mubr.f32.mxu0 0.0
    %2617 = vmatmul.mubr.f32.gmra.mrb[0].mxu0 %v2547
    %v2618 = vpop.f32.mrb[0].mxu0
    %v2619 = vadd.f32 0.0, %v2618
    %v2620 = vpop.f32.mrb[0].mxu0
    %2621 = vmatprep.mubr.f32.mxu0 0.0
    %2622 = vmatmul.mubr.f32.gmra.mrb[0].mxu0 %v2550
    %v2623 = vpop.f32.mrb[0].mxu0
    %v2624 = vadd.f32 0.0, %v2623
    %v2625 = vpop.f32.mrb[0].mxu0
    %2626 = vdwg.mxu0
    %2629 = vrot.lane.b32.xlu0 %v2619, 96
    %v2630 = vpop.permute.xlu0 %2629
    %2631 = vrot.lane.b32.xlu0 %v2624, 96
    %v2632 = vpop.permute.xlu0 %2631
    %v2635 = vsel %vm268, %v2619, %v2630
    %v2636 = vsel %vm269, %v2624, %v2632
    %v2637 = vadd.f32 %v2635, %v1246
    %v2638 = vadd.f32 %v2636, %v1248
    %v2639 = vadd.f32 %v1591, %v2637
    %v2640 = vadd.f32 %v1596, %v2638
    %v2641 = vsel %vm182, %v2639, 0.0
    %2642 = vadd.xlane.f32.xlu0 %v2641
    %v2643 = vpop.xlane.xlu0 %2642
    %v2644 = vsel %vm182, %v2640, 0.0
    %2645 = vadd.xlane.f32.xlu0 %v2644
    %v2646 = vpop.xlane.xlu0 %2645
    %v2647 = vmul.f32 %v2643, %v1261
    %v2648 = vmul.f32 %v2646, %v1261
    %v2649 = vsub.f32 %v2639, %v2647
    %v2650 = vsub.f32 %v2640, %v2648
    %v2651 = vmul.f32 %v2649, %v2649
    %v2652 = vmul.f32 %v2650, %v2650
    %v2653 = vsel %vm182, %v2651, 0.0
    %2654 = vadd.xlane.f32.xlu0 %v2653
    %v2655 = vpop.xlane.xlu0 %2654
    %v2656 = vsel %vm182, %v2652, 0.0
    %2657 = vadd.xlane.f32.xlu0 %v2656
    %v2658 = vpop.xlane.xlu0 %2657
    %v2659 = vmul.f32 %v2655, %v1261
    %v2660 = vmul.f32 %v2658, %v1261
    %v2661 = vadd.f32 %v2659, 1e-05
    %v2662 = vadd.f32 %v2660, 1e-05
    %v2663 = vrsqrt.pop %v2661
    %v2664 = vrsqrt.pop %v2662
    %v2665 = vmul.f32 %v2649, %v2663
    %v2666 = vmul.f32 %v2650, %v2664
    %v2667 = vmul.f32 %v2665, %v1283
    %v2668 = vmul.f32 %v2666, %v1285
    %v2669 = vadd.f32 %v2667, %v46
    %v2670 = vadd.f32 %v2668, %v47
    %v2672 = vsel %vm182, %v2669, 0
    %v2675 = vsel %vm182, %v2670, 0
    %2677 = vmatprep.subr.mxu0 %v61
    %2678 = vmatpush1.msra.mxu0 %v60
    %2679 = vmatprep.subr.mxu0 %v63
    %2680 = vmatpush1.msra.mxu0 %v62
    %2681 = vmatprep.subr.mxu0 %v65
    %2682 = vmatpush1.msra.mxu0 %v64
    %2683 = vmatprep.subr.mxu0 %v67
    %2684 = vmatpush1.msra.mxu0 %v66
    %2685 = vmatprep.subr.mxu0 0.0
    %2686 = vmatpush1.msra.mxu0 0.0
    %2687 = vmatprep.subr.mxu0 0.0
    %2688 = vmatpush1.msra.mxu0 0.0
    %2689 = vmatprep.subr.mxu0 0.0
    %2690 = vmatpush1.msra.mxu0 0.0
    %2691 = vmatprep.subr.mxu0 0.0
    %2692 = vmatpush1.msra.mxu0 0.0
    %2693 = vmatprep.subr.mxu0 0.0
    %2694 = vmatpush1.msra.mxu0 0.0
    %2695 = vmatprep.subr.mxu0 0.0
    %2696 = vmatpush1.msra.mxu0 0.0
    %2697 = vmatprep.subr.mxu0 0.0
    %2698 = vmatpush1.msra.mxu0 0.0
    %2699 = vmatprep.subr.mxu0 0.0
    %2700 = vmatpush1.msra.mxu0 0.0
    %2701 = vmatprep.subr.mxu0 0.0
    %2702 = vmatpush1.msra.mxu0 0.0
    %2703 = vmatprep.subr.mxu0 0.0
    %2704 = vmatpush1.msra.mxu0 0.0
    %2705 = vmatprep.subr.mxu0 0.0
    %2706 = vmatpush1.msra.mxu0 0.0
    %2707 = vmatprep.subr.mxu0 0.0
    %2708 = vmatpush1.msra.mxu0 0.0
    %2709 = vmatprep.subr.mxu0 0.0
    %2710 = vmatpush1.msra.mxu0 0.0
    %2711 = vmatprep.subr.mxu0 0.0
    %2712 = vmatpush1.msra.mxu0 0.0
    %2713 = vmatprep.subr.mxu0 0.0
    %2714 = vmatpush1.msra.mxu0 0.0
    %2715 = vmatprep.subr.mxu0 0.0
    %2716 = vmatpush1.msra.mxu0 0.0
    %2717 = vmatprep.subr.mxu0 0.0
    %2718 = vmatpush1.msra.mxu0 0.0
    %2719 = vmatprep.subr.mxu0 0.0
    %2720 = vmatpush1.msra.mxu0 0.0
    %2721 = vmatprep.subr.mxu0 0.0
    %2722 = vmatpush1.msra.mxu0 0.0
    %2723 = vmatprep.subr.mxu0 0.0
    %2724 = vmatpush1.msra.mxu0 0.0
    %2725 = vmatprep.subr.mxu0 0.0
    %2726 = vmatpush1.msra.mxu0 0.0
    %2727 = vmatprep.subr.mxu0 0.0
    %2728 = vmatpush1.msra.mxu0 0.0
    %2729 = vmatprep.subr.mxu0 0.0
    %2730 = vmatpush1.msra.mxu0 0.0
    %2731 = vmatprep.subr.mxu0 0.0
    %2732 = vmatpush1.msra.mxu0 0.0
    %2733 = vmatprep.subr.mxu0 0.0
    %2734 = vmatpush1.msra.mxu0 0.0
    %2735 = vmatprep.subr.mxu0 0.0
    %2736 = vmatpush1.msra.mxu0 0.0
    %2737 = vmatprep.subr.mxu0 0.0
    %2738 = vmatpush1.msra.mxu0 0.0
    %2739 = vmatprep.subr.mxu0 0.0
    %2740 = vmatpush1.msra.mxu0 0.0
    %2741 = vmatprep.mubr.f32.mxu0 0.0
    %2742 = vmatmul.mubr.f32.gmra.mrb[0].mxu0 %v2672
    %v2743 = vpop.f32.mrb[0].mxu0
    %v2744 = vadd.f32 0.0, %v2743
    %v2745 = vpop.f32.mrb[0].mxu0
    %v2746 = vadd.f32 0.0, %v2745
    %2747 = vmatprep.mubr.f32.mxu0 0.0
    %2748 = vmatmul.mubr.f32.gmra.mrb[0].mxu0 %v2675
    %v2749 = vpop.f32.mrb[0].mxu0
    %v2750 = vadd.f32 0.0, %v2749
    %v2751 = vpop.f32.mrb[0].mxu0
    %v2752 = vadd.f32 0.0, %v2751
    %2753 = vdwg.mxu0
    %v2754 = vsel %vm268, %v2744, %v2746
    %v2755 = vsel %vm269, %v2750, %v2752
    %v2756 = vadd.f32 %v2754, %v50
    %v2757 = vadd.f32 %v2755, %v51
    %v2758 = vmax.f32 %v2756, 0.0
    %v2759 = vmax.f32 %v2757, 0.0
    %2760 = vmatprep.subr.mxu0 0.0
    %2761 = vmatpush1.msra.mxu0 %v68
    %2762 = vmatprep.subr.mxu0 0.0
    %2763 = vmatpush1.msra.mxu0 %v69
    %2764 = vmatprep.subr.mxu0 0.0
    %2765 = vmatpush1.msra.mxu0 %v70
    %2766 = vmatprep.subr.mxu0 0.0
    %2767 = vmatpush1.msra.mxu0 %v71
    %2768 = vmatprep.subr.mxu0 0.0
    %2769 = vmatpush1.msra.mxu0 %v72
    %2770 = vmatprep.subr.mxu0 0.0
    %2771 = vmatpush1.msra.mxu0 %v73
    %2772 = vmatprep.subr.mxu0 0.0
    %2773 = vmatpush1.msra.mxu0 %v74
    %2774 = vmatprep.subr.mxu0 0.0
    %2775 = vmatpush1.msra.mxu0 %v75
    %2776 = vmatprep.subr.mxu0 0.0
    %2777 = vmatpush1.msra.mxu0 %v76
    %2778 = vmatprep.subr.mxu0 0.0
    %2779 = vmatpush1.msra.mxu0 %v77
    %2780 = vmatprep.subr.mxu0 0.0
    %2781 = vmatpush1.msra.mxu0 %v78
    %2782 = vmatprep.subr.mxu0 0.0
    %2783 = vmatpush1.msra.mxu0 %v79
    %2784 = vmatprep.subr.mxu0 0.0
    %2785 = vmatpush1.msra.mxu0 %v80
    %2786 = vmatprep.subr.mxu0 0.0
    %2787 = vmatpush1.msra.mxu0 %v81
    %2788 = vmatprep.subr.mxu0 0.0
    %2789 = vmatpush1.msra.mxu0 %v82
    %2790 = vmatprep.subr.mxu0 0.0
    %2791 = vmatpush1.msra.mxu0 %v83
    %2792 = vmatprep.subr.mxu0 0.0
    %2793 = vmatpush1.msra.mxu0 0.0
    %2794 = vmatprep.subr.mxu0 0.0
    %2795 = vmatpush1.msra.mxu0 0.0
    %2796 = vmatprep.subr.mxu0 0.0
    %2797 = vmatpush1.msra.mxu0 0.0
    %2798 = vmatprep.subr.mxu0 0.0
    %2799 = vmatpush1.msra.mxu0 0.0
    %2800 = vmatprep.subr.mxu0 0.0
    %2801 = vmatpush1.msra.mxu0 0.0
    %2802 = vmatprep.subr.mxu0 0.0
    %2803 = vmatpush1.msra.mxu0 0.0
    %2804 = vmatprep.subr.mxu0 0.0
    %2805 = vmatpush1.msra.mxu0 0.0
    %2806 = vmatprep.subr.mxu0 0.0
    %2807 = vmatpush1.msra.mxu0 0.0
    %2808 = vmatprep.subr.mxu0 0.0
    %2809 = vmatpush1.msra.mxu0 0.0
    %2810 = vmatprep.subr.mxu0 0.0
    %2811 = vmatpush1.msra.mxu0 0.0
    %2812 = vmatprep.subr.mxu0 0.0
    %2813 = vmatpush1.msra.mxu0 0.0
    %2814 = vmatprep.subr.mxu0 0.0
    %2815 = vmatpush1.msra.mxu0 0.0
    %2816 = vmatprep.subr.mxu0 0.0
    %2817 = vmatpush1.msra.mxu0 0.0
    %2818 = vmatprep.subr.mxu0 0.0
    %2819 = vmatpush1.msra.mxu0 0.0
    %2820 = vmatprep.subr.mxu0 0.0
    %2821 = vmatpush1.msra.mxu0 0.0
    %2822 = vmatprep.subr.mxu0 0.0
    %2823 = vmatpush1.msra.mxu0 0.0
    %2824 = vmatprep.mubr.f32.mxu0 0.0
    %2825 = vmatmul.mubr.f32.gmra.mrb[0].mxu0 %v2758
    %v2826 = vpop.f32.mrb[0].mxu0
    %v2827 = vadd.f32 0.0, %v2826
    %v2828 = vpop.f32.mrb[0].mxu0
    %2829 = vmatprep.mubr.f32.mxu0 0.0
    %2830 = vmatmul.mubr.f32.gmra.mrb[0].mxu0 %v2759
    %v2831 = vpop.f32.mrb[0].mxu0
    %v2832 = vadd.f32 0.0, %v2831
    %v2833 = vpop.f32.mrb[0].mxu0
    %2834 = vdwg.mxu0
    %2837 = vrot.lane.b32.xlu0 %v2827, 96
    %v2838 = vpop.permute.xlu0 %2837
    %2839 = vrot.lane.b32.xlu0 %v2832, 96
    %v2840 = vpop.permute.xlu0 %2839
    %v2843 = vsel %vm268, %v2827, %v2838
    %v2844 = vsel %vm269, %v2832, %v2840
    %v2845 = vadd.f32 %v2843, %v1467
    %v2846 = vadd.f32 %v2844, %v1469
    %v2847 = vadd.f32 %v2669, %v2845
    %v2848 = vadd.f32 %v2670, %v2846
    %v2849 = vsel %vm182, %v2847, 0.0
    %2850 = vadd.xlane.f32.xlu0 %v2849
    %v2851 = vpop.xlane.xlu0 %2850
    %v2852 = vsel %vm182, %v2848, 0.0
    %2853 = vadd.xlane.f32.xlu0 %v2852
    %v2854 = vpop.xlane.xlu0 %2853
    %v2855 = vmul.f32 %v2851, %v1261
    %v2856 = vmul.f32 %v2854, %v1261
    %v2857 = vsub.f32 %v2847, %v2855
    %v2858 = vsub.f32 %v2848, %v2856
    %v2859 = vmul.f32 %v2857, %v2857
    %v2860 = vmul.f32 %v2858, %v2858
    %v2861 = vsel %vm182, %v2859, 0.0
    %2862 = vadd.xlane.f32.xlu0 %v2861
    %v2863 = vpop.xlane.xlu0 %2862
    %v2864 = vsel %vm182, %v2860, 0.0
    %2865 = vadd.xlane.f32.xlu0 %v2864
    %v2866 = vpop.xlane.xlu0 %2865
    %v2867 = vmul.f32 %v2863, %v1261
    %v2868 = vmul.f32 %v2866, %v1261
    %v2869 = vadd.f32 %v2867, 1e-05
    %v2870 = vadd.f32 %v2868, 1e-05
    %v2871 = vrsqrt.pop %v2869
    %v2872 = vrsqrt.pop %v2870
    %v2873 = vmul.f32 %v2857, %v2871
    %v2874 = vmul.f32 %v2858, %v2872
    %v2875 = vmul.f32 %v2873, %v1505
    %v2876 = vmul.f32 %v2874, %v1507
    %v2877 = vadd.f32 %v2875, %v1513
    %v2878 = vadd.f32 %v2876, %v1515
    %v2879 = vadd.f32 %v2877, %v1591
    %v2880 = vadd.f32 %v2878, %v1596
    %v2881 = vadd.f32 %v1522, %v2879
    %v2882 = vadd.f32 %v1523, %v2880
    %2883 = vst.msk [vmem:[#allocation7] sm:$0xff] %vm182, %v2881
    %2884 = vst.msk [vmem:[#allocation7 + $0x8] sm:$0xff] %vm182, %v2882
    %2885 = vst.msk [vmem:[#allocation8] sm:$0xff] %vm182, %v2881
    %2886 = vst.msk [vmem:[#allocation10] sm:$0xff] %vm182, %v2882
    // Predicated region
    $region18: #{transgnn_forward.1} parent=1 // pred_check
      _
    $region19: #{transgnn_forward.1} parent=1 // pred_check_branch
      %2888 = sbr.rel (0) target = $region21
    $region20: #{transgnn_forward.1} parent=1 // pred_region
      %s2890 = ssub.s32 256, 256
      %2891 = vsyncadd [#allocation4], %s2890
      %s2892 = sshll.u32 [#allocation7], 4
      %s2893 = int_to_ptr.vmem [resolvable:$true] %s2892
      %2898 = dma.vmem_to_hbm [thread:$0]  %s2893, 256, %s2, [#allocation4], 128, 128, 8
    $region21: #{transgnn_forward.1} parent=1 // pred_fallthru
      _
    // Predicated region
    $region22: #{transgnn_forward.1} parent=1 // pred_check
      _
    $region23: #{transgnn_forward.1} parent=1 // pred_check_branch
      %2900 = sbr.rel (0) target = $region25
    $region24: #{transgnn_forward.1} parent=1 // pred_region
      %s2902 = ssub.s32 128, 128
      %2903 = vsyncadd [#allocation9], %s2902
      %s2905 = sshll.u32 [#allocation8], 4
      %s2906 = int_to_ptr.vmem [resolvable:$true] %s2905
      %2908 = dma.vmem_to_hbm [thread:$0]  %s2906, 128, %s3, [#allocation9]
    $region25: #{transgnn_forward.1} parent=1 // pred_fallthru
      _
    // Predicated region
    $region26: #{transgnn_forward.1} parent=1 // pred_check
      _
    $region27: #{transgnn_forward.1} parent=1 // pred_check_branch
      %2910 = sbr.rel (0) target = $region29
    $region28: #{transgnn_forward.1} parent=1 // pred_region
      %s2912 = ssub.s32 128, 128
      %2913 = vsyncadd [#allocation9], %s2912
      %s2915 = sshll.u32 [#allocation10], 4
      %s2916 = int_to_ptr.vmem [resolvable:$true] %s2915
      %2918 = dma.vmem_to_hbm [thread:$0]  %s2916, 128, %s4, [#allocation9]
    $region29: #{transgnn_forward.1} parent=1 // pred_fallthru
      _
    // Predicated region
    $region30: #{transgnn_forward.1} parent=1 // pred_check
      _
    $region31: #{transgnn_forward.1} parent=1 // pred_check_branch
      %2920 = sbr.rel (0) target = $region33
    $region32: #{transgnn_forward.1} parent=1 // pred_region
      %2921 = dma.done [#allocation4], 256
    $region33: #{transgnn_forward.1} parent=1 // pred_fallthru
      _
    // Predicated region
    $region34: #{transgnn_forward.1} parent=1 // pred_check
      _
    $region35: #{transgnn_forward.1} parent=1 // pred_check_branch
      %2923 = sbr.rel (0) target = $region37
    $region36: #{transgnn_forward.1} parent=1 // pred_region
      %2924 = dma.done [#allocation9], 128
    $region37: #{transgnn_forward.1} parent=1 // pred_fallthru
      _
    // Predicated region
    $region38: #{transgnn_forward.1} parent=1 // pred_check
      _
    $region39: #{transgnn_forward.1} parent=1 // pred_check_branch
      %2926 = sbr.rel (0) target = $region41
    $region40: #{transgnn_forward.1} parent=1 // pred_region
      %2927 = dma.done [#allocation9], 128
    $region41: #{transgnn_forward.1} parent=1 // pred_fallthru
      _
    %2928 = vsyncpa [#allocation3], 1
    %2929 = vsyncpa [#allocation6], 1
    %2930 = vsyncpa [#allocation4], 1
    %2931 = vsyncpa [#allocation9], 1

</llo_original>
